<compile_context>
chip_gen: v6e
topology: v6e:2x2x1
jax: 0.10.0
libtpu: 0.0.40
codegen_flags: <defaults>
</compile_context>

<pallas_src>
import functools
import math

import jax
import jax.numpy as jnp
import numpy as np
from jax.experimental import pallas as pl
from jax.experimental.pallas import tpu as pltpu


# ----------------------------------------------------------------------------
# In-kernel helpers
# ----------------------------------------------------------------------------
def _erf(x):
    # Numerical-Recipes erfc approximation, |err| < 1.2e-7 (~f32 eps). Only exp
    # is guaranteed to lower on the TPU EUP; matches PyTorch exact nn.GELU.
    a = jnp.abs(x)
    t = 1.0 / (1.0 + 0.5 * a)
    poly = -1.26551223 + t * (1.00002368 + t * (0.37409196 + t * (0.09678418 +
           t * (-0.18628806 + t * (0.27886807 + t * (-1.13520398 +
           t * (1.48851587 + t * (-0.82215223 + t * 0.17087277))))))))
    y = t * jnp.exp(-a * a + poly)
    return jnp.where(x >= 0.0, 1.0 - y, y - 1.0)


def _gelu_exact(x):
    # TODO(synk): switch to tanh-approx GELU (EUP) if bit parity with
    # nn.GELU(exact) is not required.
    return 0.5 * x * (1.0 + _erf(x * 0.7071067811865476))


def _add_ln(x, y, gamma, beta, eps):
    """LayerNorm(x + y) over the last (hidden) axis, biased variance."""
    z = x + y
    mean = jnp.mean(z, axis=-1, keepdims=True)
    zc = z - mean
    var = jnp.mean(zc * zc, axis=-1, keepdims=True)
    return (zc * jax.lax.rsqrt(var + eps)) * gamma + beta


def _attn_block(x, xkv, mask, wq, bq, wk, bk, wv, bv, wo, bo,
                heads_ref, wts_ref, num_head, head_dim):
    """Multi-head attention for one batch element.

    x: (S_q, H) f32, xkv: (S_kv, H) f32, mask: (S_q, S_kv) f32 (0 => masked).
    Weights are bf16, biases f32.  Returns (S_q, H) f32 attention output.
    """
    xb = x.astype(jnp.bfloat16)
    kvb = xkv.astype(jnp.bfloat16)

    q = jnp.dot(xb, wq, preferred_element_type=jnp.float32) + bq
    k = jnp.dot(kvb, wk, preferred_element_type=jnp.float32) + bk
    v = jnp.dot(kvb, wv, preferred_element_type=jnp.float32) + bv

    # Scale q once (H-wide) instead of each (S_q, S_kv) score matrix per head.
    q = q * (1.0 / math.sqrt(head_dim))

    # Finite additive mask bias: no -inf NaN hazard, add-only in the head loop.
    neg_bias = jnp.where(mask != 0.0, 0.0, -1e30)

    qb = q.astype(jnp.bfloat16)
    kb = k.astype(jnp.bfloat16)
    vb = v.astype(jnp.bfloat16)

    for h in range(num_head):
        lo = h * head_dim
        qh = qb[:, lo:lo + head_dim]
        kh = kb[:, lo:lo + head_dim]
        vh = vb[:, lo:lo + head_dim]
        # (S_q, S_kv) = qh @ kh^T  (contract on head_dim)
        s = jax.lax.dot_general(qh, kh, (((1,), (1,)), ((), ())),
                                preferred_element_type=jnp.float32)
        s = s + neg_bias
        m = jnp.max(s, axis=-1, keepdims=True)
        e = jnp.exp(s - m)
        w = e * pl.reciprocal(jnp.sum(e, axis=-1, keepdims=True), approx=True)
        if wts_ref is not None:
            wts_ref[0, h] = w
        # Stack head outputs into the VMEM scratch (columns lo:lo+head_dim)
        heads_ref[:, lo:lo + head_dim] = jnp.dot(
            w.astype(jnp.bfloat16), vh, preferred_element_type=jnp.float32)

    # Single full-K output projection: (S_q, H) @ (H, H)
    return jnp.dot(heads_ref[...].astype(jnp.bfloat16), wo,
                   preferred_element_type=jnp.float32) + bo


# ----------------------------------------------------------------------------
# Fused DecoderLayer kernel (one grid step per batch element)
# ----------------------------------------------------------------------------
def _decoder_layer_kernel(num_head, head_dim, eps, collect_wts, *refs):
    (x_ref, enc_ref, dmask_ref, emask_ref,
     swq, sbq, swk, sbk, swv, sbv, swo, sbo,
     cwq, cbq, cwk, cbk, cwv, cbv, cwo, cbo,
     w1_ref, b1_ref, w2_ref, b2_ref, g_ref, be_ref) = refs[:26]
    rest = refs[26:]
    if collect_wts:
        swts_ref, cwts_ref, out_ref, heads_ref = rest
    else:
        out_ref, heads_ref = rest
        swts_ref = cwts_ref = None

    x = x_ref[0]            # (S_q, H)  f32
    enc = enc_ref[0]        # (S_kv, H) f32
    gamma = g_ref[...]      # (1, H)
    beta = be_ref[...]      # (1, H)

    # ---- masked self-attention + residual + LayerNorm -----------------------
    attn = _attn_block(x, x, dmask_ref[0, 0],
                       swq[...], sbq[...], swk[...], sbk[...],
                       swv[...], sbv[...], swo[...], sbo[...],
                       heads_ref, swts_ref, num_head, head_dim)
    x1 = _add_ln(x, attn, gamma, beta, eps)

    # ---- encoder-decoder cross-attention + residual + LayerNorm -------------
    attn2 = _attn_block(x1, enc, emask_ref[0, 0],
                        cwq[...], cbq[...], cwk[...], cbk[...],
                        cwv[...], cbv[...], cwo[...], cbo[...],
                        heads_ref, cwts_ref, num_head, head_dim)
    x2 = _add_ln(x1, attn2, gamma, beta, eps)

    # ---- position-wise FFN (Linear -> GELU -> Linear) + residual + LN -------
    h = jnp.dot(x2.astype(jnp.bfloat16), w1_ref[...],
                preferred_element_type=jnp.float32) + b1_ref[...]
    act = _gelu_exact(h)
    f = jnp.dot(act.astype(jnp.bfloat16), w2_ref[...],
                preferred_element_type=jnp.float32) + b2_ref[...]
    out_ref[0] = _add_ln(x2, f, gamma, beta, eps)


def decoder_layer_forward(x, enc_output, dec_causal_mask, enc_dec_mask, params,
                          collect_attn_wts=True):
    """Whole DecoderLayer in one pallas_call (grid over batch)."""
    # TODO(synk): nn.Dropout is modeled as identity (inference semantics).
    B, S_q, H = x.shape
    S_kv = enc_output.shape[1]
    nh = params["num_head"]
    hd = H // nh
    eps = params["ln_eps"]
    Fd = params["ffn"][0].shape[1]

    wspec = pl.BlockSpec((H, H), lambda b: (0, 0))
    bspec = pl.BlockSpec((1, H), lambda b: (0, 0))

    in_specs = ([
        pl.BlockSpec((1, S_q, H), lambda b: (b, 0, 0)),            # x
        pl.BlockSpec((1, S_kv, H), lambda b: (b, 0, 0)),           # enc_output
        pl.BlockSpec((1, 1, S_q, S_q), lambda b: (b, 0, 0, 0)),    # causal mask
        pl.BlockSpec((1, 1, S_q, S_kv), lambda b: (b, 0, 0, 0)),   # enc-dec mask
    ] + [wspec, bspec] * 4                                         # self-attn
      + [wspec, bspec] * 4                                         # cross-attn
      + [pl.BlockSpec((H, Fd), lambda b: (0, 0)),                  # w1
         pl.BlockSpec((1, Fd), lambda b: (0, 0)),                  # b1
         pl.BlockSpec((Fd, H), lambda b: (0, 0)),                  # w2
         bspec,                                                    # b2
         bspec, bspec])                                            # gamma, beta

    if collect_attn_wts:
        out_specs = [
            pl.BlockSpec((1, nh, S_q, S_q), lambda b: (b, 0, 0, 0)),
            pl.BlockSpec((1, nh, S_q, S_kv), lambda b: (b, 0, 0, 0)),
            pl.BlockSpec((1, S_q, H), lambda b: (b, 0, 0)),
        ]
        out_shape = [
            jax.ShapeDtypeStruct((B, nh, S_q, S_q), jnp.float32),
            jax.ShapeDtypeStruct((B, nh, S_q, S_kv), jnp.float32),
            jax.ShapeDtypeStruct((B, S_q, H), jnp.float32),
        ]
    else:
        out_specs = pl.BlockSpec((1, S_q, H), lambda b: (b, 0, 0))
        out_shape = jax.ShapeDtypeStruct((B, S_q, H), jnp.float32)

    kernel = functools.partial(_decoder_layer_kernel, nh, hd, eps,
                               collect_attn_wts)
    result = pl.pallas_call(
        kernel,
        grid=(B,),
        in_specs=in_specs,
        out_specs=out_specs,
        out_shape=out_shape,
        scratch_shapes=[pltpu.VMEM((S_q, H), jnp.float32)],  # stacked heads
        compiler_params=pltpu.CompilerParams(dimension_semantics=("parallel",)),
    )(x, enc_output, dec_causal_mask, enc_dec_mask,
      *params["self_attn"], *params["cross_attn"], *params["ffn"],
      params["ln_gamma"], params["ln_beta"])

    if collect_attn_wts:
        self_wts, cross_wts, out = result
        return self_wts, cross_wts, out
    return None, None, result


# ----------------------------------------------------------------------------
# Deterministic parameter init (synthetic; normal(0, 0.02) linears, LayerNorm
# weight=1 / bias=0).  Linear weights stored pre-transposed (in, out) in bf16.
# ----------------------------------------------------------------------------
def init_params(key, hidden_dim, ffn_dim, num_head, ln_eps):
    keys = jax.random.split(key, 4)

    def lin(k, din, dout):
        kw, kb = jax.random.split(k)
        w = (0.02 * jax.random.normal(kw, (din, dout))).astype(jnp.bfloat16)
        b = (0.02 * jax.random.normal(kb, (1, dout))).astype(jnp.float32)
        return w, b

    def mha(k):
        kq, kk, kv, ko = jax.random.split(k, 4)
        wq, bq = lin(kq, hidden_dim, hidden_dim)
        wk, bk = lin(kk, hidden_dim, hidden_dim)
        wv, bv = lin(kv, hidden_dim, hidden_dim)
        wo, bo = lin(ko, hidden_dim, hidden_dim)
        return (wq, bq, wk, bk, wv, bv, wo, bo)

    w1, b1 = lin(keys[2], hidden_dim, ffn_dim)
    w2, b2 = lin(keys[3], ffn_dim, hidden_dim)
    return {
        "num_head": num_head,
        "ln_eps": ln_eps,
        "ln_gamma": jnp.ones((1, hidden_dim), jnp.float32),
        "ln_beta": jnp.zeros((1, hidden_dim), jnp.float32),
        "self_attn": mha(keys[0]),
        "cross_attn": mha(keys[1]),
        "ffn": (w1, b1, w2, b2),
    }


# ----------------------------------------------------------------------------
# Pure-JAX reference (mirrors the PyTorch forward) for a sanity check
# ----------------------------------------------------------------------------
def _ref_mha(q_in, kv_in, mask, p, num_head):
    wq, bq, wk, bk, wv, bv, wo, bo = p
    f32 = lambda t: t.astype(jnp.float32)
    B, S_q, H = q_in.shape
    hd = H // num_head
    q = q_in @ f32(wq) + bq[0]
    k = kv_in @ f32(wk) + bk[0]
    v = kv_in @ f32(wv) + bv[0]
    split = lambda t: t.reshape(t.shape[0], t.shape[1], num_head, hd).transpose(0, 2, 1, 3)
    qh, kh, vh = split(q), split(k), split(v)
    s = jnp.einsum("bhqd,bhkd->bhqk", qh, kh) / math.sqrt(hd)
    s = jnp.where(mask == 0.0, -jnp.inf, s)
    w = jax.nn.softmax(s, axis=-1)
    o = jnp.einsum("bhqk,bhkd->bhqd", w, vh).transpose(0, 2, 1, 3).reshape(B, S_q, H)
    return w, o @ f32(wo) + bo[0]


def _ref_decoder_layer(x, enc_output, dcm, edm, params):
    eps = params["ln_eps"]

    def ln(z):
        mean = z.mean(-1, keepdims=True)
        var = ((z - mean) ** 2).mean(-1, keepdims=True)
        return ((z - mean) / jnp.sqrt(var + eps)) * params["ln_gamma"][0] + params["ln_beta"][0]

    sw, so = _ref_mha(x, x, dcm, params["self_attn"], params["num_head"])
    x1 = ln(x + so)
    cw, co = _ref_mha(x1, enc_output, edm, params["cross_attn"], params["num_head"])
    x2 = ln(x1 + co)
    w1, b1, w2, b2 = params["ffn"]
    f = jax.nn.gelu(x2 @ w1.astype(jnp.float32) + b1[0], approximate=False) \
        @ w2.astype(jnp.float32) + b2[0]
    return sw, cw, ln(x2 + f)


if __name__ == "__main__":
    B, S_DEC, S_ENC, HIDDEN, NUM_HEAD, FFN = 2, 8, 8, 32, 4, 64
    LN_EPS = 1e-5

    key = jax.random.PRNGKey(0)
    k_x, k_enc, k_p = jax.random.split(key, 3)
    x = jax.random.normal(k_x, (B, S_DEC, HIDDEN), jnp.float32)
    enc_output = jax.random.normal(k_enc, (B, S_ENC, HIDDEN), jnp.float32)
    dec_causal_mask = jnp.tril(jnp.ones((B, 1, S_DEC, S_DEC), jnp.float32))
    enc_dec_mask = jnp.ones((B, 1, S_DEC, S_ENC), jnp.float32)

    params = init_params(k_p, HIDDEN, FFN, NUM_HEAD, LN_EPS)

    # Full DecoderLayer forward (with attention-weight outputs, as in PyTorch).
    self_wts, cross_wts, out = decoder_layer_forward(
        x, enc_output, dec_causal_mask, enc_dec_mask, params,
        collect_attn_wts=True)
    jax.block_until_ready((self_wts, cross_wts, out))

    # Fast path: attention-weight outputs dropped (perf-review option).
    _, _, out_nw = decoder_layer_forward(
        x, enc_output, dec_causal_mask, enc_dec_mask, params,
        collect_attn_wts=False)
    jax.block_until_ready(out_nw)

    # Sanity check against a pure-JAX reference of the PyTorch forward.
    r_sw, r_cw, r_out = _ref_decoder_layer(x, enc_output, dec_causal_mask,
                                           enc_dec_mask, params)
    np.testing.assert_allclose(np.asarray(self_wts), np.asarray(r_sw),
                               rtol=2e-2, atol=2e-2)
    np.testing.assert_allclose(np.asarray(cross_wts), np.asarray(r_cw),
                               rtol=2e-2, atol=2e-2)
    np.testing.assert_allclose(np.asarray(out), np.asarray(r_out),
                               rtol=2e-2, atol=2e-2)
    np.testing.assert_allclose(np.asarray(out_nw), np.asarray(out),
                               rtol=1e-5, atol=1e-5)

    print("KERNEL_OK")
</pallas_src>

<mosaic_0001>
module attributes {stable_mosaic.version = 11 : i64} {
  func.func @_decoder_layer_kernel(%arg0: i32, %arg1: memref<1x8x32xf32, #tpu.memory_space<vmem>>, %arg2: memref<1x8x32xf32, #tpu.memory_space<vmem>>, %arg3: memref<1x1x8x8xf32, #tpu.memory_space<vmem>>, %arg4: memref<1x1x8x8xf32, #tpu.memory_space<vmem>>, %arg5: memref<32x32xbf16, #tpu.memory_space<vmem>>, %arg6: memref<1x32xf32, #tpu.memory_space<vmem>>, %arg7: memref<32x32xbf16, #tpu.memory_space<vmem>>, %arg8: memref<1x32xf32, #tpu.memory_space<vmem>>, %arg9: memref<32x32xbf16, #tpu.memory_space<vmem>>, %arg10: memref<1x32xf32, #tpu.memory_space<vmem>>, %arg11: memref<32x32xbf16, #tpu.memory_space<vmem>>, %arg12: memref<1x32xf32, #tpu.memory_space<vmem>>, %arg13: memref<32x32xbf16, #tpu.memory_space<vmem>>, %arg14: memref<1x32xf32, #tpu.memory_space<vmem>>, %arg15: memref<32x32xbf16, #tpu.memory_space<vmem>>, %arg16: memref<1x32xf32, #tpu.memory_space<vmem>>, %arg17: memref<32x32xbf16, #tpu.memory_space<vmem>>, %arg18: memref<1x32xf32, #tpu.memory_space<vmem>>, %arg19: memref<32x32xbf16, #tpu.memory_space<vmem>>, %arg20: memref<1x32xf32, #tpu.memory_space<vmem>>, %arg21: memref<32x64xbf16, #tpu.memory_space<vmem>>, %arg22: memref<1x64xf32, #tpu.memory_space<vmem>>, %arg23: memref<64x32xbf16, #tpu.memory_space<vmem>>, %arg24: memref<1x32xf32, #tpu.memory_space<vmem>>, %arg25: memref<1x32xf32, #tpu.memory_space<vmem>>, %arg26: memref<1x32xf32, #tpu.memory_space<vmem>>, %arg27: memref<1x4x8x8xf32, #tpu.memory_space<vmem>>, %arg28: memref<1x4x8x8xf32, #tpu.memory_space<vmem>>, %arg29: memref<1x8x32xf32, #tpu.memory_space<vmem>>, %arg30: memref<8x32xf32, #tpu.memory_space<vmem>>) attributes {dimension_semantics = [#tpu.dimension_semantics<parallel>], iteration_bounds = array<i64: 2>, scalar_prefetch = 0 : i64, scratch_operands = 1 : i64, tpu.core_type = #tpu.core_type<tc>, window_params = [{transform_indices = @transform_0, window_bounds = array<i64: 1, 8, 32>}, {transform_indices = @transform_1, window_bounds = array<i64: 1, 8, 32>}, {transform_indices = @transform_2, window_bounds = array<i64: 1, 1, 8, 8>}, {transform_indices = @transform_3, window_bounds = array<i64: 1, 1, 8, 8>}, {pipeline_mode = #tpu.pipeline_mode<synchronous>, transform_indices = @transform_4, window_bounds = array<i64: 32, 32>}, {pipeline_mode = #tpu.pipeline_mode<synchronous>, transform_indices = @transform_5, window_bounds = array<i64: 1, 32>}, {pipeline_mode = #tpu.pipeline_mode<synchronous>, transform_indices = @transform_6, window_bounds = array<i64: 32, 32>}, {pipeline_mode = #tpu.pipeline_mode<synchronous>, transform_indices = @transform_7, window_bounds = array<i64: 1, 32>}, {pipeline_mode = #tpu.pipeline_mode<synchronous>, transform_indices = @transform_8, window_bounds = array<i64: 32, 32>}, {pipeline_mode = #tpu.pipeline_mode<synchronous>, transform_indices = @transform_9, window_bounds = array<i64: 1, 32>}, {pipeline_mode = #tpu.pipeline_mode<synchronous>, transform_indices = @transform_10, window_bounds = array<i64: 32, 32>}, {pipeline_mode = #tpu.pipeline_mode<synchronous>, transform_indices = @transform_11, window_bounds = array<i64: 1, 32>}, {pipeline_mode = #tpu.pipeline_mode<synchronous>, transform_indices = @transform_12, window_bounds = array<i64: 32, 32>}, {pipeline_mode = #tpu.pipeline_mode<synchronous>, transform_indices = @transform_13, window_bounds = array<i64: 1, 32>}, {pipeline_mode = #tpu.pipeline_mode<synchronous>, transform_indices = @transform_14, window_bounds = array<i64: 32, 32>}, {pipeline_mode = #tpu.pipeline_mode<synchronous>, transform_indices = @transform_15, window_bounds = array<i64: 1, 32>}, {pipeline_mode = #tpu.pipeline_mode<synchronous>, transform_indices = @transform_16, window_bounds = array<i64: 32, 32>}, {pipeline_mode = #tpu.pipeline_mode<synchronous>, transform_indices = @transform_17, window_bounds = array<i64: 1, 32>}, {pipeline_mode = #tpu.pipeline_mode<synchronous>, transform_indices = @transform_18, window_bounds = array<i64: 32, 32>}, {pipeline_mode = #tpu.pipeline_mode<synchronous>, transform_indices = @transform_19, window_bounds = array<i64: 1, 32>}, {pipeline_mode = #tpu.pipeline_mode<synchronous>, transform_indices = @transform_20, window_bounds = array<i64: 32, 64>}, {pipeline_mode = #tpu.pipeline_mode<synchronous>, transform_indices = @transform_21, window_bounds = array<i64: 1, 64>}, {pipeline_mode = #tpu.pipeline_mode<synchronous>, transform_indices = @transform_22, window_bounds = array<i64: 64, 32>}, {pipeline_mode = #tpu.pipeline_mode<synchronous>, transform_indices = @transform_23, window_bounds = array<i64: 1, 32>}, {pipeline_mode = #tpu.pipeline_mode<synchronous>, transform_indices = @transform_24, window_bounds = array<i64: 1, 32>}, {pipeline_mode = #tpu.pipeline_mode<synchronous>, transform_indices = @transform_25, window_bounds = array<i64: 1, 32>}, {transform_indices = @transform_26, window_bounds = array<i64: 1, 4, 8, 8>}, {transform_indices = @transform_27, window_bounds = array<i64: 1, 4, 8, 8>}, {transform_indices = @transform_28, window_bounds = array<i64: 1, 8, 32>}]} {
    %c0 = arith.constant 0 : index
    %c0_0 = arith.constant 0 : index
    %c0_1 = arith.constant 0 : index
    %0 = vector.load %arg1[%c0, %c0_0, %c0_1] : memref<1x8x32xf32, #tpu.memory_space<vmem>>, vector<1x8x32xf32>
    %1 = vector.shape_cast %0 : vector<1x8x32xf32> to vector<8x32xf32>
    %c0_2 = arith.constant 0 : index
    %c0_3 = arith.constant 0 : index
    %c0_4 = arith.constant 0 : index
    %2 = vector.load %arg2[%c0_2, %c0_3, %c0_4] : memref<1x8x32xf32, #tpu.memory_space<vmem>>, vector<1x8x32xf32>
    %3 = vector.shape_cast %2 : vector<1x8x32xf32> to vector<8x32xf32>
    %c0_5 = arith.constant 0 : index
    %c0_6 = arith.constant 0 : index
    %4 = vector.load %arg25[%c0_5, %c0_6] : memref<1x32xf32, #tpu.memory_space<vmem>>, vector<1x32xf32>
    %c0_7 = arith.constant 0 : index
    %c0_8 = arith.constant 0 : index
    %5 = vector.load %arg26[%c0_7, %c0_8] : memref<1x32xf32, #tpu.memory_space<vmem>>, vector<1x32xf32>
    %c0_9 = arith.constant 0 : index
    %c0_10 = arith.constant 0 : index
    %c0_11 = arith.constant 0 : index
    %c0_12 = arith.constant 0 : index
    %6 = vector.load %arg3[%c0_9, %c0_10, %c0_11, %c0_12] : memref<1x1x8x8xf32, #tpu.memory_space<vmem>>, vector<1x1x8x8xf32>
    %7 = vector.shape_cast %6 : vector<1x1x8x8xf32> to vector<8x8xf32>
    %c0_13 = arith.constant 0 : index
    %c0_14 = arith.constant 0 : index
    %8 = vector.load %arg5[%c0_13, %c0_14] : memref<32x32xbf16, #tpu.memory_space<vmem>>, vector<32x32xbf16>
    %c0_15 = arith.constant 0 : index
    %c0_16 = arith.constant 0 : index
    %9 = vector.load %arg6[%c0_15, %c0_16] : memref<1x32xf32, #tpu.memory_space<vmem>>, vector<1x32xf32>
    %c0_17 = arith.constant 0 : index
    %c0_18 = arith.constant 0 : index
    %10 = vector.load %arg7[%c0_17, %c0_18] : memref<32x32xbf16, #tpu.memory_space<vmem>>, vector<32x32xbf16>
    %c0_19 = arith.constant 0 : index
    %c0_20 = arith.constant 0 : index
    %11 = vector.load %arg8[%c0_19, %c0_20] : memref<1x32xf32, #tpu.memory_space<vmem>>, vector<1x32xf32>
    %c0_21 = arith.constant 0 : index
    %c0_22 = arith.constant 0 : index
    %12 = vector.load %arg9[%c0_21, %c0_22] : memref<32x32xbf16, #tpu.memory_space<vmem>>, vector<32x32xbf16>
    %c0_23 = arith.constant 0 : index
    %c0_24 = arith.constant 0 : index
    %13 = vector.load %arg10[%c0_23, %c0_24] : memref<1x32xf32, #tpu.memory_space<vmem>>, vector<1x32xf32>
    %c0_25 = arith.constant 0 : index
    %c0_26 = arith.constant 0 : index
    %14 = vector.load %arg11[%c0_25, %c0_26] : memref<32x32xbf16, #tpu.memory_space<vmem>>, vector<32x32xbf16>
    %c0_27 = arith.constant 0 : index
    %c0_28 = arith.constant 0 : index
    %15 = vector.load %arg12[%c0_27, %c0_28] : memref<1x32xf32, #tpu.memory_space<vmem>>, vector<1x32xf32>
    %16 = arith.truncf %1 : vector<8x32xf32> to vector<8x32xbf16>
    %17 = arith.truncf %1 : vector<8x32xf32> to vector<8x32xbf16>
    %cst = arith.constant dense<0.000000e+00> : vector<8x32xf32>
    %18 = tpu.matmul %16, %8, %cst {dimension_numbers = #tpu.dot_dimension_numbers<[1], [0], [0], [1], [0, 0, 1, 1], [], []>} : vector<8x32xbf16>, vector<32x32xbf16>, vector<8x32xf32> -> vector<8x32xf32>
    %19 = vector.broadcast %9 : vector<1x32xf32> to vector<8x32xf32>
    %20 = arith.addf %18, %19 : vector<8x32xf32>
    %cst_29 = arith.constant dense<0.000000e+00> : vector<8x32xf32>
    %21 = tpu.matmul %17, %10, %cst_29 {dimension_numbers = #tpu.dot_dimension_numbers<[1], [0], [0], [1], [0, 0, 1, 1], [], []>} : vector<8x32xbf16>, vector<32x32xbf16>, vector<8x32xf32> -> vector<8x32xf32>
    %22 = vector.broadcast %11 : vector<1x32xf32> to vector<8x32xf32>
    %23 = arith.addf %21, %22 : vector<8x32xf32>
    %cst_30 = arith.constant dense<0.000000e+00> : vector<8x32xf32>
    %24 = tpu.matmul %17, %12, %cst_30 {dimension_numbers = #tpu.dot_dimension_numbers<[1], [0], [0], [1], [0, 0, 1, 1], [], []>} : vector<8x32xbf16>, vector<32x32xbf16>, vector<8x32xf32> -> vector<8x32xf32>
    %25 = vector.broadcast %13 : vector<1x32xf32> to vector<8x32xf32>
    %26 = arith.addf %24, %25 : vector<8x32xf32>
    %cst_31 = arith.constant 0.353553385 : f32
    %27 = vector.broadcast %cst_31 : f32 to vector<8x32xf32>
    %28 = arith.mulf %20, %27 : vector<8x32xf32>
    %cst_32 = arith.constant 0.000000e+00 : f32
    %29 = vector.broadcast %cst_32 : f32 to vector<8x8xf32>
    %30 = arith.cmpf one, %7, %29 : vector<8x8xf32>
    %cst_33 = arith.constant 0.000000e+00 : f32
    %cst_34 = arith.constant -1.000000e+30 : f32
    %31 = vector.broadcast %cst_33 : f32 to vector<8x8xf32>
    %32 = vector.broadcast %cst_34 : f32 to vector<8x8xf32>
    %33 = arith.select %30, %31, %32 : vector<8x8xi1>, vector<8x8xf32>
    %34 = arith.truncf %28 : vector<8x32xf32> to vector<8x32xbf16>
    %35 = arith.truncf %23 : vector<8x32xf32> to vector<8x32xbf16>
    %36 = arith.truncf %26 : vector<8x32xf32> to vector<8x32xbf16>
    %37 = vector.extract_strided_slice %34 {offsets = [0, 0], sizes = [8, 8], strides = [1, 1]} : vector<8x32xbf16> to vector<8x8xbf16>
    %38 = vector.extract_strided_slice %35 {offsets = [0, 0], sizes = [8, 8], strides = [1, 1]} : vector<8x32xbf16> to vector<8x8xbf16>
    %39 = vector.extract_strided_slice %36 {offsets = [0, 0], sizes = [8, 8], strides = [1, 1]} : vector<8x32xbf16> to vector<8x8xbf16>
    %cst_35 = arith.constant dense<0.000000e+00> : vector<8x8xf32>
    %40 = tpu.matmul %37, %38, %cst_35 {dimension_numbers = #tpu.dot_dimension_numbers<[1], [1], [0], [0], [0, 0, 1, 0], [], []>} : vector<8x8xbf16>, vector<8x8xbf16>, vector<8x8xf32> -> vector<8x8xf32>
    %41 = arith.addf %40, %33 : vector<8x8xf32>
    %cst_36 = arith.constant dense<0xFF800000> : vector<8xf32>
    %42 = vector.multi_reduction <maximumf>, %41, %cst_36 [1] : vector<8x8xf32> to vector<8xf32>
    %43 = vector.shape_cast %42 : vector<8xf32> to vector<8x1xf32>
    %44 = vector.broadcast %43 : vector<8x1xf32> to vector<8x8xf32>
    %45 = arith.subf %41, %44 : vector<8x8xf32>
    %46 = math.exp %45 : vector<8x8xf32>
    %cst_37 = arith.constant dense<0.000000e+00> : vector<8xf32>
    %47 = vector.multi_reduction <add>, %46, %cst_37 [1] : vector<8x8xf32> to vector<8xf32>
    %48 = vector.shape_cast %47 : vector<8xf32> to vector<8x1xf32>
    %49 = tpu.reciprocal %48 {approx = true} : vector<8x1xf32> -> vector<8x1xf32>
    %50 = vector.broadcast %49 : vector<8x1xf32> to vector<8x8xf32>
    %51 = arith.mulf %46, %50 : vector<8x8xf32>
    %c0_38 = arith.constant 0 : index
    %c0_39 = arith.constant 0 : index
    %c0_40 = arith.constant 0 : index
    %c0_41 = arith.constant 0 : index
    %52 = vector.load %arg27[%c0_38, %c0_39, %c0_40, %c0_41] : memref<1x4x8x8xf32, #tpu.memory_space<vmem>>, vector<1x1x8x8xf32>
    %53 = vector.shape_cast %52 : vector<1x1x8x8xf32> to vector<8x8xf32>
    %54 = vector.shape_cast %51 : vector<8x8xf32> to vector<1x1x8x8xf32>
    tpu.vector_store %arg27[%c0_38, %c0_39, %c0_40, %c0_41], %54 {strides = array<i32>} : memref<1x4x8x8xf32, #tpu.memory_space<vmem>>, vector<1x1x8x8xf32>,
    %55 = arith.truncf %51 : vector<8x8xf32> to vector<8x8xbf16>
    %cst_42 = arith.constant dense<0.000000e+00> : vector<8x8xf32>
    %56 = tpu.matmul %55, %39, %cst_42 {dimension_numbers = #tpu.dot_dimension_numbers<[1], [0], [0], [1], [0, 0, 1, 1], [], []>} : vector<8x8xbf16>, vector<8x8xbf16>, vector<8x8xf32> -> vector<8x8xf32>
    %c0_43 = arith.constant 0 : index
    %c0_44 = arith.constant 0 : index
    %57 = vector.load %arg30[%c0_43, %c0_44] : memref<8x32xf32, #tpu.memory_space<vmem>>, vector<8x8xf32>
    tpu.vector_store %arg30[%c0_43, %c0_44], %56 {strides = array<i32>} : memref<8x32xf32, #tpu.memory_space<vmem>>, vector<8x8xf32>,
    %58 = vector.extract_strided_slice %34 {offsets = [0, 8], sizes = [8, 8], strides = [1, 1]} : vector<8x32xbf16> to vector<8x8xbf16>
    %59 = vector.extract_strided_slice %35 {offsets = [0, 8], sizes = [8, 8], strides = [1, 1]} : vector<8x32xbf16> to vector<8x8xbf16>
    %60 = vector.extract_strided_slice %36 {offsets = [0, 8], sizes = [8, 8], strides = [1, 1]} : vector<8x32xbf16> to vector<8x8xbf16>
    %cst_45 = arith.constant dense<0.000000e+00> : vector<8x8xf32>
    %61 = tpu.matmul %58, %59, %cst_45 {dimension_numbers = #tpu.dot_dimension_numbers<[1], [1], [0], [0], [0, 0, 1, 0], [], []>} : vector<8x8xbf16>, vector<8x8xbf16>, vector<8x8xf32> -> vector<8x8xf32>
    %62 = arith.addf %61, %33 : vector<8x8xf32>
    %cst_46 = arith.constant dense<0xFF800000> : vector<8xf32>
    %63 = vector.multi_reduction <maximumf>, %62, %cst_46 [1] : vector<8x8xf32> to vector<8xf32>
    %64 = vector.shape_cast %63 : vector<8xf32> to vector<8x1xf32>
    %65 = vector.broadcast %64 : vector<8x1xf32> to vector<8x8xf32>
    %66 = arith.subf %62, %65 : vector<8x8xf32>
    %67 = math.exp %66 : vector<8x8xf32>
    %cst_47 = arith.constant dense<0.000000e+00> : vector<8xf32>
    %68 = vector.multi_reduction <add>, %67, %cst_47 [1] : vector<8x8xf32> to vector<8xf32>
    %69 = vector.shape_cast %68 : vector<8xf32> to vector<8x1xf32>
    %70 = tpu.reciprocal %69 {approx = true} : vector<8x1xf32> -> vector<8x1xf32>
    %71 = vector.broadcast %70 : vector<8x1xf32> to vector<8x8xf32>
    %72 = arith.mulf %67, %71 : vector<8x8xf32>
    %c0_48 = arith.constant 0 : index
    %c1 = arith.constant 1 : index
    %c0_49 = arith.constant 0 : index
    %c0_50 = arith.constant 0 : index
    %73 = vector.load %arg27[%c0_48, %c1, %c0_49, %c0_50] : memref<1x4x8x8xf32, #tpu.memory_space<vmem>>, vector<1x1x8x8xf32>
    %74 = vector.shape_cast %73 : vector<1x1x8x8xf32> to vector<8x8xf32>
    %75 = vector.shape_cast %72 : vector<8x8xf32> to vector<1x1x8x8xf32>
    tpu.vector_store %arg27[%c0_48, %c1, %c0_49, %c0_50], %75 {strides = array<i32>} : memref<1x4x8x8xf32, #tpu.memory_space<vmem>>, vector<1x1x8x8xf32>,
    %76 = arith.truncf %72 : vector<8x8xf32> to vector<8x8xbf16>
    %cst_51 = arith.constant dense<0.000000e+00> : vector<8x8xf32>
    %77 = tpu.matmul %76, %60, %cst_51 {dimension_numbers = #tpu.dot_dimension_numbers<[1], [0], [0], [1], [0, 0, 1, 1], [], []>} : vector<8x8xbf16>, vector<8x8xbf16>, vector<8x8xf32> -> vector<8x8xf32>
    %c0_52 = arith.constant 0 : index
    %c8 = arith.constant 8 : index
    %78 = vector.load %arg30[%c0_52, %c8] : memref<8x32xf32, #tpu.memory_space<vmem>>, vector<8x8xf32>
    tpu.vector_store %arg30[%c0_52, %c8], %77 {strides = array<i32>} : memref<8x32xf32, #tpu.memory_space<vmem>>, vector<8x8xf32>,
    %79 = vector.extract_strided_slice %34 {offsets = [0, 16], sizes = [8, 8], strides = [1, 1]} : vector<8x32xbf16> to vector<8x8xbf16>
    %80 = vector.extract_strided_slice %35 {offsets = [0, 16], sizes = [8, 8], strides = [1, 1]} : vector<8x32xbf16> to vector<8x8xbf16>
    %81 = vector.extract_strided_slice %36 {offsets = [0, 16], sizes = [8, 8], strides = [1, 1]} : vector<8x32xbf16> to vector<8x8xbf16>
    %cst_53 = arith.constant dense<0.000000e+00> : vector<8x8xf32>
    %82 = tpu.matmul %79, %80, %cst_53 {dimension_numbers = #tpu.dot_dimension_numbers<[1], [1], [0], [0], [0, 0, 1, 0], [], []>} : vector<8x8xbf16>, vector<8x8xbf16>, vector<8x8xf32> -> vector<8x8xf32>
    %83 = arith.addf %82, %33 : vector<8x8xf32>
    %cst_54 = arith.constant dense<0xFF800000> : vector<8xf32>
    %84 = vector.multi_reduction <maximumf>, %83, %cst_54 [1] : vector<8x8xf32> to vector<8xf32>
    %85 = vector.shape_cast %84 : vector<8xf32> to vector<8x1xf32>
    %86 = vector.broadcast %85 : vector<8x1xf32> to vector<8x8xf32>
    %87 = arith.subf %83, %86 : vector<8x8xf32>
    %88 = math.exp %87 : vector<8x8xf32>
    %cst_55 = arith.constant dense<0.000000e+00> : vector<8xf32>
    %89 = vector.multi_reduction <add>, %88, %cst_55 [1] : vector<8x8xf32> to vector<8xf32>
    %90 = vector.shape_cast %89 : vector<8xf32> to vector<8x1xf32>
    %91 = tpu.reciprocal %90 {approx = true} : vector<8x1xf32> -> vector<8x1xf32>
    %92 = vector.broadcast %91 : vector<8x1xf32> to vector<8x8xf32>
    %93 = arith.mulf %88, %92 : vector<8x8xf32>
    %c0_56 = arith.constant 0 : index
    %c2 = arith.constant 2 : index
    %c0_57 = arith.constant 0 : index
    %c0_58 = arith.constant 0 : index
    %94 = vector.load %arg27[%c0_56, %c2, %c0_57, %c0_58] : memref<1x4x8x8xf32, #tpu.memory_space<vmem>>, vector<1x1x8x8xf32>
    %95 = vector.shape_cast %94 : vector<1x1x8x8xf32> to vector<8x8xf32>
    %96 = vector.shape_cast %93 : vector<8x8xf32> to vector<1x1x8x8xf32>
    tpu.vector_store %arg27[%c0_56, %c2, %c0_57, %c0_58], %96 {strides = array<i32>} : memref<1x4x8x8xf32, #tpu.memory_space<vmem>>, vector<1x1x8x8xf32>,
    %97 = arith.truncf %93 : vector<8x8xf32> to vector<8x8xbf16>
    %cst_59 = arith.constant dense<0.000000e+00> : vector<8x8xf32>
    %98 = tpu.matmul %97, %81, %cst_59 {dimension_numbers = #tpu.dot_dimension_numbers<[1], [0], [0], [1], [0, 0, 1, 1], [], []>} : vector<8x8xbf16>, vector<8x8xbf16>, vector<8x8xf32> -> vector<8x8xf32>
    %c0_60 = arith.constant 0 : index
    %c16 = arith.constant 16 : index
    %99 = vector.load %arg30[%c0_60, %c16] : memref<8x32xf32, #tpu.memory_space<vmem>>, vector<8x8xf32>
    tpu.vector_store %arg30[%c0_60, %c16], %98 {strides = array<i32>} : memref<8x32xf32, #tpu.memory_space<vmem>>, vector<8x8xf32>,
    %100 = vector.extract_strided_slice %34 {offsets = [0, 24], sizes = [8, 8], strides = [1, 1]} : vector<8x32xbf16> to vector<8x8xbf16>
    %101 = vector.extract_strided_slice %35 {offsets = [0, 24], sizes = [8, 8], strides = [1, 1]} : vector<8x32xbf16> to vector<8x8xbf16>
    %102 = vector.extract_strided_slice %36 {offsets = [0, 24], sizes = [8, 8], strides = [1, 1]} : vector<8x32xbf16> to vector<8x8xbf16>
    %cst_61 = arith.constant dense<0.000000e+00> : vector<8x8xf32>
    %103 = tpu.matmul %100, %101, %cst_61 {dimension_numbers = #tpu.dot_dimension_numbers<[1], [1], [0], [0], [0, 0, 1, 0], [], []>} : vector<8x8xbf16>, vector<8x8xbf16>, vector<8x8xf32> -> vector<8x8xf32>
    %104 = arith.addf %103, %33 : vector<8x8xf32>
    %cst_62 = arith.constant dense<0xFF800000> : vector<8xf32>
    %105 = vector.multi_reduction <maximumf>, %104, %cst_62 [1] : vector<8x8xf32> to vector<8xf32>
    %106 = vector.shape_cast %105 : vector<8xf32> to vector<8x1xf32>
    %107 = vector.broadcast %106 : vector<8x1xf32> to vector<8x8xf32>
    %108 = arith.subf %104, %107 : vector<8x8xf32>
    %109 = math.exp %108 : vector<8x8xf32>
    %cst_63 = arith.constant dense<0.000000e+00> : vector<8xf32>
    %110 = vector.multi_reduction <add>, %109, %cst_63 [1] : vector<8x8xf32> to vector<8xf32>
    %111 = vector.shape_cast %110 : vector<8xf32> to vector<8x1xf32>
    %112 = tpu.reciprocal %111 {approx = true} : vector<8x1xf32> -> vector<8x1xf32>
    %113 = vector.broadcast %112 : vector<8x1xf32> to vector<8x8xf32>
    %114 = arith.mulf %109, %113 : vector<8x8xf32>
    %c0_64 = arith.constant 0 : index
    %c3 = arith.constant 3 : index
    %c0_65 = arith.constant 0 : index
    %c0_66 = arith.constant 0 : index
    %115 = vector.load %arg27[%c0_64, %c3, %c0_65, %c0_66] : memref<1x4x8x8xf32, #tpu.memory_space<vmem>>, vector<1x1x8x8xf32>
    %116 = vector.shape_cast %115 : vector<1x1x8x8xf32> to vector<8x8xf32>
    %117 = vector.shape_cast %114 : vector<8x8xf32> to vector<1x1x8x8xf32>
    tpu.vector_store %arg27[%c0_64, %c3, %c0_65, %c0_66], %117 {strides = array<i32>} : memref<1x4x8x8xf32, #tpu.memory_space<vmem>>, vector<1x1x8x8xf32>,
    %118 = arith.truncf %114 : vector<8x8xf32> to vector<8x8xbf16>
    %cst_67 = arith.constant dense<0.000000e+00> : vector<8x8xf32>
    %119 = tpu.matmul %118, %102, %cst_67 {dimension_numbers = #tpu.dot_dimension_numbers<[1], [0], [0], [1], [0, 0, 1, 1], [], []>} : vector<8x8xbf16>, vector<8x8xbf16>, vector<8x8xf32> -> vector<8x8xf32>
    %c0_68 = arith.constant 0 : index
    %c24 = arith.constant 24 : index
    %120 = vector.load %arg30[%c0_68, %c24] : memref<8x32xf32, #tpu.memory_space<vmem>>, vector<8x8xf32>
    tpu.vector_store %arg30[%c0_68, %c24], %119 {strides = array<i32>} : memref<8x32xf32, #tpu.memory_space<vmem>>, vector<8x8xf32>,
    %c0_69 = arith.constant 0 : index
    %c0_70 = arith.constant 0 : index
    %121 = vector.load %arg30[%c0_69, %c0_70] : memref<8x32xf32, #tpu.memory_space<vmem>>, vector<8x32xf32>
    %122 = arith.truncf %121 : vector<8x32xf32> to vector<8x32xbf16>
    %cst_71 = arith.constant dense<0.000000e+00> : vector<8x32xf32>
    %123 = tpu.matmul %122, %14, %cst_71 {dimension_numbers = #tpu.dot_dimension_numbers<[1], [0], [0], [1], [0, 0, 1, 1], [], []>} : vector<8x32xbf16>, vector<32x32xbf16>, vector<8x32xf32> -> vector<8x32xf32>
    %124 = vector.broadcast %15 : vector<1x32xf32> to vector<8x32xf32>
    %125 = arith.addf %123, %124 : vector<8x32xf32>
    %126 = arith.addf %1, %125 : vector<8x32xf32>
    %cst_72 = arith.constant dense<0.000000e+00> : vector<8xf32>
    %127 = vector.multi_reduction <add>, %126, %cst_72 [1] : vector<8x32xf32> to vector<8xf32>
    %128 = vector.shape_cast %127 : vector<8xf32> to vector<8x1xf32>
    %cst_73 = arith.constant 3.200000e+01 : f32
    %129 = vector.broadcast %cst_73 : f32 to vector<8x1xf32>
    %130 = arith.divf %128, %129 : vector<8x1xf32>
    %131 = vector.broadcast %130 : vector<8x1xf32> to vector<8x32xf32>
    %132 = arith.subf %126, %131 : vector<8x32xf32>
    %133 = arith.mulf %132, %132 : vector<8x32xf32>
    %cst_74 = arith.constant dense<0.000000e+00> : vector<8xf32>
    %134 = vector.multi_reduction <add>, %133, %cst_74 [1] : vector<8x32xf32> to vector<8xf32>
    %135 = vector.shape_cast %134 : vector<8xf32> to vector<8x1xf32>
    %cst_75 = arith.constant 3.200000e+01 : f32
    %136 = vector.broadcast %cst_75 : f32 to vector<8x1xf32>
    %137 = arith.divf %135, %136 : vector<8x1xf32>
    %cst_76 = arith.constant 9.99999974E-6 : f32
    %138 = vector.broadcast %cst_76 : f32 to vector<8x1xf32>
    %139 = arith.addf %137, %138 : vector<8x1xf32>
    %140 = math.rsqrt %139 : vector<8x1xf32>
    %141 = vector.broadcast %140 : vector<8x1xf32> to vector<8x32xf32>
    %142 = arith.mulf %132, %141 : vector<8x32xf32>
    %143 = vector.broadcast %4 : vector<1x32xf32> to vector<8x32xf32>
    %144 = arith.mulf %142, %143 : vector<8x32xf32>
    %145 = vector.broadcast %5 : vector<1x32xf32> to vector<8x32xf32>
    %146 = arith.addf %144, %145 : vector<8x32xf32>
    %c0_77 = arith.constant 0 : index
    %c0_78 = arith.constant 0 : index
    %c0_79 = arith.constant 0 : index
    %c0_80 = arith.constant 0 : index
    %147 = vector.load %arg4[%c0_77, %c0_78, %c0_79, %c0_80] : memref<1x1x8x8xf32, #tpu.memory_space<vmem>>, vector<1x1x8x8xf32>
    %148 = vector.shape_cast %147 : vector<1x1x8x8xf32> to vector<8x8xf32>
    %c0_81 = arith.constant 0 : index
    %c0_82 = arith.constant 0 : index
    %149 = vector.load %arg13[%c0_81, %c0_82] : memref<32x32xbf16, #tpu.memory_space<vmem>>, vector<32x32xbf16>
    %c0_83 = arith.constant 0 : index
    %c0_84 = arith.constant 0 : index
    %150 = vector.load %arg14[%c0_83, %c0_84] : memref<1x32xf32, #tpu.memory_space<vmem>>, vector<1x32xf32>
    %c0_85 = arith.constant 0 : index
    %c0_86 = arith.constant 0 : index
    %151 = vector.load %arg15[%c0_85, %c0_86] : memref<32x32xbf16, #tpu.memory_space<vmem>>, vector<32x32xbf16>
    %c0_87 = arith.constant 0 : index
    %c0_88 = arith.constant 0 : index
    %152 = vector.load %arg16[%c0_87, %c0_88] : memref<1x32xf32, #tpu.memory_space<vmem>>, vector<1x32xf32>
    %c0_89 = arith.constant 0 : index
    %c0_90 = arith.constant 0 : index
    %153 = vector.load %arg17[%c0_89, %c0_90] : memref<32x32xbf16, #tpu.memory_space<vmem>>, vector<32x32xbf16>
    %c0_91 = arith.constant 0 : index
    %c0_92 = arith.constant 0 : index
    %154 = vector.load %arg18[%c0_91, %c0_92] : memref<1x32xf32, #tpu.memory_space<vmem>>, vector<1x32xf32>
    %c0_93 = arith.constant 0 : index
    %c0_94 = arith.constant 0 : index
    %155 = vector.load %arg19[%c0_93, %c0_94] : memref<32x32xbf16, #tpu.memory_space<vmem>>, vector<32x32xbf16>
    %c0_95 = arith.constant 0 : index
    %c0_96 = arith.constant 0 : index
    %156 = vector.load %arg20[%c0_95, %c0_96] : memref<1x32xf32, #tpu.memory_space<vmem>>, vector<1x32xf32>
    %157 = arith.truncf %146 : vector<8x32xf32> to vector<8x32xbf16>
    %158 = arith.truncf %3 : vector<8x32xf32> to vector<8x32xbf16>
    %cst_97 = arith.constant dense<0.000000e+00> : vector<8x32xf32>
    %159 = tpu.matmul %157, %149, %cst_97 {dimension_numbers = #tpu.dot_dimension_numbers<[1], [0], [0], [1], [0, 0, 1, 1], [], []>} : vector<8x32xbf16>, vector<32x32xbf16>, vector<8x32xf32> -> vector<8x32xf32>
    %160 = vector.broadcast %150 : vector<1x32xf32> to vector<8x32xf32>
    %161 = arith.addf %159, %160 : vector<8x32xf32>
    %cst_98 = arith.constant dense<0.000000e+00> : vector<8x32xf32>
    %162 = tpu.matmul %158, %151, %cst_98 {dimension_numbers = #tpu.dot_dimension_numbers<[1], [0], [0], [1], [0, 0, 1, 1], [], []>} : vector<8x32xbf16>, vector<32x32xbf16>, vector<8x32xf32> -> vector<8x32xf32>
    %163 = vector.broadcast %152 : vector<1x32xf32> to vector<8x32xf32>
    %164 = arith.addf %162, %163 : vector<8x32xf32>
    %cst_99 = arith.constant dense<0.000000e+00> : vector<8x32xf32>
    %165 = tpu.matmul %158, %153, %cst_99 {dimension_numbers = #tpu.dot_dimension_numbers<[1], [0], [0], [1], [0, 0, 1, 1], [], []>} : vector<8x32xbf16>, vector<32x32xbf16>, vector<8x32xf32> -> vector<8x32xf32>
    %166 = vector.broadcast %154 : vector<1x32xf32> to vector<8x32xf32>
    %167 = arith.addf %165, %166 : vector<8x32xf32>
    %cst_100 = arith.constant 0.353553385 : f32
    %168 = vector.broadcast %cst_100 : f32 to vector<8x32xf32>
    %169 = arith.mulf %161, %168 : vector<8x32xf32>
    %cst_101 = arith.constant 0.000000e+00 : f32
    %170 = vector.broadcast %cst_101 : f32 to vector<8x8xf32>
    %171 = arith.cmpf one, %148, %170 : vector<8x8xf32>
    %cst_102 = arith.constant 0.000000e+00 : f32
    %cst_103 = arith.constant -1.000000e+30 : f32
    %172 = vector.broadcast %cst_102 : f32 to vector<8x8xf32>
    %173 = vector.broadcast %cst_103 : f32 to vector<8x8xf32>
    %174 = arith.select %171, %172, %173 : vector<8x8xi1>, vector<8x8xf32>
    %175 = arith.truncf %169 : vector<8x32xf32> to vector<8x32xbf16>
    %176 = arith.truncf %164 : vector<8x32xf32> to vector<8x32xbf16>
    %177 = arith.truncf %167 : vector<8x32xf32> to vector<8x32xbf16>
    %178 = vector.extract_strided_slice %175 {offsets = [0, 0], sizes = [8, 8], strides = [1, 1]} : vector<8x32xbf16> to vector<8x8xbf16>
    %179 = vector.extract_strided_slice %176 {offsets = [0, 0], sizes = [8, 8], strides = [1, 1]} : vector<8x32xbf16> to vector<8x8xbf16>
    %180 = vector.extract_strided_slice %177 {offsets = [0, 0], sizes = [8, 8], strides = [1, 1]} : vector<8x32xbf16> to vector<8x8xbf16>
    %cst_104 = arith.constant dense<0.000000e+00> : vector<8x8xf32>
    %181 = tpu.matmul %178, %179, %cst_104 {dimension_numbers = #tpu.dot_dimension_numbers<[1], [1], [0], [0], [0, 0, 1, 0], [], []>} : vector<8x8xbf16>, vector<8x8xbf16>, vector<8x8xf32> -> vector<8x8xf32>
    %182 = arith.addf %181, %174 : vector<8x8xf32>
    %cst_105 = arith.constant dense<0xFF800000> : vector<8xf32>
    %183 = vector.multi_reduction <maximumf>, %182, %cst_105 [1] : vector<8x8xf32> to vector<8xf32>
    %184 = vector.shape_cast %183 : vector<8xf32> to vector<8x1xf32>
    %185 = vector.broadcast %184 : vector<8x1xf32> to vector<8x8xf32>
    %186 = arith.subf %182, %185 : vector<8x8xf32>
    %187 = math.exp %186 : vector<8x8xf32>
    %cst_106 = arith.constant dense<0.000000e+00> : vector<8xf32>
    %188 = vector.multi_reduction <add>, %187, %cst_106 [1] : vector<8x8xf32> to vector<8xf32>
    %189 = vector.shape_cast %188 : vector<8xf32> to vector<8x1xf32>
    %190 = tpu.reciprocal %189 {approx = true} : vector<8x1xf32> -> vector<8x1xf32>
    %191 = vector.broadcast %190 : vector<8x1xf32> to vector<8x8xf32>
    %192 = arith.mulf %187, %191 : vector<8x8xf32>
    %c0_107 = arith.constant 0 : index
    %c0_108 = arith.constant 0 : index
    %c0_109 = arith.constant 0 : index
    %c0_110 = arith.constant 0 : index
    %193 = vector.load %arg28[%c0_107, %c0_108, %c0_109, %c0_110] : memref<1x4x8x8xf32, #tpu.memory_space<vmem>>, vector<1x1x8x8xf32>
    %194 = vector.shape_cast %193 : vector<1x1x8x8xf32> to vector<8x8xf32>
    %195 = vector.shape_cast %192 : vector<8x8xf32> to vector<1x1x8x8xf32>
    tpu.vector_store %arg28[%c0_107, %c0_108, %c0_109, %c0_110], %195 {strides = array<i32>} : memref<1x4x8x8xf32, #tpu.memory_space<vmem>>, vector<1x1x8x8xf32>,
    %196 = arith.truncf %192 : vector<8x8xf32> to vector<8x8xbf16>
    %cst_111 = arith.constant dense<0.000000e+00> : vector<8x8xf32>
    %197 = tpu.matmul %196, %180, %cst_111 {dimension_numbers = #tpu.dot_dimension_numbers<[1], [0], [0], [1], [0, 0, 1, 1], [], []>} : vector<8x8xbf16>, vector<8x8xbf16>, vector<8x8xf32> -> vector<8x8xf32>
    %c0_112 = arith.constant 0 : index
    %c0_113 = arith.constant 0 : index
    %198 = vector.load %arg30[%c0_112, %c0_113] : memref<8x32xf32, #tpu.memory_space<vmem>>, vector<8x8xf32>
    tpu.vector_store %arg30[%c0_112, %c0_113], %197 {strides = array<i32>} : memref<8x32xf32, #tpu.memory_space<vmem>>, vector<8x8xf32>,
    %199 = vector.extract_strided_slice %175 {offsets = [0, 8], sizes = [8, 8], strides = [1, 1]} : vector<8x32xbf16> to vector<8x8xbf16>
    %200 = vector.extract_strided_slice %176 {offsets = [0, 8], sizes = [8, 8], strides = [1, 1]} : vector<8x32xbf16> to vector<8x8xbf16>
    %201 = vector.extract_strided_slice %177 {offsets = [0, 8], sizes = [8, 8], strides = [1, 1]} : vector<8x32xbf16> to vector<8x8xbf16>
    %cst_114 = arith.constant dense<0.000000e+00> : vector<8x8xf32>
    %202 = tpu.matmul %199, %200, %cst_114 {dimension_numbers = #tpu.dot_dimension_numbers<[1], [1], [0], [0], [0, 0, 1, 0], [], []>} : vector<8x8xbf16>, vector<8x8xbf16>, vector<8x8xf32> -> vector<8x8xf32>
    %203 = arith.addf %202, %174 : vector<8x8xf32>
    %cst_115 = arith.constant dense<0xFF800000> : vector<8xf32>
    %204 = vector.multi_reduction <maximumf>, %203, %cst_115 [1] : vector<8x8xf32> to vector<8xf32>
    %205 = vector.shape_cast %204 : vector<8xf32> to vector<8x1xf32>
    %206 = vector.broadcast %205 : vector<8x1xf32> to vector<8x8xf32>
    %207 = arith.subf %203, %206 : vector<8x8xf32>
    %208 = math.exp %207 : vector<8x8xf32>
    %cst_116 = arith.constant dense<0.000000e+00> : vector<8xf32>
    %209 = vector.multi_reduction <add>, %208, %cst_116 [1] : vector<8x8xf32> to vector<8xf32>
    %210 = vector.shape_cast %209 : vector<8xf32> to vector<8x1xf32>
    %211 = tpu.reciprocal %210 {approx = true} : vector<8x1xf32> -> vector<8x1xf32>
    %212 = vector.broadcast %211 : vector<8x1xf32> to vector<8x8xf32>
    %213 = arith.mulf %208, %212 : vector<8x8xf32>
    %c0_117 = arith.constant 0 : index
    %c1_118 = arith.constant 1 : index
    %c0_119 = arith.constant 0 : index
    %c0_120 = arith.constant 0 : index
    %214 = vector.load %arg28[%c0_117, %c1_118, %c0_119, %c0_120] : memref<1x4x8x8xf32, #tpu.memory_space<vmem>>, vector<1x1x8x8xf32>
    %215 = vector.shape_cast %214 : vector<1x1x8x8xf32> to vector<8x8xf32>
    %216 = vector.shape_cast %213 : vector<8x8xf32> to vector<1x1x8x8xf32>
    tpu.vector_store %arg28[%c0_117, %c1_118, %c0_119, %c0_120], %216 {strides = array<i32>} : memref<1x4x8x8xf32, #tpu.memory_space<vmem>>, vector<1x1x8x8xf32>,
    %217 = arith.truncf %213 : vector<8x8xf32> to vector<8x8xbf16>
    %cst_121 = arith.constant dense<0.000000e+00> : vector<8x8xf32>
    %218 = tpu.matmul %217, %201, %cst_121 {dimension_numbers = #tpu.dot_dimension_numbers<[1], [0], [0], [1], [0, 0, 1, 1], [], []>} : vector<8x8xbf16>, vector<8x8xbf16>, vector<8x8xf32> -> vector<8x8xf32>
    %c0_122 = arith.constant 0 : index
    %c8_123 = arith.constant 8 : index
    %219 = vector.load %arg30[%c0_122, %c8_123] : memref<8x32xf32, #tpu.memory_space<vmem>>, vector<8x8xf32>
    tpu.vector_store %arg30[%c0_122, %c8_123], %218 {strides = array<i32>} : memref<8x32xf32, #tpu.memory_space<vmem>>, vector<8x8xf32>,
    %220 = vector.extract_strided_slice %175 {offsets = [0, 16], sizes = [8, 8], strides = [1, 1]} : vector<8x32xbf16> to vector<8x8xbf16>
    %221 = vector.extract_strided_slice %176 {offsets = [0, 16], sizes = [8, 8], strides = [1, 1]} : vector<8x32xbf16> to vector<8x8xbf16>
    %222 = vector.extract_strided_slice %177 {offsets = [0, 16], sizes = [8, 8], strides = [1, 1]} : vector<8x32xbf16> to vector<8x8xbf16>
    %cst_124 = arith.constant dense<0.000000e+00> : vector<8x8xf32>
    %223 = tpu.matmul %220, %221, %cst_124 {dimension_numbers = #tpu.dot_dimension_numbers<[1], [1], [0], [0], [0, 0, 1, 0], [], []>} : vector<8x8xbf16>, vector<8x8xbf16>, vector<8x8xf32> -> vector<8x8xf32>
    %224 = arith.addf %223, %174 : vector<8x8xf32>
    %cst_125 = arith.constant dense<0xFF800000> : vector<8xf32>
    %225 = vector.multi_reduction <maximumf>, %224, %cst_125 [1] : vector<8x8xf32> to vector<8xf32>
    %226 = vector.shape_cast %225 : vector<8xf32> to vector<8x1xf32>
    %227 = vector.broadcast %226 : vector<8x1xf32> to vector<8x8xf32>
    %228 = arith.subf %224, %227 : vector<8x8xf32>
    %229 = math.exp %228 : vector<8x8xf32>
    %cst_126 = arith.constant dense<0.000000e+00> : vector<8xf32>
    %230 = vector.multi_reduction <add>, %229, %cst_126 [1] : vector<8x8xf32> to vector<8xf32>
    %231 = vector.shape_cast %230 : vector<8xf32> to vector<8x1xf32>
    %232 = tpu.reciprocal %231 {approx = true} : vector<8x1xf32> -> vector<8x1xf32>
    %233 = vector.broadcast %232 : vector<8x1xf32> to vector<8x8xf32>
    %234 = arith.mulf %229, %233 : vector<8x8xf32>
    %c0_127 = arith.constant 0 : index
    %c2_128 = arith.constant 2 : index
    %c0_129 = arith.constant 0 : index
    %c0_130 = arith.constant 0 : index
    %235 = vector.load %arg28[%c0_127, %c2_128, %c0_129, %c0_130] : memref<1x4x8x8xf32, #tpu.memory_space<vmem>>, vector<1x1x8x8xf32>
    %236 = vector.shape_cast %235 : vector<1x1x8x8xf32> to vector<8x8xf32>
    %237 = vector.shape_cast %234 : vector<8x8xf32> to vector<1x1x8x8xf32>
    tpu.vector_store %arg28[%c0_127, %c2_128, %c0_129, %c0_130], %237 {strides = array<i32>} : memref<1x4x8x8xf32, #tpu.memory_space<vmem>>, vector<1x1x8x8xf32>,
    %238 = arith.truncf %234 : vector<8x8xf32> to vector<8x8xbf16>
    %cst_131 = arith.constant dense<0.000000e+00> : vector<8x8xf32>
    %239 = tpu.matmul %238, %222, %cst_131 {dimension_numbers = #tpu.dot_dimension_numbers<[1], [0], [0], [1], [0, 0, 1, 1], [], []>} : vector<8x8xbf16>, vector<8x8xbf16>, vector<8x8xf32> -> vector<8x8xf32>
    %c0_132 = arith.constant 0 : index
    %c16_133 = arith.constant 16 : index
    %240 = vector.load %arg30[%c0_132, %c16_133] : memref<8x32xf32, #tpu.memory_space<vmem>>, vector<8x8xf32>
    tpu.vector_store %arg30[%c0_132, %c16_133], %239 {strides = array<i32>} : memref<8x32xf32, #tpu.memory_space<vmem>>, vector<8x8xf32>,
    %241 = vector.extract_strided_slice %175 {offsets = [0, 24], sizes = [8, 8], strides = [1, 1]} : vector<8x32xbf16> to vector<8x8xbf16>
    %242 = vector.extract_strided_slice %176 {offsets = [0, 24], sizes = [8, 8], strides = [1, 1]} : vector<8x32xbf16> to vector<8x8xbf16>
    %243 = vector.extract_strided_slice %177 {offsets = [0, 24], sizes = [8, 8], strides = [1, 1]} : vector<8x32xbf16> to vector<8x8xbf16>
    %cst_134 = arith.constant dense<0.000000e+00> : vector<8x8xf32>
    %244 = tpu.matmul %241, %242, %cst_134 {dimension_numbers = #tpu.dot_dimension_numbers<[1], [1], [0], [0], [0, 0, 1, 0], [], []>} : vector<8x8xbf16>, vector<8x8xbf16>, vector<8x8xf32> -> vector<8x8xf32>
    %245 = arith.addf %244, %174 : vector<8x8xf32>
    %cst_135 = arith.constant dense<0xFF800000> : vector<8xf32>
    %246 = vector.multi_reduction <maximumf>, %245, %cst_135 [1] : vector<8x8xf32> to vector<8xf32>
    %247 = vector.shape_cast %246 : vector<8xf32> to vector<8x1xf32>
    %248 = vector.broadcast %247 : vector<8x1xf32> to vector<8x8xf32>
    %249 = arith.subf %245, %248 : vector<8x8xf32>
    %250 = math.exp %249 : vector<8x8xf32>
    %cst_136 = arith.constant dense<0.000000e+00> : vector<8xf32>
    %251 = vector.multi_reduction <add>, %250, %cst_136 [1] : vector<8x8xf32> to vector<8xf32>
    %252 = vector.shape_cast %251 : vector<8xf32> to vector<8x1xf32>
    %253 = tpu.reciprocal %252 {approx = true} : vector<8x1xf32> -> vector<8x1xf32>
    %254 = vector.broadcast %253 : vector<8x1xf32> to vector<8x8xf32>
    %255 = arith.mulf %250, %254 : vector<8x8xf32>
    %c0_137 = arith.constant 0 : index
    %c3_138 = arith.constant 3 : index
    %c0_139 = arith.constant 0 : index
    %c0_140 = arith.constant 0 : index
    %256 = vector.load %arg28[%c0_137, %c3_138, %c0_139, %c0_140] : memref<1x4x8x8xf32, #tpu.memory_space<vmem>>, vector<1x1x8x8xf32>
    %257 = vector.shape_cast %256 : vector<1x1x8x8xf32> to vector<8x8xf32>
    %258 = vector.shape_cast %255 : vector<8x8xf32> to vector<1x1x8x8xf32>
    tpu.vector_store %arg28[%c0_137, %c3_138, %c0_139, %c0_140], %258 {strides = array<i32>} : memref<1x4x8x8xf32, #tpu.memory_space<vmem>>, vector<1x1x8x8xf32>,
    %259 = arith.truncf %255 : vector<8x8xf32> to vector<8x8xbf16>
    %cst_141 = arith.constant dense<0.000000e+00> : vector<8x8xf32>
    %260 = tpu.matmul %259, %243, %cst_141 {dimension_numbers = #tpu.dot_dimension_numbers<[1], [0], [0], [1], [0, 0, 1, 1], [], []>} : vector<8x8xbf16>, vector<8x8xbf16>, vector<8x8xf32> -> vector<8x8xf32>
    %c0_142 = arith.constant 0 : index
    %c24_143 = arith.constant 24 : index
    %261 = vector.load %arg30[%c0_142, %c24_143] : memref<8x32xf32, #tpu.memory_space<vmem>>, vector<8x8xf32>
    tpu.vector_store %arg30[%c0_142, %c24_143], %260 {strides = array<i32>} : memref<8x32xf32, #tpu.memory_space<vmem>>, vector<8x8xf32>,
    %c0_144 = arith.constant 0 : index
    %c0_145 = arith.constant 0 : index
    %262 = vector.load %arg30[%c0_144, %c0_145] : memref<8x32xf32, #tpu.memory_space<vmem>>, vector<8x32xf32>
    %263 = arith.truncf %262 : vector<8x32xf32> to vector<8x32xbf16>
    %cst_146 = arith.constant dense<0.000000e+00> : vector<8x32xf32>
    %264 = tpu.matmul %263, %155, %cst_146 {dimension_numbers = #tpu.dot_dimension_numbers<[1], [0], [0], [1], [0, 0, 1, 1], [], []>} : vector<8x32xbf16>, vector<32x32xbf16>, vector<8x32xf32> -> vector<8x32xf32>
    %265 = vector.broadcast %156 : vector<1x32xf32> to vector<8x32xf32>
    %266 = arith.addf %264, %265 : vector<8x32xf32>
    %267 = arith.addf %146, %266 : vector<8x32xf32>
    %cst_147 = arith.constant dense<0.000000e+00> : vector<8xf32>
    %268 = vector.multi_reduction <add>, %267, %cst_147 [1] : vector<8x32xf32> to vector<8xf32>
    %269 = vector.shape_cast %268 : vector<8xf32> to vector<8x1xf32>
    %cst_148 = arith.constant 3.200000e+01 : f32
    %270 = vector.broadcast %cst_148 : f32 to vector<8x1xf32>
    %271 = arith.divf %269, %270 : vector<8x1xf32>
    %272 = vector.broadcast %271 : vector<8x1xf32> to vector<8x32xf32>
    %273 = arith.subf %267, %272 : vector<8x32xf32>
    %274 = arith.mulf %273, %273 : vector<8x32xf32>
    %cst_149 = arith.constant dense<0.000000e+00> : vector<8xf32>
    %275 = vector.multi_reduction <add>, %274, %cst_149 [1] : vector<8x32xf32> to vector<8xf32>
    %276 = vector.shape_cast %275 : vector<8xf32> to vector<8x1xf32>
    %cst_150 = arith.constant 3.200000e+01 : f32
    %277 = vector.broadcast %cst_150 : f32 to vector<8x1xf32>
    %278 = arith.divf %276, %277 : vector<8x1xf32>
    %cst_151 = arith.constant 9.99999974E-6 : f32
    %279 = vector.broadcast %cst_151 : f32 to vector<8x1xf32>
    %280 = arith.addf %278, %279 : vector<8x1xf32>
    %281 = math.rsqrt %280 : vector<8x1xf32>
    %282 = vector.broadcast %281 : vector<8x1xf32> to vector<8x32xf32>
    %283 = arith.mulf %273, %282 : vector<8x32xf32>
    %284 = vector.broadcast %4 : vector<1x32xf32> to vector<8x32xf32>
    %285 = arith.mulf %283, %284 : vector<8x32xf32>
    %286 = vector.broadcast %5 : vector<1x32xf32> to vector<8x32xf32>
    %287 = arith.addf %285, %286 : vector<8x32xf32>
    %288 = arith.truncf %287 : vector<8x32xf32> to vector<8x32xbf16>
    %c0_152 = arith.constant 0 : index
    %c0_153 = arith.constant 0 : index
    %289 = vector.load %arg21[%c0_152, %c0_153] : memref<32x64xbf16, #tpu.memory_space<vmem>>, vector<32x64xbf16>
    %cst_154 = arith.constant dense<0.000000e+00> : vector<8x64xf32>
    %290 = tpu.matmul %288, %289, %cst_154 {dimension_numbers = #tpu.dot_dimension_numbers<[1], [0], [0], [1], [0, 0, 1, 1], [], []>} : vector<8x32xbf16>, vector<32x64xbf16>, vector<8x64xf32> -> vector<8x64xf32>
    %c0_155 = arith.constant 0 : index
    %c0_156 = arith.constant 0 : index
    %291 = vector.load %arg22[%c0_155, %c0_156] : memref<1x64xf32, #tpu.memory_space<vmem>>, vector<1x64xf32>
    %292 = vector.broadcast %291 : vector<1x64xf32> to vector<8x64xf32>
    %293 = arith.addf %290, %292 : vector<8x64xf32>
    %cst_157 = arith.constant 5.000000e-01 : f32
    %294 = vector.broadcast %cst_157 : f32 to vector<8x64xf32>
    %295 = arith.mulf %294, %293 : vector<8x64xf32>
    %cst_158 = arith.constant 0.707106769 : f32
    %296 = vector.broadcast %cst_158 : f32 to vector<8x64xf32>
    %297 = arith.mulf %293, %296 : vector<8x64xf32>
    %298 = math.absf %297 : vector<8x64xf32>
    %cst_159 = arith.constant 5.000000e-01 : f32
    %299 = vector.broadcast %cst_159 : f32 to vector<8x64xf32>
    %300 = arith.mulf %299, %298 : vector<8x64xf32>
    %cst_160 = arith.constant 1.000000e+00 : f32
    %301 = vector.broadcast %cst_160 : f32 to vector<8x64xf32>
    %302 = arith.addf %301, %300 : vector<8x64xf32>
    %cst_161 = arith.constant 1.000000e+00 : f32
    %303 = vector.broadcast %cst_161 : f32 to vector<8x64xf32>
    %304 = arith.divf %303, %302 : vector<8x64xf32>
    %cst_162 = arith.constant 0.170872763 : f32
    %305 = vector.broadcast %cst_162 : f32 to vector<8x64xf32>
    %306 = arith.mulf %304, %305 : vector<8x64xf32>
    %cst_163 = arith.constant -0.822152256 : f32
    %307 = vector.broadcast %cst_163 : f32 to vector<8x64xf32>
    %308 = arith.addf %307, %306 : vector<8x64xf32>
    %309 = arith.mulf %304, %308 : vector<8x64xf32>
    %cst_164 = arith.constant 1.48851585 : f32
    %310 = vector.broadcast %cst_164 : f32 to vector<8x64xf32>
    %311 = arith.addf %310, %309 : vector<8x64xf32>
    %312 = arith.mulf %304, %311 : vector<8x64xf32>
    %cst_165 = arith.constant -1.13520396 : f32
    %313 = vector.broadcast %cst_165 : f32 to vector<8x64xf32>
    %314 = arith.addf %313, %312 : vector<8x64xf32>
    %315 = arith.mulf %304, %314 : vector<8x64xf32>
    %cst_166 = arith.constant 0.278868079 : f32
    %316 = vector.broadcast %cst_166 : f32 to vector<8x64xf32>
    %317 = arith.addf %316, %315 : vector<8x64xf32>
    %318 = arith.mulf %304, %317 : vector<8x64xf32>
    %cst_167 = arith.constant -0.186288059 : f32
    %319 = vector.broadcast %cst_167 : f32 to vector<8x64xf32>
    %320 = arith.addf %319, %318 : vector<8x64xf32>
    %321 = arith.mulf %304, %320 : vector<8x64xf32>
    %cst_168 = arith.constant 0.0967841818 : f32
    %322 = vector.broadcast %cst_168 : f32 to vector<8x64xf32>
    %323 = arith.addf %322, %321 : vector<8x64xf32>
    %324 = arith.mulf %304, %323 : vector<8x64xf32>
    %cst_169 = arith.constant 0.374091953 : f32
    %325 = vector.broadcast %cst_169 : f32 to vector<8x64xf32>
    %326 = arith.addf %325, %324 : vector<8x64xf32>
    %327 = arith.mulf %304, %326 : vector<8x64xf32>
    %cst_170 = arith.constant 1.00002372 : f32
    %328 = vector.broadcast %cst_170 : f32 to vector<8x64xf32>
    %329 = arith.addf %328, %327 : vector<8x64xf32>
    %330 = arith.mulf %304, %329 : vector<8x64xf32>
    %cst_171 = arith.constant -1.26551223 : f32
    %331 = vector.broadcast %cst_171 : f32 to vector<8x64xf32>
    %332 = arith.addf %331, %330 : vector<8x64xf32>
    %cst_172 = arith.constant 0.000000e+00 : f32
    %333 = vector.broadcast %cst_172 : f32 to vector<8x64xf32>
    %334 = arith.subf %333, %298 : vector<8x64xf32>
    %335 = arith.mulf %334, %298 : vector<8x64xf32>
    %336 = arith.addf %335, %332 : vector<8x64xf32>
    %337 = math.exp %336 : vector<8x64xf32>
    %338 = arith.mulf %304, %337 : vector<8x64xf32>
    %cst_173 = arith.constant 0.000000e+00 : f32
    %339 = vector.broadcast %cst_173 : f32 to vector<8x64xf32>
    %340 = arith.cmpf oge, %297, %339 : vector<8x64xf32>
    %cst_174 = arith.constant 1.000000e+00 : f32
    %341 = vector.broadcast %cst_174 : f32 to vector<8x64xf32>
    %342 = arith.subf %341, %338 : vector<8x64xf32>
    %cst_175 = arith.constant 1.000000e+00 : f32
    %343 = vector.broadcast %cst_175 : f32 to vector<8x64xf32>
    %344 = arith.subf %338, %343 : vector<8x64xf32>
    %345 = arith.select %340, %342, %344 : vector<8x64xi1>, vector<8x64xf32>
    %cst_176 = arith.constant 1.000000e+00 : f32
    %346 = vector.broadcast %cst_176 : f32 to vector<8x64xf32>
    %347 = arith.addf %346, %345 : vector<8x64xf32>
    %348 = arith.mulf %295, %347 : vector<8x64xf32>
    %349 = arith.truncf %348 : vector<8x64xf32> to vector<8x64xbf16>
    %c0_177 = arith.constant 0 : index
    %c0_178 = arith.constant 0 : index
    %350 = vector.load %arg23[%c0_177, %c0_178] : memref<64x32xbf16, #tpu.memory_space<vmem>>, vector<64x32xbf16>
    %cst_179 = arith.constant dense<0.000000e+00> : vector<8x32xf32>
    %351 = tpu.matmul %349, %350, %cst_179 {dimension_numbers = #tpu.dot_dimension_numbers<[1], [0], [0], [1], [0, 0, 1, 1], [], []>} : vector<8x64xbf16>, vector<64x32xbf16>, vector<8x32xf32> -> vector<8x32xf32>
    %c0_180 = arith.constant 0 : index
    %c0_181 = arith.constant 0 : index
    %352 = vector.load %arg24[%c0_180, %c0_181] : memref<1x32xf32, #tpu.memory_space<vmem>>, vector<1x32xf32>
    %353 = vector.broadcast %352 : vector<1x32xf32> to vector<8x32xf32>
    %354 = arith.addf %351, %353 : vector<8x32xf32>
    %355 = arith.addf %287, %354 : vector<8x32xf32>
    %cst_182 = arith.constant dense<0.000000e+00> : vector<8xf32>
    %356 = vector.multi_reduction <add>, %355, %cst_182 [1] : vector<8x32xf32> to vector<8xf32>
    %357 = vector.shape_cast %356 : vector<8xf32> to vector<8x1xf32>
    %cst_183 = arith.constant 3.200000e+01 : f32
    %358 = vector.broadcast %cst_183 : f32 to vector<8x1xf32>
    %359 = arith.divf %357, %358 : vector<8x1xf32>
    %360 = vector.broadcast %359 : vector<8x1xf32> to vector<8x32xf32>
    %361 = arith.subf %355, %360 : vector<8x32xf32>
    %362 = arith.mulf %361, %361 : vector<8x32xf32>
    %cst_184 = arith.constant dense<0.000000e+00> : vector<8xf32>
    %363 = vector.multi_reduction <add>, %362, %cst_184 [1] : vector<8x32xf32> to vector<8xf32>
    %364 = vector.shape_cast %363 : vector<8xf32> to vector<8x1xf32>
    %cst_185 = arith.constant 3.200000e+01 : f32
    %365 = vector.broadcast %cst_185 : f32 to vector<8x1xf32>
    %366 = arith.divf %364, %365 : vector<8x1xf32>
    %cst_186 = arith.constant 9.99999974E-6 : f32
    %367 = vector.broadcast %cst_186 : f32 to vector<8x1xf32>
    %368 = arith.addf %366, %367 : vector<8x1xf32>
    %369 = math.rsqrt %368 : vector<8x1xf32>
    %370 = vector.broadcast %369 : vector<8x1xf32> to vector<8x32xf32>
    %371 = arith.mulf %361, %370 : vector<8x32xf32>
    %372 = vector.broadcast %4 : vector<1x32xf32> to vector<8x32xf32>
    %373 = arith.mulf %371, %372 : vector<8x32xf32>
    %374 = vector.broadcast %5 : vector<1x32xf32> to vector<8x32xf32>
    %375 = arith.addf %373, %374 : vector<8x32xf32>
    %c0_187 = arith.constant 0 : index
    %c0_188 = arith.constant 0 : index
    %c0_189 = arith.constant 0 : index
    %376 = vector.load %arg29[%c0_187, %c0_188, %c0_189] : memref<1x8x32xf32, #tpu.memory_space<vmem>>, vector<1x8x32xf32>
    %377 = vector.shape_cast %376 : vector<1x8x32xf32> to vector<8x32xf32>
    %378 = vector.shape_cast %375 : vector<8x32xf32> to vector<1x8x32xf32>
    tpu.vector_store %arg29[%c0_187, %c0_188, %c0_189], %378 {strides = array<i32>} : memref<1x8x32xf32, #tpu.memory_space<vmem>>, vector<1x8x32xf32>,
    return
  }
  func.func @transform_0(%arg0: i32) -> (i32, i32, i32) {
    %c0_i32 = arith.constant 0 : i32
    %c0_i32_0 = arith.constant 0 : i32
    %c0_i32_1 = arith.constant 0 : i32
    return %arg0, %c0_i32, %c0_i32_0 : i32, i32, i32
  }
  func.func @transform_1(%arg0: i32) -> (i32, i32, i32) {
    %c0_i32 = arith.constant 0 : i32
    %c0_i32_0 = arith.constant 0 : i32
    %c0_i32_1 = arith.constant 0 : i32
    return %arg0, %c0_i32, %c0_i32_0 : i32, i32, i32
  }
  func.func @transform_2(%arg0: i32) -> (i32, i32, i32, i32) {
    %c0_i32 = arith.constant 0 : i32
    %c0_i32_0 = arith.constant 0 : i32
    %c0_i32_1 = arith.constant 0 : i32
    %c0_i32_2 = arith.constant 0 : i32
    return %arg0, %c0_i32, %c0_i32_0, %c0_i32_1 : i32, i32, i32, i32
  }
  func.func @transform_3(%arg0: i32) -> (i32, i32, i32, i32) {
    %c0_i32 = arith.constant 0 : i32
    %c0_i32_0 = arith.constant 0 : i32
    %c0_i32_1 = arith.constant 0 : i32
    %c0_i32_2 = arith.constant 0 : i32
    return %arg0, %c0_i32, %c0_i32_0, %c0_i32_1 : i32, i32, i32, i32
  }
  func.func @transform_4(%arg0: i32) -> (i32, i32) {
    %c0_i32 = arith.constant 0 : i32
    %c0_i32_0 = arith.constant 0 : i32
    %c0_i32_1 = arith.constant 0 : i32
    return %c0_i32, %c0_i32_0 : i32, i32
  }
  func.func @transform_5(%arg0: i32) -> (i32, i32) {
    %c0_i32 = arith.constant 0 : i32
    %c0_i32_0 = arith.constant 0 : i32
    %c0_i32_1 = arith.constant 0 : i32
    return %c0_i32, %c0_i32_0 : i32, i32
  }
  func.func @transform_6(%arg0: i32) -> (i32, i32) {
    %c0_i32 = arith.constant 0 : i32
    %c0_i32_0 = arith.constant 0 : i32
    %c0_i32_1 = arith.constant 0 : i32
    return %c0_i32, %c0_i32_0 : i32, i32
  }
  func.func @transform_7(%arg0: i32) -> (i32, i32) {
    %c0_i32 = arith.constant 0 : i32
    %c0_i32_0 = arith.constant 0 : i32
    %c0_i32_1 = arith.constant 0 : i32
    return %c0_i32, %c0_i32_0 : i32, i32
  }
  func.func @transform_8(%arg0: i32) -> (i32, i32) {
    %c0_i32 = arith.constant 0 : i32
    %c0_i32_0 = arith.constant 0 : i32
    %c0_i32_1 = arith.constant 0 : i32
    return %c0_i32, %c0_i32_0 : i32, i32
  }
  func.func @transform_9(%arg0: i32) -> (i32, i32) {
    %c0_i32 = arith.constant 0 : i32
    %c0_i32_0 = arith.constant 0 : i32
    %c0_i32_1 = arith.constant 0 : i32
    return %c0_i32, %c0_i32_0 : i32, i32
  }
  func.func @transform_10(%arg0: i32) -> (i32, i32) {
    %c0_i32 = arith.constant 0 : i32
    %c0_i32_0 = arith.constant 0 : i32
    %c0_i32_1 = arith.constant 0 : i32
    return %c0_i32, %c0_i32_0 : i32, i32
  }
  func.func @transform_11(%arg0: i32) -> (i32, i32) {
    %c0_i32 = arith.constant 0 : i32
    %c0_i32_0 = arith.constant 0 : i32
    %c0_i32_1 = arith.constant 0 : i32
    return %c0_i32, %c0_i32_0 : i32, i32
  }
  func.func @transform_12(%arg0: i32) -> (i32, i32) {
    %c0_i32 = arith.constant 0 : i32
    %c0_i32_0 = arith.constant 0 : i32
    %c0_i32_1 = arith.constant 0 : i32
    return %c0_i32, %c0_i32_0 : i32, i32
  }
  func.func @transform_13(%arg0: i32) -> (i32, i32) {
    %c0_i32 = arith.constant 0 : i32
    %c0_i32_0 = arith.constant 0 : i32
    %c0_i32_1 = arith.constant 0 : i32
    return %c0_i32, %c0_i32_0 : i32, i32
  }
  func.func @transform_14(%arg0: i32) -> (i32, i32) {
    %c0_i32 = arith.constant 0 : i32
    %c0_i32_0 = arith.constant 0 : i32
    %c0_i32_1 = arith.constant 0 : i32
    return %c0_i32, %c0_i32_0 : i32, i32
  }
  func.func @transform_15(%arg0: i32) -> (i32, i32) {
    %c0_i32 = arith.constant 0 : i32
    %c0_i32_0 = arith.constant 0 : i32
    %c0_i32_1 = arith.constant 0 : i32
    return %c0_i32, %c0_i32_0 : i32, i32
  }
  func.func @transform_16(%arg0: i32) -> (i32, i32) {
    %c0_i32 = arith.constant 0 : i32
    %c0_i32_0 = arith.constant 0 : i32
    %c0_i32_1 = arith.constant 0 : i32
    return %c0_i32, %c0_i32_0 : i32, i32
  }
  func.func @transform_17(%arg0: i32) -> (i32, i32) {
    %c0_i32 = arith.constant 0 : i32
    %c0_i32_0 = arith.constant 0 : i32
    %c0_i32_1 = arith.constant 0 : i32
    return %c0_i32, %c0_i32_0 : i32, i32
  }
  func.func @transform_18(%arg0: i32) -> (i32, i32) {
    %c0_i32 = arith.constant 0 : i32
    %c0_i32_0 = arith.constant 0 : i32
    %c0_i32_1 = arith.constant 0 : i32
    return %c0_i32, %c0_i32_0 : i32, i32
  }
  func.func @transform_19(%arg0: i32) -> (i32, i32) {
    %c0_i32 = arith.constant 0 : i32
    %c0_i32_0 = arith.constant 0 : i32
    %c0_i32_1 = arith.constant 0 : i32
    return %c0_i32, %c0_i32_0 : i32, i32
  }
  func.func @transform_20(%arg0: i32) -> (i32, i32) {
    %c0_i32 = arith.constant 0 : i32
    %c0_i32_0 = arith.constant 0 : i32
    %c0_i32_1 = arith.constant 0 : i32
    return %c0_i32, %c0_i32_0 : i32, i32
  }
  func.func @transform_21(%arg0: i32) -> (i32, i32) {
    %c0_i32 = arith.constant 0 : i32
    %c0_i32_0 = arith.constant 0 : i32
    %c0_i32_1 = arith.constant 0 : i32
    return %c0_i32, %c0_i32_0 : i32, i32
  }
  func.func @transform_22(%arg0: i32) -> (i32, i32) {
    %c0_i32 = arith.constant 0 : i32
    %c0_i32_0 = arith.constant 0 : i32
    %c0_i32_1 = arith.constant 0 : i32
    return %c0_i32, %c0_i32_0 : i32, i32
  }
  func.func @transform_23(%arg0: i32) -> (i32, i32) {
    %c0_i32 = arith.constant 0 : i32
    %c0_i32_0 = arith.constant 0 : i32
    %c0_i32_1 = arith.constant 0 : i32
    return %c0_i32, %c0_i32_0 : i32, i32
  }
  func.func @transform_24(%arg0: i32) -> (i32, i32) {
    %c0_i32 = arith.constant 0 : i32
    %c0_i32_0 = arith.constant 0 : i32
    %c0_i32_1 = arith.constant 0 : i32
    return %c0_i32, %c0_i32_0 : i32, i32
  }
  func.func @transform_25(%arg0: i32) -> (i32, i32) {
    %c0_i32 = arith.constant 0 : i32
    %c0_i32_0 = arith.constant 0 : i32
    %c0_i32_1 = arith.constant 0 : i32
    return %c0_i32, %c0_i32_0 : i32, i32
  }
  func.func @transform_26(%arg0: i32) -> (i32, i32, i32, i32) {
    %c0_i32 = arith.constant 0 : i32
    %c0_i32_0 = arith.constant 0 : i32
    %c0_i32_1 = arith.constant 0 : i32
    %c0_i32_2 = arith.constant 0 : i32
    return %arg0, %c0_i32, %c0_i32_0, %c0_i32_1 : i32, i32, i32, i32
  }
  func.func @transform_27(%arg0: i32) -> (i32, i32, i32, i32) {
    %c0_i32 = arith.constant 0 : i32
    %c0_i32_0 = arith.constant 0 : i32
    %c0_i32_1 = arith.constant 0 : i32
    %c0_i32_2 = arith.constant 0 : i32
    return %arg0, %c0_i32, %c0_i32_0, %c0_i32_1 : i32, i32, i32, i32
  }
  func.func @transform_28(%arg0: i32) -> (i32, i32, i32) {
    %c0_i32 = arith.constant 0 : i32
    %c0_i32_0 = arith.constant 0 : i32
    %c0_i32_1 = arith.constant 0 : i32
    return %arg0, %c0_i32, %c0_i32_0 : i32, i32, i32
  }
}

</mosaic_0001>

<llo_original>
// kernel: tpu_custom_call.1
$region0: #{tpu_custom_call.1}
  #allocation0 [shape = 'u32[]', space=smem, size = 0x4, offset = 0x4, fixed_abs, tag = 'smem constant byte address 0x4 - core index']
  #allocation1 [shape = 'u32[144,128]{1,0:T(1,128)}', space=vmem, size = 0x12000, scoped, tag = 'internal scratch']
  #allocation2 [shape = 'f32[8,32]{1,0:T(8,128)}', space=vmem, size = 0x1000, scoped, tag = 'scratch operand']
  %s0 = inlined_call_operand.vmem [shape: f32[2,8,32], index: 0, kind: input, shape index: {}]
  %s1 = inlined_call_operand.vmem [shape: f32[2,8,32], index: 1, kind: input, shape index: {}]
  %s2 = inlined_call_operand.vmem [shape: f32[2,1,8,8], index: 2, kind: input, shape index: {}]
  %s3 = inlined_call_operand.hbm [shape: f32[2,1,8,8], index: 3, kind: input, shape index: {}]
  %s4 = inlined_call_operand.hbm [shape: bf16[32,32], index: 4, kind: input, shape index: {}]
  %s5 = inlined_call_operand.hbm [shape: f32[1,32], index: 5, kind: input, shape index: {}]
  %s6 = inlined_call_operand.hbm [shape: bf16[32,32], index: 6, kind: input, shape index: {}]
  %s7 = inlined_call_operand.hbm [shape: f32[1,32], index: 7, kind: input, shape index: {}]
  %s8 = inlined_call_operand.hbm [shape: bf16[32,32], index: 8, kind: input, shape index: {}]
  %s9 = inlined_call_operand.hbm [shape: f32[1,32], index: 9, kind: input, shape index: {}]
  %s10 = inlined_call_operand.vmem [shape: bf16[32,32], index: 10, kind: input, shape index: {}]
  %s11 = inlined_call_operand.hbm [shape: f32[1,32], index: 11, kind: input, shape index: {}]
  %s12 = inlined_call_operand.hbm [shape: bf16[32,32], index: 12, kind: input, shape index: {}]
  %s13 = inlined_call_operand.hbm [shape: f32[1,32], index: 13, kind: input, shape index: {}]
  %s14 = inlined_call_operand.hbm [shape: bf16[32,32], index: 14, kind: input, shape index: {}]
  %s15 = inlined_call_operand.hbm [shape: f32[1,32], index: 15, kind: input, shape index: {}]
  %s16 = inlined_call_operand.hbm [shape: bf16[32,32], index: 16, kind: input, shape index: {}]
  %s17 = inlined_call_operand.hbm [shape: f32[1,32], index: 17, kind: input, shape index: {}]
  %s18 = inlined_call_operand.vmem [shape: bf16[32,32], index: 18, kind: input, shape index: {}]
  %s19 = inlined_call_operand.vmem [shape: f32[1,32], index: 19, kind: input, shape index: {}]
  %s20 = inlined_call_operand.hbm [shape: bf16[32,64], index: 20, kind: input, shape index: {}]
  %s21 = inlined_call_operand.vmem [shape: f32[1,64], index: 21, kind: input, shape index: {}]
  %s22 = inlined_call_operand.vmem [shape: bf16[64,32], index: 22, kind: input, shape index: {}]
  %s23 = inlined_call_operand.vmem [shape: f32[1,32], index: 23, kind: input, shape index: {}]
  %s24 = inlined_call_operand.vmem [shape: f32[1,32], index: 24, kind: input, shape index: {}]
  %s25 = inlined_call_operand.vmem [shape: f32[1,32], index: 25, kind: input, shape index: {}]
  %s26 = inlined_call_operand.hbm [shape: f32[2,4,8,8], index: 26, kind: output, shape index: {0}]
  %s27 = inlined_call_operand.hbm [shape: f32[2,4,8,8], index: 27, kind: output, shape index: {1}]
  %s28 = inlined_call_operand.hbm [shape: f32[2,8,32], index: 28, kind: output, shape index: {2}]
  %29 = xla_tuple %s26, %s27, %s28
  %s30 = sld [smem:[#allocation0]]
  $region213: #{tpu_custom_call.1} parent=0
    _
  %s32 = ssub.s32 1, %s30
  %s33 = scalar_select 0, %s32, %s30
  $region1: #{tpu_custom_call.1} parent=0
    #allocation3 [shape = 'u8[8192]{0}', space=vmem, size = 0x2000, scoped, tag = 'input window, operand 3']
    #allocation4 [shape = 's32[2]{0}', space=sflag, size = 0x8, scoped, tag = 'scoped memory for tpu_custom_call.1']
    #allocation5 [shape = 's32[2]{0}', space=sflag, size = 0x8, scoped, tag = 'scoped memory for tpu_custom_call.1']
    #allocation6 [shape = 'u8[8192]{0}', space=vmem, size = 0x2000, scoped, tag = 'input window, operand 4, single buffered']
    #allocation7 [shape = 's32[1]{0}', space=sflag, size = 0x4, scoped, tag = 'scoped memory for tpu_custom_call.1']
    #allocation8 [shape = 'u8[512]{0}', space=vmem, size = 0x400, scoped, tag = 'input window, operand 5, single buffered']
    #allocation9 [shape = 'u8[8192]{0}', space=vmem, size = 0x2000, scoped, tag = 'input window, operand 6, single buffered']
    #allocation10 [shape = 's32[1]{0}', space=sflag, size = 0x4, scoped, tag = 'scoped memory for tpu_custom_call.1']
    #allocation11 [shape = 'u8[512]{0}', space=vmem, size = 0x400, scoped, tag = 'input window, operand 7, single buffered']
    #allocation12 [shape = 'u8[8192]{0}', space=vmem, size = 0x2000, scoped, tag = 'input window, operand 8, single buffered']
    #allocation13 [shape = 's32[1]{0}', space=sflag, size = 0x4, scoped, tag = 'scoped memory for tpu_custom_call.1']
    #allocation14 [shape = 'u8[512]{0}', space=vmem, size = 0x400, scoped, tag = 'input window, operand 9, single buffered']
    #allocation15 [shape = 'u8[512]{0}', space=vmem, size = 0x400, scoped, tag = 'input window, operand 11, single buffered']
    #allocation16 [shape = 's32[1]{0}', space=sflag, size = 0x4, scoped, tag = 'scoped memory for tpu_custom_call.1']
    #allocation17 [shape = 'u8[8192]{0}', space=vmem, size = 0x2000, scoped, tag = 'input window, operand 12, single buffered']
    #allocation18 [shape = 'u8[512]{0}', space=vmem, size = 0x400, scoped, tag = 'input window, operand 13, single buffered']
    #allocation19 [shape = 's32[1]{0}', space=sflag, size = 0x4, scoped, tag = 'scoped memory for tpu_custom_call.1']
    #allocation20 [shape = 'u8[8192]{0}', space=vmem, size = 0x2000, scoped, tag = 'input window, operand 14, single buffered']
    #allocation21 [shape = 'u8[512]{0}', space=vmem, size = 0x400, scoped, tag = 'input window, operand 15, single buffered']
    #allocation22 [shape = 's32[1]{0}', space=sflag, size = 0x4, scoped, tag = 'scoped memory for tpu_custom_call.1']
    #allocation23 [shape = 'u8[8192]{0}', space=vmem, size = 0x2000, scoped, tag = 'input window, operand 16, single buffered']
    #allocation24 [shape = 'u8[512]{0}', space=vmem, size = 0x400, scoped, tag = 'input window, operand 17, single buffered']
    #allocation25 [shape = 's32[1]{0}', space=sflag, size = 0x4, scoped, tag = 'scoped memory for tpu_custom_call.1']
    #allocation26 [shape = 'u8[8192]{0}', space=vmem, size = 0x2000, scoped, tag = 'input window, operand 20, single buffered']
    #allocation27 [shape = 'u8[32768]{0}', space=vmem, size = 0x8000, scoped, tag = 'output window, operand 0']
    #allocation28 [shape = 'u8[32768]{0}', space=vmem, size = 0x8000, scoped, tag = 'output window, operand 1']
    #allocation29 [shape = 's32[2]{0}', space=sflag, size = 0x8, scoped, tag = 'scoped memory for tpu_custom_call.1']
    #allocation30 [shape = 'u8[8192]{0}', space=vmem, size = 0x2000, scoped, tag = 'output window, operand 2']
    %34 = vsyncpa [#allocation4], 0
    %s35 = scalar_lea.sflag [#allocation4], 1
    %36 = vsyncpa %s35, 0
    %37 = vsyncpa [#allocation7], 0
    %38 = vsyncpa [#allocation10], 0
    %39 = vsyncpa [#allocation13], 0
    %40 = vsyncpa [#allocation16], 0
    %41 = vsyncpa [#allocation19], 0
    %42 = vsyncpa [#allocation22], 0
    %43 = vsyncpa [#allocation25], 0
    %44 = vsyncpa [#allocation5], 0
    %s45 = scalar_lea.sflag [#allocation5], 1
    %46 = vsyncpa %s45, 0
    %47 = vsyncpa [#allocation29], 0
    %s48 = scalar_lea.sflag [#allocation29], 1
    %49 = vsyncpa %s48, 0
    loop: start=0, step=1, limit=4
    $region2: #{tpu_custom_call.1} parent=1 // loop_pre_header
      _
    $region3: #{tpu_custom_call.1} parent=1 // loop_header
      %s51 = sphi 0, %s55
      %p52 = scmp.ge.s32.totalorder %s51, 4
      %s61 = sphi 0, %s63
      %s64 = sphi 0, %s61
      %s65 = sphi 0, %s64
      %s81 = sphi 0, %s65
      %s87 = sphi 0, %s89
      %s90 = sphi 0, %s87
      %s91 = sphi 0, %s90
      %s107 = sphi 0, %s91
      %s113 = sphi 0, %s115
      %s116 = sphi 0, %s113
      %s117 = sphi 0, %s116
      %s133 = sphi 0, %s117
      %s139 = sphi 0, %s141
      %s142 = sphi 0, %s139
      %s143 = sphi 0, %s142
      %s159 = sphi 0, %s143
      %s163 = sphi 0, %s163
      %s165 = sphi 0, %s163
      %s166 = sphi 0, %s165
      %s180 = sphi 0, %s166
      %s184 = sphi 0, %s184
      %s186 = sphi 0, %s184
      %s187 = sphi 0, %s186
      %s201 = sphi 0, %s187
      %s205 = sphi 0, %s205
      %s207 = sphi 0, %s205
      %s208 = sphi 0, %s207
      %s222 = sphi 0, %s208
      %s226 = sphi 0, %s226
      %s228 = sphi 0, %s226
      %s229 = sphi 0, %s228
      %s243 = sphi 0, %s229
      %s247 = sphi 0, %s247
      %s249 = sphi 0, %s247
      %s250 = sphi 0, %s249
      %s264 = sphi 0, %s250
      %s268 = sphi 0, %s268
      %s270 = sphi 0, %s268
      %s271 = sphi 0, %s270
      %s285 = sphi 0, %s271
      %s289 = sphi 0, %s289
      %s291 = sphi 0, %s289
      %s292 = sphi 0, %s291
      %s306 = sphi 0, %s292
      %s310 = sphi 0, %s310
      %s312 = sphi 0, %s310
      %s313 = sphi 0, %s312
      %s327 = sphi 0, %s313
      %s331 = sphi 0, %s331
      %s333 = sphi 0, %s331
      %s334 = sphi 0, %s333
      %s348 = sphi 0, %s334
      %s352 = sphi 0, %s352
      %s354 = sphi 0, %s352
      %s355 = sphi 0, %s354
      %s369 = sphi 0, %s355
      %s373 = sphi 0, %s373
      %s375 = sphi 0, %s373
      %s376 = sphi 0, %s375
      %s390 = sphi 0, %s376
      %s394 = sphi 0, %s394
      %s396 = sphi 0, %s394
      %s397 = sphi 0, %s396
      %s411 = sphi 0, %s397
      %s415 = sphi 0, %s415
      %s417 = sphi 0, %s415
      %s418 = sphi 0, %s417
      %s432 = sphi 0, %s418
      %s436 = sphi 0, %s436
      %s438 = sphi 0, %s436
      %s439 = sphi 0, %s438
      %s453 = sphi 0, %s439
      %s457 = sphi 0, %s457
      %s459 = sphi 0, %s457
      %s460 = sphi 0, %s459
      %s474 = sphi 0, %s460
      %s478 = sphi 0, %s478
      %s480 = sphi 0, %s478
      %s481 = sphi 0, %s480
      %s495 = sphi 0, %s481
      %s499 = sphi 0, %s499
      %s501 = sphi 0, %s499
      %s502 = sphi 0, %s501
      %s516 = sphi 0, %s502
      %s520 = sphi 0, %s520
      %s522 = sphi 0, %s520
      %s523 = sphi 0, %s522
      %s537 = sphi 0, %s523
      %s541 = sphi 0, %s541
      %s543 = sphi 0, %s541
      %s544 = sphi 0, %s543
      %s558 = sphi 0, %s544
      %s562 = sphi 0, %s562
      %s564 = sphi 0, %s562
      %s565 = sphi 0, %s564
      %s579 = sphi 0, %s565
      %s583 = sphi 0, %s583
      %s585 = sphi 0, %s583
      %s586 = sphi 0, %s585
      %s600 = sphi 0, %s586
      %s604 = sphi 0, %s604
      %s606 = sphi 0, %s604
      %s607 = sphi 0, %s606
      %s621 = sphi 0, %s607
      %s627 = sphi 0, %s629
      %s630 = sphi 0, %s627
      %s631 = sphi 0, %s630
      %s647 = sphi 0, %s631
      %s653 = sphi 0, %s655
      %s656 = sphi 0, %s653
      %s657 = sphi 0, %s656
      %s673 = sphi 0, %s657
      %s679 = sphi 0, %s681
      %s682 = sphi 0, %s679
      %s683 = sphi 0, %s682
      %s699 = sphi 0, %s683
    $region4: #{tpu_custom_call.1} parent=1 // loop_header_branch
      %54 = sbr.rel (%p52) target = $region8
    $region5: #{tpu_custom_call.1} parent=1 // loop_body
      %s56 = ssub.s32 %s51, 1
      %s57 = ssub.s32 %s51, 2
      %s58 = sadd.s32 %s51, 1
      %s59 = ssub.s32 %s51, %s58
      %p60 = scmp.eq.s32.totalorder %s59, 0
      %s62 = sadd.s32 %s61, 1
      %s63 = scalar_select %p60, %s61, %s62
      %p66 = pneg %p60
      %p67 = scmp.eq.s32.totalorder %s51, 1
      %p68 = por %p66, %p67
      %p69 = scmp.ne.s32.totalorder %s61, %s64
      %p70 = scmp.eq.s32.totalorder %s51, 0
      %p71 = por %p69, %p70
      %p72 = scmp.ne.s32.totalorder %s61, %s64
      %p73 = scmp.eq.s32.totalorder %s56, 1
      %p74 = por %p72, %p73
      %p75 = scmp.ne.s32.totalorder %s64, %s65
      %p76 = scmp.eq.s32.totalorder %s56, 0
      %p77 = por %p75, %p76
      %p78 = scmp.ne.s32.totalorder %s64, %s65
      %p79 = scmp.eq.s32.totalorder %s57, 1
      %p80 = por %p78, %p79
      %p82 = scmp.ne.s32.totalorder %s65, %s81
      %p83 = scmp.eq.s32.totalorder %s57, 0
      %p84 = por %p82, %p83
      %s85 = ssub.s32 %s51, %s58
      %p86 = scmp.eq.s32.totalorder %s85, 0
      %s88 = sadd.s32 %s87, 1
      %s89 = scalar_select %p86, %s87, %s88
      %p92 = pneg %p86
      %p93 = scmp.eq.s32.totalorder %s51, 1
      %p94 = por %p92, %p93
      %p95 = scmp.ne.s32.totalorder %s87, %s90
      %p96 = scmp.eq.s32.totalorder %s51, 0
      %p97 = por %p95, %p96
      %p98 = scmp.ne.s32.totalorder %s87, %s90
      %p99 = scmp.eq.s32.totalorder %s56, 1
      %p100 = por %p98, %p99
      %p101 = scmp.ne.s32.totalorder %s90, %s91
      %p102 = scmp.eq.s32.totalorder %s56, 0
      %p103 = por %p101, %p102
      %p104 = scmp.ne.s32.totalorder %s90, %s91
      %p105 = scmp.eq.s32.totalorder %s57, 1
      %p106 = por %p104, %p105
      %p108 = scmp.ne.s32.totalorder %s91, %s107
      %p109 = scmp.eq.s32.totalorder %s57, 0
      %p110 = por %p108, %p109
      %s111 = ssub.s32 %s51, %s58
      %p112 = scmp.eq.s32.totalorder %s111, 0
      %s114 = sadd.s32 %s113, 1
      %s115 = scalar_select %p112, %s113, %s114
      %p118 = pneg %p112
      %p119 = scmp.eq.s32.totalorder %s51, 1
      %p120 = por %p118, %p119
      %p121 = scmp.ne.s32.totalorder %s113, %s116
      %p122 = scmp.eq.s32.totalorder %s51, 0
      %p123 = por %p121, %p122
      %p124 = scmp.ne.s32.totalorder %s113, %s116
      %p125 = scmp.eq.s32.totalorder %s56, 1
      %p126 = por %p124, %p125
      %p127 = scmp.ne.s32.totalorder %s116, %s117
      %p128 = scmp.eq.s32.totalorder %s56, 0
      %p129 = por %p127, %p128
      %p130 = scmp.ne.s32.totalorder %s116, %s117
      %p131 = scmp.eq.s32.totalorder %s57, 1
      %p132 = por %p130, %p131
      %p134 = scmp.ne.s32.totalorder %s117, %s133
      %p135 = scmp.eq.s32.totalorder %s57, 0
      %p136 = por %p134, %p135
      %s137 = ssub.s32 %s51, %s58
      %p138 = scmp.eq.s32.totalorder %s137, 0
      %s140 = sadd.s32 %s139, 1
      %s141 = scalar_select %p138, %s139, %s140
      %p144 = pneg %p138
      %p145 = scmp.eq.s32.totalorder %s51, 1
      %p146 = por %p144, %p145
      %p147 = scmp.ne.s32.totalorder %s139, %s142
      %p148 = scmp.eq.s32.totalorder %s51, 0
      %p149 = por %p147, %p148
      %p150 = scmp.ne.s32.totalorder %s139, %s142
      %p151 = scmp.eq.s32.totalorder %s56, 1
      %p152 = por %p150, %p151
      %p153 = scmp.ne.s32.totalorder %s142, %s143
      %p154 = scmp.eq.s32.totalorder %s56, 0
      %p155 = por %p153, %p154
      %p156 = scmp.ne.s32.totalorder %s142, %s143
      %p157 = scmp.eq.s32.totalorder %s57, 1
      %p158 = por %p156, %p157
      %p160 = scmp.ne.s32.totalorder %s143, %s159
      %p161 = scmp.eq.s32.totalorder %s57, 0
      %p162 = por %p160, %p161
      %s164 = sadd.s32 %s163, 1
      %p167 = scmp.eq.s32.totalorder %s51, 1
      %p168 = scmp.ne.s32.totalorder %s163, %s165
      %p169 = scmp.eq.s32.totalorder %s51, 0
      %p170 = por %p168, %p169
      %p171 = scmp.ne.s32.totalorder %s163, %s165
      %p172 = scmp.eq.s32.totalorder %s56, 1
      %p173 = por %p171, %p172
      %p174 = scmp.ne.s32.totalorder %s165, %s166
      %p175 = scmp.eq.s32.totalorder %s56, 0
      %p176 = por %p174, %p175
      %p177 = scmp.ne.s32.totalorder %s165, %s166
      %p178 = scmp.eq.s32.totalorder %s57, 1
      %p179 = por %p177, %p178
      %p181 = scmp.ne.s32.totalorder %s166, %s180
      %p182 = scmp.eq.s32.totalorder %s57, 0
      %p183 = por %p181, %p182
      %s185 = sadd.s32 %s184, 1
      %p188 = scmp.eq.s32.totalorder %s51, 1
      %p189 = scmp.ne.s32.totalorder %s184, %s186
      %p190 = scmp.eq.s32.totalorder %s51, 0
      %p191 = por %p189, %p190
      %p192 = scmp.ne.s32.totalorder %s184, %s186
      %p193 = scmp.eq.s32.totalorder %s56, 1
      %p194 = por %p192, %p193
      %p195 = scmp.ne.s32.totalorder %s186, %s187
      %p196 = scmp.eq.s32.totalorder %s56, 0
      %p197 = por %p195, %p196
      %p198 = scmp.ne.s32.totalorder %s186, %s187
      %p199 = scmp.eq.s32.totalorder %s57, 1
      %p200 = por %p198, %p199
      %p202 = scmp.ne.s32.totalorder %s187, %s201
      %p203 = scmp.eq.s32.totalorder %s57, 0
      %p204 = por %p202, %p203
      %s206 = sadd.s32 %s205, 1
      %p209 = scmp.eq.s32.totalorder %s51, 1
      %p210 = scmp.ne.s32.totalorder %s205, %s207
      %p211 = scmp.eq.s32.totalorder %s51, 0
      %p212 = por %p210, %p211
      %p213 = scmp.ne.s32.totalorder %s205, %s207
      %p214 = scmp.eq.s32.totalorder %s56, 1
      %p215 = por %p213, %p214
      %p216 = scmp.ne.s32.totalorder %s207, %s208
      %p217 = scmp.eq.s32.totalorder %s56, 0
      %p218 = por %p216, %p217
      %p219 = scmp.ne.s32.totalorder %s207, %s208
      %p220 = scmp.eq.s32.totalorder %s57, 1
      %p221 = por %p219, %p220
      %p223 = scmp.ne.s32.totalorder %s208, %s222
      %p224 = scmp.eq.s32.totalorder %s57, 0
      %p225 = por %p223, %p224
      %s227 = sadd.s32 %s226, 1
      %p230 = scmp.eq.s32.totalorder %s51, 1
      %p231 = scmp.ne.s32.totalorder %s226, %s228
      %p232 = scmp.eq.s32.totalorder %s51, 0
      %p233 = por %p231, %p232
      %p234 = scmp.ne.s32.totalorder %s226, %s228
      %p235 = scmp.eq.s32.totalorder %s56, 1
      %p236 = por %p234, %p235
      %p237 = scmp.ne.s32.totalorder %s228, %s229
      %p238 = scmp.eq.s32.totalorder %s56, 0
      %p239 = por %p237, %p238
      %p240 = scmp.ne.s32.totalorder %s228, %s229
      %p241 = scmp.eq.s32.totalorder %s57, 1
      %p242 = por %p240, %p241
      %p244 = scmp.ne.s32.totalorder %s229, %s243
      %p245 = scmp.eq.s32.totalorder %s57, 0
      %p246 = por %p244, %p245
      %s248 = sadd.s32 %s247, 1
      %p251 = scmp.eq.s32.totalorder %s51, 1
      %p252 = scmp.ne.s32.totalorder %s247, %s249
      %p253 = scmp.eq.s32.totalorder %s51, 0
      %p254 = por %p252, %p253
      %p255 = scmp.ne.s32.totalorder %s247, %s249
      %p256 = scmp.eq.s32.totalorder %s56, 1
      %p257 = por %p255, %p256
      %p258 = scmp.ne.s32.totalorder %s249, %s250
      %p259 = scmp.eq.s32.totalorder %s56, 0
      %p260 = por %p258, %p259
      %p261 = scmp.ne.s32.totalorder %s249, %s250
      %p262 = scmp.eq.s32.totalorder %s57, 1
      %p263 = por %p261, %p262
      %p265 = scmp.ne.s32.totalorder %s250, %s264
      %p266 = scmp.eq.s32.totalorder %s57, 0
      %p267 = por %p265, %p266
      %s269 = sadd.s32 %s268, 1
      %p272 = scmp.eq.s32.totalorder %s51, 1
      %p273 = scmp.ne.s32.totalorder %s268, %s270
      %p274 = scmp.eq.s32.totalorder %s51, 0
      %p275 = por %p273, %p274
      %p276 = scmp.ne.s32.totalorder %s268, %s270
      %p277 = scmp.eq.s32.totalorder %s56, 1
      %p278 = por %p276, %p277
      %p279 = scmp.ne.s32.totalorder %s270, %s271
      %p280 = scmp.eq.s32.totalorder %s56, 0
      %p281 = por %p279, %p280
      %p282 = scmp.ne.s32.totalorder %s270, %s271
      %p283 = scmp.eq.s32.totalorder %s57, 1
      %p284 = por %p282, %p283
      %p286 = scmp.ne.s32.totalorder %s271, %s285
      %p287 = scmp.eq.s32.totalorder %s57, 0
      %p288 = por %p286, %p287
      %s290 = sadd.s32 %s289, 1
      %p293 = scmp.eq.s32.totalorder %s51, 1
      %p294 = scmp.ne.s32.totalorder %s289, %s291
      %p295 = scmp.eq.s32.totalorder %s51, 0
      %p296 = por %p294, %p295
      %p297 = scmp.ne.s32.totalorder %s289, %s291
      %p298 = scmp.eq.s32.totalorder %s56, 1
      %p299 = por %p297, %p298
      %p300 = scmp.ne.s32.totalorder %s291, %s292
      %p301 = scmp.eq.s32.totalorder %s56, 0
      %p302 = por %p300, %p301
      %p303 = scmp.ne.s32.totalorder %s291, %s292
      %p304 = scmp.eq.s32.totalorder %s57, 1
      %p305 = por %p303, %p304
      %p307 = scmp.ne.s32.totalorder %s292, %s306
      %p308 = scmp.eq.s32.totalorder %s57, 0
      %p309 = por %p307, %p308
      %s311 = sadd.s32 %s310, 1
      %p314 = scmp.eq.s32.totalorder %s51, 1
      %p315 = scmp.ne.s32.totalorder %s310, %s312
      %p316 = scmp.eq.s32.totalorder %s51, 0
      %p317 = por %p315, %p316
      %p318 = scmp.ne.s32.totalorder %s310, %s312
      %p319 = scmp.eq.s32.totalorder %s56, 1
      %p320 = por %p318, %p319
      %p321 = scmp.ne.s32.totalorder %s312, %s313
      %p322 = scmp.eq.s32.totalorder %s56, 0
      %p323 = por %p321, %p322
      %p324 = scmp.ne.s32.totalorder %s312, %s313
      %p325 = scmp.eq.s32.totalorder %s57, 1
      %p326 = por %p324, %p325
      %p328 = scmp.ne.s32.totalorder %s313, %s327
      %p329 = scmp.eq.s32.totalorder %s57, 0
      %p330 = por %p328, %p329
      %s332 = sadd.s32 %s331, 1
      %p335 = scmp.eq.s32.totalorder %s51, 1
      %p336 = scmp.ne.s32.totalorder %s331, %s333
      %p337 = scmp.eq.s32.totalorder %s51, 0
      %p338 = por %p336, %p337
      %p339 = scmp.ne.s32.totalorder %s331, %s333
      %p340 = scmp.eq.s32.totalorder %s56, 1
      %p341 = por %p339, %p340
      %p342 = scmp.ne.s32.totalorder %s333, %s334
      %p343 = scmp.eq.s32.totalorder %s56, 0
      %p344 = por %p342, %p343
      %p345 = scmp.ne.s32.totalorder %s333, %s334
      %p346 = scmp.eq.s32.totalorder %s57, 1
      %p347 = por %p345, %p346
      %p349 = scmp.ne.s32.totalorder %s334, %s348
      %p350 = scmp.eq.s32.totalorder %s57, 0
      %p351 = por %p349, %p350
      %s353 = sadd.s32 %s352, 1
      %p356 = scmp.eq.s32.totalorder %s51, 1
      %p357 = scmp.ne.s32.totalorder %s352, %s354
      %p358 = scmp.eq.s32.totalorder %s51, 0
      %p359 = por %p357, %p358
      %p360 = scmp.ne.s32.totalorder %s352, %s354
      %p361 = scmp.eq.s32.totalorder %s56, 1
      %p362 = por %p360, %p361
      %p363 = scmp.ne.s32.totalorder %s354, %s355
      %p364 = scmp.eq.s32.totalorder %s56, 0
      %p365 = por %p363, %p364
      %p366 = scmp.ne.s32.totalorder %s354, %s355
      %p367 = scmp.eq.s32.totalorder %s57, 1
      %p368 = por %p366, %p367
      %p370 = scmp.ne.s32.totalorder %s355, %s369
      %p371 = scmp.eq.s32.totalorder %s57, 0
      %p372 = por %p370, %p371
      %s374 = sadd.s32 %s373, 1
      %p377 = scmp.eq.s32.totalorder %s51, 1
      %p378 = scmp.ne.s32.totalorder %s373, %s375
      %p379 = scmp.eq.s32.totalorder %s51, 0
      %p380 = por %p378, %p379
      %p381 = scmp.ne.s32.totalorder %s373, %s375
      %p382 = scmp.eq.s32.totalorder %s56, 1
      %p383 = por %p381, %p382
      %p384 = scmp.ne.s32.totalorder %s375, %s376
      %p385 = scmp.eq.s32.totalorder %s56, 0
      %p386 = por %p384, %p385
      %p387 = scmp.ne.s32.totalorder %s375, %s376
      %p388 = scmp.eq.s32.totalorder %s57, 1
      %p389 = por %p387, %p388
      %p391 = scmp.ne.s32.totalorder %s376, %s390
      %p392 = scmp.eq.s32.totalorder %s57, 0
      %p393 = por %p391, %p392
      %s395 = sadd.s32 %s394, 1
      %p398 = scmp.eq.s32.totalorder %s51, 1
      %p399 = scmp.ne.s32.totalorder %s394, %s396
      %p400 = scmp.eq.s32.totalorder %s51, 0
      %p401 = por %p399, %p400
      %p402 = scmp.ne.s32.totalorder %s394, %s396
      %p403 = scmp.eq.s32.totalorder %s56, 1
      %p404 = por %p402, %p403
      %p405 = scmp.ne.s32.totalorder %s396, %s397
      %p406 = scmp.eq.s32.totalorder %s56, 0
      %p407 = por %p405, %p406
      %p408 = scmp.ne.s32.totalorder %s396, %s397
      %p409 = scmp.eq.s32.totalorder %s57, 1
      %p410 = por %p408, %p409
      %p412 = scmp.ne.s32.totalorder %s397, %s411
      %p413 = scmp.eq.s32.totalorder %s57, 0
      %p414 = por %p412, %p413
      %s416 = sadd.s32 %s415, 1
      %p419 = scmp.eq.s32.totalorder %s51, 1
      %p420 = scmp.ne.s32.totalorder %s415, %s417
      %p421 = scmp.eq.s32.totalorder %s51, 0
      %p422 = por %p420, %p421
      %p423 = scmp.ne.s32.totalorder %s415, %s417
      %p424 = scmp.eq.s32.totalorder %s56, 1
      %p425 = por %p423, %p424
      %p426 = scmp.ne.s32.totalorder %s417, %s418
      %p427 = scmp.eq.s32.totalorder %s56, 0
      %p428 = por %p426, %p427
      %p429 = scmp.ne.s32.totalorder %s417, %s418
      %p430 = scmp.eq.s32.totalorder %s57, 1
      %p431 = por %p429, %p430
      %p433 = scmp.ne.s32.totalorder %s418, %s432
      %p434 = scmp.eq.s32.totalorder %s57, 0
      %p435 = por %p433, %p434
      %s437 = sadd.s32 %s436, 1
      %p440 = scmp.eq.s32.totalorder %s51, 1
      %p441 = scmp.ne.s32.totalorder %s436, %s438
      %p442 = scmp.eq.s32.totalorder %s51, 0
      %p443 = por %p441, %p442
      %p444 = scmp.ne.s32.totalorder %s436, %s438
      %p445 = scmp.eq.s32.totalorder %s56, 1
      %p446 = por %p444, %p445
      %p447 = scmp.ne.s32.totalorder %s438, %s439
      %p448 = scmp.eq.s32.totalorder %s56, 0
      %p449 = por %p447, %p448
      %p450 = scmp.ne.s32.totalorder %s438, %s439
      %p451 = scmp.eq.s32.totalorder %s57, 1
      %p452 = por %p450, %p451
      %p454 = scmp.ne.s32.totalorder %s439, %s453
      %p455 = scmp.eq.s32.totalorder %s57, 0
      %p456 = por %p454, %p455
      %s458 = sadd.s32 %s457, 1
      %p461 = scmp.eq.s32.totalorder %s51, 1
      %p462 = scmp.ne.s32.totalorder %s457, %s459
      %p463 = scmp.eq.s32.totalorder %s51, 0
      %p464 = por %p462, %p463
      %p465 = scmp.ne.s32.totalorder %s457, %s459
      %p466 = scmp.eq.s32.totalorder %s56, 1
      %p467 = por %p465, %p466
      %p468 = scmp.ne.s32.totalorder %s459, %s460
      %p469 = scmp.eq.s32.totalorder %s56, 0
      %p470 = por %p468, %p469
      %p471 = scmp.ne.s32.totalorder %s459, %s460
      %p472 = scmp.eq.s32.totalorder %s57, 1
      %p473 = por %p471, %p472
      %p475 = scmp.ne.s32.totalorder %s460, %s474
      %p476 = scmp.eq.s32.totalorder %s57, 0
      %p477 = por %p475, %p476
      %s479 = sadd.s32 %s478, 1
      %p482 = scmp.eq.s32.totalorder %s51, 1
      %p483 = scmp.ne.s32.totalorder %s478, %s480
      %p484 = scmp.eq.s32.totalorder %s51, 0
      %p485 = por %p483, %p484
      %p486 = scmp.ne.s32.totalorder %s478, %s480
      %p487 = scmp.eq.s32.totalorder %s56, 1
      %p488 = por %p486, %p487
      %p489 = scmp.ne.s32.totalorder %s480, %s481
      %p490 = scmp.eq.s32.totalorder %s56, 0
      %p491 = por %p489, %p490
      %p492 = scmp.ne.s32.totalorder %s480, %s481
      %p493 = scmp.eq.s32.totalorder %s57, 1
      %p494 = por %p492, %p493
      %p496 = scmp.ne.s32.totalorder %s481, %s495
      %p497 = scmp.eq.s32.totalorder %s57, 0
      %p498 = por %p496, %p497
      %s500 = sadd.s32 %s499, 1
      %p503 = scmp.eq.s32.totalorder %s51, 1
      %p504 = scmp.ne.s32.totalorder %s499, %s501
      %p505 = scmp.eq.s32.totalorder %s51, 0
      %p506 = por %p504, %p505
      %p507 = scmp.ne.s32.totalorder %s499, %s501
      %p508 = scmp.eq.s32.totalorder %s56, 1
      %p509 = por %p507, %p508
      %p510 = scmp.ne.s32.totalorder %s501, %s502
      %p511 = scmp.eq.s32.totalorder %s56, 0
      %p512 = por %p510, %p511
      %p513 = scmp.ne.s32.totalorder %s501, %s502
      %p514 = scmp.eq.s32.totalorder %s57, 1
      %p515 = por %p513, %p514
      %p517 = scmp.ne.s32.totalorder %s502, %s516
      %p518 = scmp.eq.s32.totalorder %s57, 0
      %p519 = por %p517, %p518
      %s521 = sadd.s32 %s520, 1
      %p524 = scmp.eq.s32.totalorder %s51, 1
      %p525 = scmp.ne.s32.totalorder %s520, %s522
      %p526 = scmp.eq.s32.totalorder %s51, 0
      %p527 = por %p525, %p526
      %p528 = scmp.ne.s32.totalorder %s520, %s522
      %p529 = scmp.eq.s32.totalorder %s56, 1
      %p530 = por %p528, %p529
      %p531 = scmp.ne.s32.totalorder %s522, %s523
      %p532 = scmp.eq.s32.totalorder %s56, 0
      %p533 = por %p531, %p532
      %p534 = scmp.ne.s32.totalorder %s522, %s523
      %p535 = scmp.eq.s32.totalorder %s57, 1
      %p536 = por %p534, %p535
      %p538 = scmp.ne.s32.totalorder %s523, %s537
      %p539 = scmp.eq.s32.totalorder %s57, 0
      %p540 = por %p538, %p539
      %s542 = sadd.s32 %s541, 1
      %p545 = scmp.eq.s32.totalorder %s51, 1
      %p546 = scmp.ne.s32.totalorder %s541, %s543
      %p547 = scmp.eq.s32.totalorder %s51, 0
      %p548 = por %p546, %p547
      %p549 = scmp.ne.s32.totalorder %s541, %s543
      %p550 = scmp.eq.s32.totalorder %s56, 1
      %p551 = por %p549, %p550
      %p552 = scmp.ne.s32.totalorder %s543, %s544
      %p553 = scmp.eq.s32.totalorder %s56, 0
      %p554 = por %p552, %p553
      %p555 = scmp.ne.s32.totalorder %s543, %s544
      %p556 = scmp.eq.s32.totalorder %s57, 1
      %p557 = por %p555, %p556
      %p559 = scmp.ne.s32.totalorder %s544, %s558
      %p560 = scmp.eq.s32.totalorder %s57, 0
      %p561 = por %p559, %p560
      %s563 = sadd.s32 %s562, 1
      %p566 = scmp.eq.s32.totalorder %s51, 1
      %p567 = scmp.ne.s32.totalorder %s562, %s564
      %p568 = scmp.eq.s32.totalorder %s51, 0
      %p569 = por %p567, %p568
      %p570 = scmp.ne.s32.totalorder %s562, %s564
      %p571 = scmp.eq.s32.totalorder %s56, 1
      %p572 = por %p570, %p571
      %p573 = scmp.ne.s32.totalorder %s564, %s565
      %p574 = scmp.eq.s32.totalorder %s56, 0
      %p575 = por %p573, %p574
      %p576 = scmp.ne.s32.totalorder %s564, %s565
      %p577 = scmp.eq.s32.totalorder %s57, 1
      %p578 = por %p576, %p577
      %p580 = scmp.ne.s32.totalorder %s565, %s579
      %p581 = scmp.eq.s32.totalorder %s57, 0
      %p582 = por %p580, %p581
      %s584 = sadd.s32 %s583, 1
      %p587 = scmp.eq.s32.totalorder %s51, 1
      %p588 = scmp.ne.s32.totalorder %s583, %s585
      %p589 = scmp.eq.s32.totalorder %s51, 0
      %p590 = por %p588, %p589
      %p591 = scmp.ne.s32.totalorder %s583, %s585
      %p592 = scmp.eq.s32.totalorder %s56, 1
      %p593 = por %p591, %p592
      %p594 = scmp.ne.s32.totalorder %s585, %s586
      %p595 = scmp.eq.s32.totalorder %s56, 0
      %p596 = por %p594, %p595
      %p597 = scmp.ne.s32.totalorder %s585, %s586
      %p598 = scmp.eq.s32.totalorder %s57, 1
      %p599 = por %p597, %p598
      %p601 = scmp.ne.s32.totalorder %s586, %s600
      %p602 = scmp.eq.s32.totalorder %s57, 0
      %p603 = por %p601, %p602
      %s605 = sadd.s32 %s604, 1
      %p608 = scmp.eq.s32.totalorder %s51, 1
      %p609 = scmp.ne.s32.totalorder %s604, %s606
      %p610 = scmp.eq.s32.totalorder %s51, 0
      %p611 = por %p609, %p610
      %p612 = scmp.ne.s32.totalorder %s604, %s606
      %p613 = scmp.eq.s32.totalorder %s56, 1
      %p614 = por %p612, %p613
      %p615 = scmp.ne.s32.totalorder %s606, %s607
      %p616 = scmp.eq.s32.totalorder %s56, 0
      %p617 = por %p615, %p616
      %p618 = scmp.ne.s32.totalorder %s606, %s607
      %p619 = scmp.eq.s32.totalorder %s57, 1
      %p620 = por %p618, %p619
      %p622 = scmp.ne.s32.totalorder %s607, %s621
      %p623 = scmp.eq.s32.totalorder %s57, 0
      %p624 = por %p622, %p623
      %s625 = ssub.s32 %s51, %s58
      %p626 = scmp.eq.s32.totalorder %s625, 0
      %s628 = sadd.s32 %s627, 1
      %s629 = scalar_select %p626, %s627, %s628
      %p632 = pneg %p626
      %p633 = scmp.eq.s32.totalorder %s51, 1
      %p634 = por %p632, %p633
      %p635 = scmp.ne.s32.totalorder %s627, %s630
      %p636 = scmp.eq.s32.totalorder %s51, 0
      %p637 = por %p635, %p636
      %p638 = scmp.ne.s32.totalorder %s627, %s630
      %p639 = scmp.eq.s32.totalorder %s56, 1
      %p640 = por %p638, %p639
      %p641 = scmp.ne.s32.totalorder %s630, %s631
      %p642 = scmp.eq.s32.totalorder %s56, 0
      %p643 = por %p641, %p642
      %p644 = scmp.ne.s32.totalorder %s630, %s631
      %p645 = scmp.eq.s32.totalorder %s57, 1
      %p646 = por %p644, %p645
      %p648 = scmp.ne.s32.totalorder %s631, %s647
      %p649 = scmp.eq.s32.totalorder %s57, 0
      %p650 = por %p648, %p649
      %s651 = ssub.s32 %s51, %s58
      %p652 = scmp.eq.s32.totalorder %s651, 0
      %s654 = sadd.s32 %s653, 1
      %s655 = scalar_select %p652, %s653, %s654
      %p658 = pneg %p652
      %p659 = scmp.eq.s32.totalorder %s51, 1
      %p660 = por %p658, %p659
      %p661 = scmp.ne.s32.totalorder %s653, %s656
      %p662 = scmp.eq.s32.totalorder %s51, 0
      %p663 = por %p661, %p662
      %p664 = scmp.ne.s32.totalorder %s653, %s656
      %p665 = scmp.eq.s32.totalorder %s56, 1
      %p666 = por %p664, %p665
      %p667 = scmp.ne.s32.totalorder %s656, %s657
      %p668 = scmp.eq.s32.totalorder %s56, 0
      %p669 = por %p667, %p668
      %p670 = scmp.ne.s32.totalorder %s656, %s657
      %p671 = scmp.eq.s32.totalorder %s57, 1
      %p672 = por %p670, %p671
      %p674 = scmp.ne.s32.totalorder %s657, %s673
      %p675 = scmp.eq.s32.totalorder %s57, 0
      %p676 = por %p674, %p675
      %s677 = ssub.s32 %s51, %s58
      %p678 = scmp.eq.s32.totalorder %s677, 0
      %s680 = sadd.s32 %s679, 1
      %s681 = scalar_select %p678, %s679, %s680
      %p684 = pneg %p678
      %p685 = scmp.eq.s32.totalorder %s51, 1
      %p686 = por %p684, %p685
      %p687 = scmp.ne.s32.totalorder %s679, %s682
      %p688 = scmp.eq.s32.totalorder %s51, 0
      %p689 = por %p687, %p688
      %p690 = scmp.ne.s32.totalorder %s679, %s682
      %p691 = scmp.eq.s32.totalorder %s56, 1
      %p692 = por %p690, %p691
      %p693 = scmp.ne.s32.totalorder %s682, %s683
      %p694 = scmp.eq.s32.totalorder %s56, 0
      %p695 = por %p693, %p694
      %p696 = scmp.ne.s32.totalorder %s682, %s683
      %p697 = scmp.eq.s32.totalorder %s57, 1
      %p698 = por %p696, %p697
      %p700 = scmp.ne.s32.totalorder %s683, %s699
      %p701 = scmp.eq.s32.totalorder %s57, 0
      %p702 = por %p700, %p701
      %p703 = scmp.le.s32.totalorder 1, %s51
      %p704 = scmp.lt.s32.totalorder %s51, 3
      %p705 = pnand %p703, %p704
      %p706 = pneg %p705
      // Predicated region
      $region9: #{tpu_custom_call.1} parent=5 // pred_check
        _
      $region10: #{tpu_custom_call.1} parent=5 // pred_check_branch
        %708 = sbr.rel (%p705) target = $region12
      $region11: #{tpu_custom_call.1} parent=5 // pred_region
        %s709 = ssub.s32 %s51, 1
        // Predicated region
        $region13: #{tpu_custom_call.1} parent=11 // pred_check
          %p710 = pneg %p176
        $region14: #{tpu_custom_call.1} parent=11 // pred_check_branch
          %712 = sbr.rel (%p710) target = $region16
        $region15: #{tpu_custom_call.1} parent=11 // pred_region
          %s714 = ssub.s32 256, 256
          %715 = vsyncadd [#allocation7], %s714
          %s716 = sshll.u32 [#allocation6], 4
          %s717 = int_to_ptr.vmem [resolvable:$true] %s716
          %722 = dma.hbm_to_vmem [thread:$0]  %s4, 256, %s717, [#allocation7], 64, 64, 4
        $region16: #{tpu_custom_call.1} parent=11 // pred_fallthru
          _
        // Predicated region
        $region17: #{tpu_custom_call.1} parent=11 // pred_check
          %p723 = pneg %p197
        $region18: #{tpu_custom_call.1} parent=11 // pred_check_branch
          %725 = sbr.rel (%p723) target = $region20
        $region19: #{tpu_custom_call.1} parent=11 // pred_region
          %s727 = ssub.s32 16, 16
          %728 = vsyncadd [#allocation7], %s727
          %s730 = sshll.u32 [#allocation8], 4
          %s731 = int_to_ptr.vmem [resolvable:$true] %s730
          %733 = dma.hbm_to_vmem [thread:$0]  %s5, 16, %s731, [#allocation7]
        $region20: #{tpu_custom_call.1} parent=11 // pred_fallthru
          _
        // Predicated region
        $region21: #{tpu_custom_call.1} parent=11 // pred_check
          %p734 = pneg %p218
        $region22: #{tpu_custom_call.1} parent=11 // pred_check_branch
          %736 = sbr.rel (%p734) target = $region24
        $region23: #{tpu_custom_call.1} parent=11 // pred_region
          %s738 = ssub.s32 256, 256
          %739 = vsyncadd [#allocation10], %s738
          %s740 = sshll.u32 [#allocation9], 4
          %s741 = int_to_ptr.vmem [resolvable:$true] %s740
          %746 = dma.hbm_to_vmem [thread:$0]  %s6, 256, %s741, [#allocation10], 64, 64, 4
        $region24: #{tpu_custom_call.1} parent=11 // pred_fallthru
          _
        // Predicated region
        $region25: #{tpu_custom_call.1} parent=11 // pred_check
          %p747 = pneg %p239
        $region26: #{tpu_custom_call.1} parent=11 // pred_check_branch
          %749 = sbr.rel (%p747) target = $region28
        $region27: #{tpu_custom_call.1} parent=11 // pred_region
          %s751 = ssub.s32 16, 16
          %752 = vsyncadd [#allocation10], %s751
          %s754 = sshll.u32 [#allocation11], 4
          %s755 = int_to_ptr.vmem [resolvable:$true] %s754
          %757 = dma.hbm_to_vmem [thread:$0]  %s7, 16, %s755, [#allocation10]
        $region28: #{tpu_custom_call.1} parent=11 // pred_fallthru
          _
        // Predicated region
        $region29: #{tpu_custom_call.1} parent=11 // pred_check
          %p758 = pneg %p260
        $region30: #{tpu_custom_call.1} parent=11 // pred_check_branch
          %760 = sbr.rel (%p758) target = $region32
        $region31: #{tpu_custom_call.1} parent=11 // pred_region
          %s762 = ssub.s32 256, 256
          %763 = vsyncadd [#allocation13], %s762
          %s764 = sshll.u32 [#allocation12], 4
          %s765 = int_to_ptr.vmem [resolvable:$true] %s764
          %770 = dma.hbm_to_vmem [thread:$0]  %s8, 256, %s765, [#allocation13], 64, 64, 4
        $region32: #{tpu_custom_call.1} parent=11 // pred_fallthru
          _
        // Predicated region
        $region33: #{tpu_custom_call.1} parent=11 // pred_check
          %p771 = pneg %p281
        $region34: #{tpu_custom_call.1} parent=11 // pred_check_branch
          %773 = sbr.rel (%p771) target = $region36
        $region35: #{tpu_custom_call.1} parent=11 // pred_region
          %s775 = ssub.s32 16, 16
          %776 = vsyncadd [#allocation13], %s775
          %s778 = sshll.u32 [#allocation14], 4
          %s779 = int_to_ptr.vmem [resolvable:$true] %s778
          %781 = dma.hbm_to_vmem [thread:$0]  %s9, 16, %s779, [#allocation13]
        $region36: #{tpu_custom_call.1} parent=11 // pred_fallthru
          _
        // Predicated region
        $region37: #{tpu_custom_call.1} parent=11 // pred_check
          %p782 = pneg %p302
        $region38: #{tpu_custom_call.1} parent=11 // pred_check_branch
          %784 = sbr.rel (%p782) target = $region40
        $region39: #{tpu_custom_call.1} parent=11 // pred_region
          _
        $region40: #{tpu_custom_call.1} parent=11 // pred_fallthru
          _
        // Predicated region
        $region41: #{tpu_custom_call.1} parent=11 // pred_check
          %p785 = pneg %p323
        $region42: #{tpu_custom_call.1} parent=11 // pred_check_branch
          %787 = sbr.rel (%p785) target = $region44
        $region43: #{tpu_custom_call.1} parent=11 // pred_region
          %s789 = ssub.s32 16, 16
          %790 = vsyncadd [#allocation16], %s789
          %s792 = sshll.u32 [#allocation15], 4
          %s793 = int_to_ptr.vmem [resolvable:$true] %s792
          %795 = dma.hbm_to_vmem [thread:$0]  %s11, 16, %s793, [#allocation16]
        $region44: #{tpu_custom_call.1} parent=11 // pred_fallthru
          _
        // Predicated region
        $region45: #{tpu_custom_call.1} parent=11 // pred_check
          %p796 = pneg %p344
        $region46: #{tpu_custom_call.1} parent=11 // pred_check_branch
          %798 = sbr.rel (%p796) target = $region48
        $region47: #{tpu_custom_call.1} parent=11 // pred_region
          %s800 = ssub.s32 256, 256
          %801 = vsyncadd [#allocation16], %s800
          %s802 = sshll.u32 [#allocation17], 4
          %s803 = int_to_ptr.vmem [resolvable:$true] %s802
          %808 = dma.hbm_to_vmem [thread:$0]  %s12, 256, %s803, [#allocation16], 64, 64, 4
        $region48: #{tpu_custom_call.1} parent=11 // pred_fallthru
          _
        // Predicated region
        $region49: #{tpu_custom_call.1} parent=11 // pred_check
          %p809 = pneg %p365
        $region50: #{tpu_custom_call.1} parent=11 // pred_check_branch
          %811 = sbr.rel (%p809) target = $region52
        $region51: #{tpu_custom_call.1} parent=11 // pred_region
          %s813 = ssub.s32 16, 16
          %814 = vsyncadd [#allocation19], %s813
          %s816 = sshll.u32 [#allocation18], 4
          %s817 = int_to_ptr.vmem [resolvable:$true] %s816
          %819 = dma.hbm_to_vmem [thread:$0]  %s13, 16, %s817, [#allocation19]
        $region52: #{tpu_custom_call.1} parent=11 // pred_fallthru
          _
        // Predicated region
        $region53: #{tpu_custom_call.1} parent=11 // pred_check
          %p820 = pneg %p386
        $region54: #{tpu_custom_call.1} parent=11 // pred_check_branch
          %822 = sbr.rel (%p820) target = $region56
        $region55: #{tpu_custom_call.1} parent=11 // pred_region
          %s824 = ssub.s32 256, 256
          %825 = vsyncadd [#allocation19], %s824
          %s826 = sshll.u32 [#allocation20], 4
          %s827 = int_to_ptr.vmem [resolvable:$true] %s826
          %832 = dma.hbm_to_vmem [thread:$0]  %s14, 256, %s827, [#allocation19], 64, 64, 4
        $region56: #{tpu_custom_call.1} parent=11 // pred_fallthru
          _
        // Predicated region
        $region57: #{tpu_custom_call.1} parent=11 // pred_check
          %p833 = pneg %p407
        $region58: #{tpu_custom_call.1} parent=11 // pred_check_branch
          %835 = sbr.rel (%p833) target = $region60
        $region59: #{tpu_custom_call.1} parent=11 // pred_region
          %s837 = ssub.s32 16, 16
          %838 = vsyncadd [#allocation22], %s837
          %s840 = sshll.u32 [#allocation21], 4
          %s841 = int_to_ptr.vmem [resolvable:$true] %s840
          %843 = dma.hbm_to_vmem [thread:$0]  %s15, 16, %s841, [#allocation22]
        $region60: #{tpu_custom_call.1} parent=11 // pred_fallthru
          _
        // Predicated region
        $region61: #{tpu_custom_call.1} parent=11 // pred_check
          %p844 = pneg %p428
        $region62: #{tpu_custom_call.1} parent=11 // pred_check_branch
          %846 = sbr.rel (%p844) target = $region64
        $region63: #{tpu_custom_call.1} parent=11 // pred_region
          %s848 = ssub.s32 256, 256
          %849 = vsyncadd [#allocation22], %s848
          %s850 = sshll.u32 [#allocation23], 4
          %s851 = int_to_ptr.vmem [resolvable:$true] %s850
          %856 = dma.hbm_to_vmem [thread:$0]  %s16, 256, %s851, [#allocation22], 64, 64, 4
        $region64: #{tpu_custom_call.1} parent=11 // pred_fallthru
          _
        // Predicated region
        $region65: #{tpu_custom_call.1} parent=11 // pred_check
          %p857 = pneg %p449
        $region66: #{tpu_custom_call.1} parent=11 // pred_check_branch
          %859 = sbr.rel (%p857) target = $region68
        $region67: #{tpu_custom_call.1} parent=11 // pred_region
          %s861 = ssub.s32 16, 16
          %862 = vsyncadd [#allocation25], %s861
          %s864 = sshll.u32 [#allocation24], 4
          %s865 = int_to_ptr.vmem [resolvable:$true] %s864
          %867 = dma.hbm_to_vmem [thread:$0]  %s17, 16, %s865, [#allocation25]
        $region68: #{tpu_custom_call.1} parent=11 // pred_fallthru
          _
        // Predicated region
        $region69: #{tpu_custom_call.1} parent=11 // pred_check
          %p868 = pneg %p470
        $region70: #{tpu_custom_call.1} parent=11 // pred_check_branch
          %870 = sbr.rel (%p868) target = $region72
        $region71: #{tpu_custom_call.1} parent=11 // pred_region
          _
        $region72: #{tpu_custom_call.1} parent=11 // pred_fallthru
          _
        // Predicated region
        $region73: #{tpu_custom_call.1} parent=11 // pred_check
          %p871 = pneg %p491
        $region74: #{tpu_custom_call.1} parent=11 // pred_check_branch
          %873 = sbr.rel (%p871) target = $region76
        $region75: #{tpu_custom_call.1} parent=11 // pred_region
          _
        $region76: #{tpu_custom_call.1} parent=11 // pred_fallthru
          _
        // Predicated region
        $region77: #{tpu_custom_call.1} parent=11 // pred_check
          %p874 = pneg %p512
        $region78: #{tpu_custom_call.1} parent=11 // pred_check_branch
          %876 = sbr.rel (%p874) target = $region80
        $region79: #{tpu_custom_call.1} parent=11 // pred_region
          %s878 = ssub.s32 256, 256
          %879 = vsyncadd [#allocation25], %s878
          %s880 = sshll.u32 [#allocation26], 4
          %s881 = int_to_ptr.vmem [resolvable:$true] %s880
          %886 = dma.hbm_to_vmem [thread:$0]  %s20, 256, %s881, [#allocation25], 64, 64, 4
        $region80: #{tpu_custom_call.1} parent=11 // pred_fallthru
          _
        // Predicated region
        $region81: #{tpu_custom_call.1} parent=11 // pred_check
          %p887 = pneg %p533
        $region82: #{tpu_custom_call.1} parent=11 // pred_check_branch
          %889 = sbr.rel (%p887) target = $region84
        $region83: #{tpu_custom_call.1} parent=11 // pred_region
          _
        $region84: #{tpu_custom_call.1} parent=11 // pred_fallthru
          _
        // Predicated region
        $region85: #{tpu_custom_call.1} parent=11 // pred_check
          %p890 = pneg %p554
        $region86: #{tpu_custom_call.1} parent=11 // pred_check_branch
          %892 = sbr.rel (%p890) target = $region88
        $region87: #{tpu_custom_call.1} parent=11 // pred_region
          _
        $region88: #{tpu_custom_call.1} parent=11 // pred_fallthru
          _
        // Predicated region
        $region89: #{tpu_custom_call.1} parent=11 // pred_check
          %p893 = pneg %p575
        $region90: #{tpu_custom_call.1} parent=11 // pred_check_branch
          %895 = sbr.rel (%p893) target = $region92
        $region91: #{tpu_custom_call.1} parent=11 // pred_region
          _
        $region92: #{tpu_custom_call.1} parent=11 // pred_fallthru
          _
        // Predicated region
        $region93: #{tpu_custom_call.1} parent=11 // pred_check
          %p896 = pneg %p596
        $region94: #{tpu_custom_call.1} parent=11 // pred_check_branch
          %898 = sbr.rel (%p896) target = $region96
        $region95: #{tpu_custom_call.1} parent=11 // pred_region
          _
        $region96: #{tpu_custom_call.1} parent=11 // pred_fallthru
          _
        // Predicated region
        $region97: #{tpu_custom_call.1} parent=11 // pred_check
          %p899 = pneg %p617
        $region98: #{tpu_custom_call.1} parent=11 // pred_check_branch
          %901 = sbr.rel (%p899) target = $region100
        $region99: #{tpu_custom_call.1} parent=11 // pred_region
          _
        $region100: #{tpu_custom_call.1} parent=11 // pred_fallthru
          _
      $region12: #{tpu_custom_call.1} parent=5 // pred_fallthru
        _
      %p902 = scmp.lt.s32.totalorder %s51, 2
      // Predicated region
      $region101: #{tpu_custom_call.1} parent=5 // pred_check
        %p903 = pneg %p902
      $region102: #{tpu_custom_call.1} parent=5 // pred_check_branch
        %905 = sbr.rel (%p903) target = $region104
      $region103: #{tpu_custom_call.1} parent=5 // pred_region
        // Predicated region
        $region105: #{tpu_custom_call.1} parent=103 // pred_check
          %p906 = pneg %p71
        $region106: #{tpu_custom_call.1} parent=103 // pred_check_branch
          %908 = sbr.rel (%p906) target = $region108
        $region107: #{tpu_custom_call.1} parent=103 // pred_region
          %p909 = scmp.lt.s32.totalorder %s51, 1
          %s910 = scalar_select %p909, %s51, 1
          %s911 = smul.addr %s910, 8
          %s912 = scalar_lea.vmem %s0, %s911
        $region108: #{tpu_custom_call.1} parent=103 // pred_fallthru
          _
        // Predicated region
        $region109: #{tpu_custom_call.1} parent=103 // pred_check
          %p913 = pneg %p97
        $region110: #{tpu_custom_call.1} parent=103 // pred_check_branch
          %915 = sbr.rel (%p913) target = $region112
        $region111: #{tpu_custom_call.1} parent=103 // pred_region
          %p916 = scmp.lt.s32.totalorder %s51, 1
          %s917 = scalar_select %p916, %s51, 1
          %s918 = smul.addr %s917, 8
          %s919 = scalar_lea.vmem %s1, %s918
        $region112: #{tpu_custom_call.1} parent=103 // pred_fallthru
          _
        // Predicated region
        $region113: #{tpu_custom_call.1} parent=103 // pred_check
          %p920 = pneg %p123
        $region114: #{tpu_custom_call.1} parent=103 // pred_check_branch
          %922 = sbr.rel (%p920) target = $region116
        $region115: #{tpu_custom_call.1} parent=103 // pred_region
          %p923 = scmp.lt.s32.totalorder %s51, 1
          %s924 = scalar_select %p923, %s51, 1
          %s925 = smul.addr %s924, 8
          %s926 = scalar_lea.vmem %s2, %s925
        $region116: #{tpu_custom_call.1} parent=103 // pred_fallthru
          _
        // Predicated region
        $region117: #{tpu_custom_call.1} parent=103 // pred_check
          %p927 = pneg %p149
        $region118: #{tpu_custom_call.1} parent=103 // pred_check_branch
          %929 = sbr.rel (%p927) target = $region120
        $region119: #{tpu_custom_call.1} parent=103 // pred_region
          %s930 = sand.u32 %s139, 1
          %s931 = scalar_lea.sflag [#allocation4], %s930
          %s932 = sand.u32 %s139, 1
          %s933 = smul.addr %s932, 8
          %s934 = scalar_lea.vmem [#allocation3], %s933
          %s936 = ssub.s32 128, 128
          %937 = vsyncadd %s931, %s936
          %s938 = smul.addr %s51, 128
          %s939 = scalar_lea.hbm %s3, %s938
          %s941 = sshll.u32 %s934, 4
          %s942 = int_to_ptr.vmem [resolvable:$true] %s941
          %944 = dma.hbm_to_vmem [thread:$0]  %s939, 128, %s942, %s931
        $region120: #{tpu_custom_call.1} parent=103 // pred_fallthru
          _
      $region104: #{tpu_custom_call.1} parent=5 // pred_fallthru
        _
      %p945 = scmp.le.s32.totalorder 1, %s51
      %p946 = scmp.lt.s32.totalorder %s51, 3
      %p947 = pnand %p945, %p946
      %p948 = pneg %p947
      // Predicated region
      $region121: #{tpu_custom_call.1} parent=5 // pred_check
        _
      $region122: #{tpu_custom_call.1} parent=5 // pred_check_branch
        %950 = sbr.rel (%p947) target = $region124
      $region123: #{tpu_custom_call.1} parent=5 // pred_region
        %s951 = ssub.s32 %s51, 1
        %s952 = sand.u32 %s142, 1
        %s953 = scalar_lea.sflag [#allocation4], %s952
        %s954 = sand.u32 %s142, 1
        %s955 = smul.addr %s954, 8
        %s956 = scalar_lea.vmem [#allocation3], %s955
        // Predicated region
        $region125: #{tpu_custom_call.1} parent=123 // pred_check
          %p957 = pneg %p155
        $region126: #{tpu_custom_call.1} parent=123 // pred_check_branch
          %959 = sbr.rel (%p957) target = $region128
        $region127: #{tpu_custom_call.1} parent=123 // pred_region
          %960 = dma.done %s953, 128
        $region128: #{tpu_custom_call.1} parent=123 // pred_fallthru
          _
        // Predicated region
        $region129: #{tpu_custom_call.1} parent=123 // pred_check
          %p961 = pneg %p176
        $region130: #{tpu_custom_call.1} parent=123 // pred_check_branch
          %963 = sbr.rel (%p961) target = $region132
        $region131: #{tpu_custom_call.1} parent=123 // pred_region
          %964 = dma.done [#allocation7], 256
        $region132: #{tpu_custom_call.1} parent=123 // pred_fallthru
          _
        // Predicated region
        $region133: #{tpu_custom_call.1} parent=123 // pred_check
          %p965 = pneg %p197
        $region134: #{tpu_custom_call.1} parent=123 // pred_check_branch
          %967 = sbr.rel (%p965) target = $region136
        $region135: #{tpu_custom_call.1} parent=123 // pred_region
          %968 = dma.done [#allocation7], 16
        $region136: #{tpu_custom_call.1} parent=123 // pred_fallthru
          _
        // Predicated region
        $region137: #{tpu_custom_call.1} parent=123 // pred_check
          %p969 = pneg %p218
        $region138: #{tpu_custom_call.1} parent=123 // pred_check_branch
          %971 = sbr.rel (%p969) target = $region140
        $region139: #{tpu_custom_call.1} parent=123 // pred_region
          %972 = dma.done [#allocation10], 256
        $region140: #{tpu_custom_call.1} parent=123 // pred_fallthru
          _
        // Predicated region
        $region141: #{tpu_custom_call.1} parent=123 // pred_check
          %p973 = pneg %p239
        $region142: #{tpu_custom_call.1} parent=123 // pred_check_branch
          %975 = sbr.rel (%p973) target = $region144
        $region143: #{tpu_custom_call.1} parent=123 // pred_region
          %976 = dma.done [#allocation10], 16
        $region144: #{tpu_custom_call.1} parent=123 // pred_fallthru
          _
        // Predicated region
        $region145: #{tpu_custom_call.1} parent=123 // pred_check
          %p977 = pneg %p260
        $region146: #{tpu_custom_call.1} parent=123 // pred_check_branch
          %979 = sbr.rel (%p977) target = $region148
        $region147: #{tpu_custom_call.1} parent=123 // pred_region
          %980 = dma.done [#allocation13], 256
        $region148: #{tpu_custom_call.1} parent=123 // pred_fallthru
          _
        // Predicated region
        $region149: #{tpu_custom_call.1} parent=123 // pred_check
          %p981 = pneg %p281
        $region150: #{tpu_custom_call.1} parent=123 // pred_check_branch
          %983 = sbr.rel (%p981) target = $region152
        $region151: #{tpu_custom_call.1} parent=123 // pred_region
          %984 = dma.done [#allocation13], 16
        $region152: #{tpu_custom_call.1} parent=123 // pred_fallthru
          _
        // Predicated region
        $region153: #{tpu_custom_call.1} parent=123 // pred_check
          %p985 = pneg %p323
        $region154: #{tpu_custom_call.1} parent=123 // pred_check_branch
          %987 = sbr.rel (%p985) target = $region156
        $region155: #{tpu_custom_call.1} parent=123 // pred_region
          %988 = dma.done [#allocation16], 16
        $region156: #{tpu_custom_call.1} parent=123 // pred_fallthru
          _
        // Predicated region
        $region157: #{tpu_custom_call.1} parent=123 // pred_check
          %p989 = pneg %p344
        $region158: #{tpu_custom_call.1} parent=123 // pred_check_branch
          %991 = sbr.rel (%p989) target = $region160
        $region159: #{tpu_custom_call.1} parent=123 // pred_region
          %992 = dma.done [#allocation16], 256
        $region160: #{tpu_custom_call.1} parent=123 // pred_fallthru
          _
        // Predicated region
        $region161: #{tpu_custom_call.1} parent=123 // pred_check
          %p993 = pneg %p365
        $region162: #{tpu_custom_call.1} parent=123 // pred_check_branch
          %995 = sbr.rel (%p993) target = $region164
        $region163: #{tpu_custom_call.1} parent=123 // pred_region
          %996 = dma.done [#allocation19], 16
        $region164: #{tpu_custom_call.1} parent=123 // pred_fallthru
          _
        // Predicated region
        $region165: #{tpu_custom_call.1} parent=123 // pred_check
          %p997 = pneg %p386
        $region166: #{tpu_custom_call.1} parent=123 // pred_check_branch
          %999 = sbr.rel (%p997) target = $region168
        $region167: #{tpu_custom_call.1} parent=123 // pred_region
          %1000 = dma.done [#allocation19], 256
        $region168: #{tpu_custom_call.1} parent=123 // pred_fallthru
          _
        // Predicated region
        $region169: #{tpu_custom_call.1} parent=123 // pred_check
          %p1001 = pneg %p407
        $region170: #{tpu_custom_call.1} parent=123 // pred_check_branch
          %1003 = sbr.rel (%p1001) target = $region172
        $region171: #{tpu_custom_call.1} parent=123 // pred_region
          %1004 = dma.done [#allocation22], 16
        $region172: #{tpu_custom_call.1} parent=123 // pred_fallthru
          _
        // Predicated region
        $region173: #{tpu_custom_call.1} parent=123 // pred_check
          %p1005 = pneg %p428
        $region174: #{tpu_custom_call.1} parent=123 // pred_check_branch
          %1007 = sbr.rel (%p1005) target = $region176
        $region175: #{tpu_custom_call.1} parent=123 // pred_region
          %1008 = dma.done [#allocation22], 256
        $region176: #{tpu_custom_call.1} parent=123 // pred_fallthru
          _
        // Predicated region
        $region177: #{tpu_custom_call.1} parent=123 // pred_check
          %p1009 = pneg %p449
        $region178: #{tpu_custom_call.1} parent=123 // pred_check_branch
          %1011 = sbr.rel (%p1009) target = $region180
        $region179: #{tpu_custom_call.1} parent=123 // pred_region
          %1012 = dma.done [#allocation25], 16
        $region180: #{tpu_custom_call.1} parent=123 // pred_fallthru
          _
        // Predicated region
        $region181: #{tpu_custom_call.1} parent=123 // pred_check
          %p1013 = pneg %p512
        $region182: #{tpu_custom_call.1} parent=123 // pred_check_branch
          %1015 = sbr.rel (%p1013) target = $region184
        $region183: #{tpu_custom_call.1} parent=123 // pred_region
          %1016 = dma.done [#allocation25], 256
        $region184: #{tpu_custom_call.1} parent=123 // pred_fallthru
          _
        %p1017 = scmp.lt.s32.totalorder %s56, 1
        %s1018 = scalar_select %p1017, %s56, 1
        %s1019 = smul.addr %s1018, 8
        %s1020 = scalar_lea.vmem %s0, %s1019
        %p1021 = pneg %p77
        %p1022 = pneg %p74
        %p1023 = scmp.lt.s32.totalorder %s56, 1
        %s1024 = scalar_select %p1023, %s56, 1
        %s1025 = smul.addr %s1024, 8
        %s1026 = scalar_lea.vmem %s1, %s1025
        %p1027 = pneg %p103
        %p1028 = pneg %p100
        %p1029 = scmp.lt.s32.totalorder %s56, 1
        %s1030 = scalar_select %p1029, %s56, 1
        %s1031 = smul.addr %s1030, 8
        %s1032 = scalar_lea.vmem %s2, %s1031
        %p1033 = pneg %p129
        %p1034 = pneg %p126
        %s1035 = sand.u32 %s142, 1
        %s1036 = scalar_lea.sflag [#allocation4], %s1035
        %s1037 = sand.u32 %s142, 1
        %s1038 = smul.addr %s1037, 8
        %s1039 = scalar_lea.vmem [#allocation3], %s1038
        %p1040 = pneg %p155
        %p1041 = pneg %p152
        %p1042 = pneg %p176
        %p1043 = pneg %p173
        %p1044 = pneg %p197
        %p1045 = pneg %p194
        %p1046 = pneg %p218
        %p1047 = pneg %p215
        %p1048 = pneg %p239
        %p1049 = pneg %p236
        %p1050 = pneg %p260
        %p1051 = pneg %p257
        %p1052 = pneg %p281
        %p1053 = pneg %p278
        %p1054 = pneg %p302
        %p1055 = pneg %p299
        %p1056 = pneg %p323
        %p1057 = pneg %p320
        %p1058 = pneg %p344
        %p1059 = pneg %p341
        %p1060 = pneg %p365
        %p1061 = pneg %p362
        %p1062 = pneg %p386
        %p1063 = pneg %p383
        %p1064 = pneg %p407
        %p1065 = pneg %p404
        %p1066 = pneg %p428
        %p1067 = pneg %p425
        %p1068 = pneg %p449
        %p1069 = pneg %p446
        %p1070 = pneg %p470
        %p1071 = pneg %p467
        %p1072 = pneg %p491
        %p1073 = pneg %p488
        %p1074 = pneg %p512
        %p1075 = pneg %p509
        %p1076 = pneg %p533
        %p1077 = pneg %p530
        %p1078 = pneg %p554
        %p1079 = pneg %p551
        %p1080 = pneg %p575
        %p1081 = pneg %p572
        %p1082 = pneg %p596
        %p1083 = pneg %p593
        %p1084 = pneg %p617
        %p1085 = pneg %p614
        %p1086 = pneg %p643
        %p1087 = pneg %p640
        %s1088 = sand.u32 %s630, 1
        %s1089 = scalar_lea.sflag [#allocation5], %s1088
        %s1090 = sand.u32 %s630, 1
        %s1091 = smul.addr %s1090, 32
        %s1092 = scalar_lea.vmem [#allocation27], %s1091
        %p1093 = pneg %p669
        %p1094 = pneg %p666
        %s1095 = sand.u32 %s56, 1
        %s1096 = scalar_lea.sflag [#allocation29], %s1095
        %s1097 = sand.u32 %s656, 1
        %s1098 = smul.addr %s1097, 32
        %s1099 = scalar_lea.vmem [#allocation28], %s1098
        %p1100 = pneg %p695
        %p1101 = pneg %p692
        %s1102 = sand.u32 %s56, 1
        %s1103 = scalar_lea.sflag [#allocation29], %s1102
        %s1104 = sand.u32 %s682, 1
        %s1105 = smul.addr %s1104, 8
        %s1106 = scalar_lea.vmem [#allocation30], %s1105
        %p1107 = scmp.lt.s32.totalorder %s56, 1
        %s1108 = scalar_select %p1107, %s56, 1
        %s1109 = smul.addr %s1108, 8
        %s1110 = scalar_lea.vmem %s0, %s1109
        %p1111 = scmp.lt.s32.totalorder %s56, 1
        %s1112 = scalar_select %p1111, %s56, 1
        %s1113 = smul.addr %s1112, 8
        %s1114 = scalar_lea.vmem %s1, %s1113
        %p1115 = scmp.lt.s32.totalorder %s56, 1
        %s1116 = scalar_select %p1115, %s56, 1
        %s1117 = smul.addr %s1116, 8
        %s1118 = scalar_lea.vmem %s2, %s1117
        %v1120 = vld [vmem:[%s1110] sm:$0xff]
        %v1121 = vld [vmem:[%s1114] sm:$0xff]
        %v1122 = vld [vmem:[%s24] sm:$0x1]
        %v1123 = vld [vmem:[%s25] sm:$0x1]
        %v1124 = vld [vmem:[%s1118] sm:$0xff]
        %v1125 = vld [vmem:[#allocation6] sm:$0xf]
        %v1126 = vld [vmem:[#allocation6 + $0x4] sm:$0xf]
        %v1127 = vld [vmem:[#allocation6 + $0x8] sm:$0xf]
        %v1128 = vld [vmem:[#allocation6 + $0xc] sm:$0xf]
        %v1129 = vld [vmem:[#allocation8] sm:$0x1]
        %v1130 = vld [vmem:[#allocation9] sm:$0xf]
        %v1131 = vld [vmem:[#allocation9 + $0x4] sm:$0xf]
        %v1132 = vld [vmem:[#allocation9 + $0x8] sm:$0xf]
        %v1133 = vld [vmem:[#allocation9 + $0xc] sm:$0xf]
        %v1134 = vld [vmem:[#allocation11] sm:$0x1]
        %v1135 = vld [vmem:[#allocation12] sm:$0xf]
        %v1136 = vld [vmem:[#allocation12 + $0x4] sm:$0xf]
        %v1137 = vld [vmem:[#allocation12 + $0x8] sm:$0xf]
        %v1138 = vld [vmem:[#allocation12 + $0xc] sm:$0xf]
        %v1139 = vld [vmem:[#allocation14] sm:$0x1]
        %v1140 = vld [vmem:[%s10] sm:$0xf]
        %v1141 = vld [vmem:[%s10 + $0x4] sm:$0xf]
        %v1142 = vld [vmem:[%s10 + $0x8] sm:$0xf]
        %v1143 = vld [vmem:[%s10 + $0xc] sm:$0xf]
        %v1144 = vld [vmem:[#allocation15] sm:$0x1]
        %v1145 = vpack.c.bf16 %v1120, %v1120
        %v1147 = vlaneseq
        %v1148 = vshrl.u32 %v1147, 7
        %v1149 = vsub.s32 0, %v1148
        %v1150 = vrot.slane %v1129, %v1149
        %v1156 = vunpack.c.l.b16 %v1125
        %v1157 = vunpack.c.l.b16 %v1126
        %v1158 = vunpack.c.l.b16 %v1127
        %v1159 = vunpack.c.l.b16 %v1128
        %v1160 = vpack.c.b16 %v1157, %v1156
        %v1161 = vpack.c.b16 %v1159, %v1158
        %vm1164 = vcmask 261120
        %v1166 = vsel %vm1164, %v1145, 0
        %1168 = vmatprep.subr.bf16.mxu0 0
        %1169 = vmatpush1.bf16.msra.mxu0 0
        %1170 = vmatprep.subr.bf16.mxu0 0
        %1171 = vmatpush1.bf16.msra.mxu0 0
        %1172 = vmatprep.subr.bf16.mxu0 0
        %1173 = vmatpush1.bf16.msra.mxu0 0
        %1174 = vmatprep.subr.bf16.mxu0 0
        %1175 = vmatpush1.bf16.msra.mxu0 0
        %1176 = vmatprep.subr.bf16.mxu0 0
        %1177 = vmatpush1.bf16.msra.mxu0 0
        %1178 = vmatprep.subr.bf16.mxu0 0
        %1179 = vmatpush1.bf16.msra.mxu0 0
        %1180 = vmatprep.subr.bf16.mxu0 0
        %1181 = vmatpush1.bf16.msra.mxu0 %v1161
        %1182 = vmatprep.subr.bf16.mxu0 0
        %1183 = vmatpush1.bf16.msra.mxu0 %v1160
        %1184 = vmatprep.subr.bf16.mxu0 0
        %1185 = vmatpush2.bf16.msra.mxu0 0
        %1186 = vmatprep.subr.bf16.mxu0 0
        %1187 = vmatpush2.bf16.msra.mxu0 0
        %1188 = vmatprep.subr.bf16.mxu0 0
        %1189 = vmatpush2.bf16.msra.mxu0 0
        %1190 = vmatprep.subr.bf16.mxu0 0
        %1191 = vmatpush2.bf16.msra.mxu0 0
        %1192 = vmatprep.subr.bf16.mxu0 0
        %1193 = vmatpush2.bf16.msra.mxu0 0
        %1194 = vmatprep.subr.bf16.mxu0 0
        %1195 = vmatpush2.bf16.msra.mxu0 0
        %1196 = vmatprep.subr.bf16.mxu0 0
        %1197 = vmatpush2.bf16.msra.mxu0 0
        %1198 = vmatprep.subr.bf16.mxu0 0
        %1199 = vmatpush2.bf16.msra.mxu0 0
        %1200 = vmatprep.mubr.bf16.mxu0 0
        %1201 = vmatmul.mubr.bf16.gmra.mxu0 %v1166
        %v1202 = vpop.f32.mrf.mxu0
        %v1203 = vadd.f32 %v1150, %v1202
        %v1204 = vpop.f32.mrf.mxu0
        %v1205 = vpop.f32.mrf.mxu0
        %v1206 = vpop.f32.mrf.mxu0
        %1207 = vdwg.mxu0
        %v1209 = vlaneseq
        %v1210 = vshrl.u32 %v1209, 7
        %v1211 = vsub.s32 0, %v1210
        %v1212 = vrot.slane %v1134, %v1211
        %v1218 = vunpack.c.l.b16 %v1130
        %v1219 = vunpack.c.l.b16 %v1131
        %v1220 = vunpack.c.l.b16 %v1132
        %v1221 = vunpack.c.l.b16 %v1133
        %v1222 = vpack.c.b16 %v1219, %v1218
        %v1223 = vpack.c.b16 %v1221, %v1220
        %1226 = vmatprep.subr.bf16.mxu0 0
        %1227 = vmatpush1.bf16.msra.mxu0 0
        %1228 = vmatprep.subr.bf16.mxu0 0
        %1229 = vmatpush1.bf16.msra.mxu0 0
        %1230 = vmatprep.subr.bf16.mxu0 0
        %1231 = vmatpush1.bf16.msra.mxu0 0
        %1232 = vmatprep.subr.bf16.mxu0 0
        %1233 = vmatpush1.bf16.msra.mxu0 0
        %1234 = vmatprep.subr.bf16.mxu0 0
        %1235 = vmatpush1.bf16.msra.mxu0 0
        %1236 = vmatprep.subr.bf16.mxu0 0
        %1237 = vmatpush1.bf16.msra.mxu0 0
        %1238 = vmatprep.subr.bf16.mxu0 0
        %1239 = vmatpush1.bf16.msra.mxu0 %v1223
        %1240 = vmatprep.subr.bf16.mxu0 0
        %1241 = vmatpush1.bf16.msra.mxu0 %v1222
        %1242 = vmatprep.subr.bf16.mxu0 0
        %1243 = vmatpush2.bf16.msra.mxu0 0
        %1244 = vmatprep.subr.bf16.mxu0 0
        %1245 = vmatpush2.bf16.msra.mxu0 0
        %1246 = vmatprep.subr.bf16.mxu0 0
        %1247 = vmatpush2.bf16.msra.mxu0 0
        %1248 = vmatprep.subr.bf16.mxu0 0
        %1249 = vmatpush2.bf16.msra.mxu0 0
        %1250 = vmatprep.subr.bf16.mxu0 0
        %1251 = vmatpush2.bf16.msra.mxu0 0
        %1252 = vmatprep.subr.bf16.mxu0 0
        %1253 = vmatpush2.bf16.msra.mxu0 0
        %1254 = vmatprep.subr.bf16.mxu0 0
        %1255 = vmatpush2.bf16.msra.mxu0 0
        %1256 = vmatprep.subr.bf16.mxu0 0
        %1257 = vmatpush2.bf16.msra.mxu0 0
        %1258 = vmatprep.mubr.bf16.mxu0 0
        %1259 = vmatmul.mubr.bf16.gmra.mxu0 %v1166
        %v1260 = vpop.f32.mrf.mxu0
        %v1261 = vadd.f32 %v1212, %v1260
        %v1262 = vpop.f32.mrf.mxu0
        %v1263 = vpop.f32.mrf.mxu0
        %v1264 = vpop.f32.mrf.mxu0
        %1265 = vdwg.mxu0
        %v1267 = vlaneseq
        %v1268 = vshrl.u32 %v1267, 7
        %v1269 = vsub.s32 0, %v1268
        %v1270 = vrot.slane %v1139, %v1269
        %v1276 = vunpack.c.l.b16 %v1135
        %v1277 = vunpack.c.l.b16 %v1136
        %v1278 = vunpack.c.l.b16 %v1137
        %v1279 = vunpack.c.l.b16 %v1138
        %v1280 = vpack.c.b16 %v1277, %v1276
        %v1281 = vpack.c.b16 %v1279, %v1278
        %1284 = vmatprep.subr.bf16.mxu0 0
        %1285 = vmatpush1.bf16.msra.mxu0 0
        %1286 = vmatprep.subr.bf16.mxu0 0
        %1287 = vmatpush1.bf16.msra.mxu0 0
        %1288 = vmatprep.subr.bf16.mxu0 0
        %1289 = vmatpush1.bf16.msra.mxu0 0
        %1290 = vmatprep.subr.bf16.mxu0 0
        %1291 = vmatpush1.bf16.msra.mxu0 0
        %1292 = vmatprep.subr.bf16.mxu0 0
        %1293 = vmatpush1.bf16.msra.mxu0 0
        %1294 = vmatprep.subr.bf16.mxu0 0
        %1295 = vmatpush1.bf16.msra.mxu0 0
        %1296 = vmatprep.subr.bf16.mxu0 0
        %1297 = vmatpush1.bf16.msra.mxu0 %v1281
        %1298 = vmatprep.subr.bf16.mxu0 0
        %1299 = vmatpush1.bf16.msra.mxu0 %v1280
        %1300 = vmatprep.subr.bf16.mxu0 0
        %1301 = vmatpush2.bf16.msra.mxu0 0
        %1302 = vmatprep.subr.bf16.mxu0 0
        %1303 = vmatpush2.bf16.msra.mxu0 0
        %1304 = vmatprep.subr.bf16.mxu0 0
        %1305 = vmatpush2.bf16.msra.mxu0 0
        %1306 = vmatprep.subr.bf16.mxu0 0
        %1307 = vmatpush2.bf16.msra.mxu0 0
        %1308 = vmatprep.subr.bf16.mxu0 0
        %1309 = vmatpush2.bf16.msra.mxu0 0
        %1310 = vmatprep.subr.bf16.mxu0 0
        %1311 = vmatpush2.bf16.msra.mxu0 0
        %1312 = vmatprep.subr.bf16.mxu0 0
        %1313 = vmatpush2.bf16.msra.mxu0 0
        %1314 = vmatprep.subr.bf16.mxu0 0
        %1315 = vmatpush2.bf16.msra.mxu0 0
        %1316 = vmatprep.mubr.bf16.mxu0 0
        %1317 = vmatmul.mubr.bf16.gmra.mxu0 %v1166
        %v1318 = vpop.f32.mrf.mxu0
        %v1319 = vadd.f32 %v1270, %v1318
        %v1320 = vpop.f32.mrf.mxu0
        %v1321 = vpop.f32.mrf.mxu0
        %v1322 = vpop.f32.mrf.mxu0
        %1323 = vdwg.mxu0
        %v1324 = vmul.f32 %v1203, 0.35355338
        %vm1325 = vcmp.ne.f32.partialorder %v1124, 0.0
        %v1326 = vsel %vm1325, 0.0, -1e+30
        %v1327 = vpack.c.bf16 %v1324, %v1324
        %v1328 = vpack.c.bf16 %v1261, %v1261
        %v1329 = vpack.c.bf16 %v1319, %v1319
        %vm1330 = vcmask 64512
        %v1332 = vsel %vm1330, %v1327, 0
        %v1335 = vsel %vm1330, %v1328, 0
        %1337 = vmatprep.subr.bf16.mxu0 0
        %1338 = vmatpush1.bf16.xpose.msra.mxu0 0
        %1339 = vmatprep.subr.bf16.mxu0 0
        %1340 = vmatpush1.bf16.xpose.msra.mxu0 0
        %1341 = vmatprep.subr.bf16.mxu0 0
        %1342 = vmatpush1.bf16.xpose.msra.mxu0 0
        %1343 = vmatprep.subr.bf16.mxu0 0
        %1344 = vmatpush1.bf16.xpose.msra.mxu0 0
        %1345 = vmatprep.subr.bf16.mxu0 0
        %1346 = vmatpush1.bf16.xpose.msra.mxu0 0
        %1347 = vmatprep.subr.bf16.mxu0 0
        %1348 = vmatpush1.bf16.xpose.msra.mxu0 0
        %1349 = vmatprep.subr.bf16.mxu0 0
        %1350 = vmatpush1.bf16.xpose.msra.mxu0 0
        %1351 = vmatprep.subr.bf16.mxu0 0
        %1352 = vmatpush1.bf16.xpose.msra.mxu0 %v1335
        %1353 = vmatprep.subr.bf16.mxu0 0
        %1354 = vmatpush2.bf16.xpose.msra.mxu0 0
        %1355 = vmatprep.subr.bf16.mxu0 0
        %1356 = vmatpush2.bf16.xpose.msra.mxu0 0
        %1357 = vmatprep.subr.bf16.mxu0 0
        %1358 = vmatpush2.bf16.xpose.msra.mxu0 0
        %1359 = vmatprep.subr.bf16.mxu0 0
        %1360 = vmatpush2.bf16.xpose.msra.mxu0 0
        %1361 = vmatprep.subr.bf16.mxu0 0
        %1362 = vmatpush2.bf16.xpose.msra.mxu0 0
        %1363 = vmatprep.subr.bf16.mxu0 0
        %1364 = vmatpush2.bf16.xpose.msra.mxu0 0
        %1365 = vmatprep.subr.bf16.mxu0 0
        %1366 = vmatpush2.bf16.xpose.msra.mxu0 0
        %1367 = vmatprep.subr.bf16.mxu0 0
        %1368 = vmatpush2.bf16.xpose.msra.mxu0 0
        %1369 = vmatprep.mubr.bf16.mxu0 0
        %1370 = vmatmul.mubr.bf16.gmra.mxu0 %v1332
        %v1371 = vpop.f32.mrf.mxu0
        %v1372 = vadd.f32 %v1326, %v1371
        %v1373 = vpop.f32.mrf.mxu0
        %v1374 = vpop.f32.mrf.mxu0
        %v1375 = vpop.f32.mrf.mxu0
        %1376 = vdwg.mxu0
        %v1377 = vsel %vm1330, %v1372, -inf
        %1378 = vmax.xlane.f32.xlu0 %v1377
        %v1379 = vpop.xlane.xlu0 %1378
        %v1380 = vsub.f32 %v1372, %v1379
        %v1381 = vmul.f32 %v1380, 1.442695
        %v1382 = vpow.pop %v1381
        %v1383 = vsel %vm1330, %v1382, 0.0
        %1384 = vadd.xlane.f32.xlu0 %v1383
        %v1385 = vpop.xlane.xlu0 %1384
        %v1386 = vrcp.pop %v1385
        %v1387 = vmul.f32 %v1382, %v1386
        %1388 = vst.msk [vmem:[%s1092] sm:$0xff] %vm1330, %v1387
        %v1389 = vpack.c.bf16 %v1387, %v1387
        %v1391 = vsel %vm1330, %v1389, 0
        %vm1393 = vcmask 1043456
        %v1395 = vsel %vm1393, %v1329, 0
        %1397 = vmatprep.subr.bf16.mxu0 0
        %1398 = vmatpush1.bf16.msra.mxu0 0
        %1399 = vmatprep.subr.bf16.mxu0 0
        %1400 = vmatpush1.bf16.msra.mxu0 0
        %1401 = vmatprep.subr.bf16.mxu0 0
        %1402 = vmatpush1.bf16.msra.mxu0 0
        %1403 = vmatprep.subr.bf16.mxu0 0
        %1404 = vmatpush1.bf16.msra.mxu0 0
        %1405 = vmatprep.subr.bf16.mxu0 0
        %1406 = vmatpush1.bf16.msra.mxu0 0
        %1407 = vmatprep.subr.bf16.mxu0 0
        %1408 = vmatpush1.bf16.msra.mxu0 0
        %1409 = vmatprep.subr.bf16.mxu0 0
        %1410 = vmatpush1.bf16.msra.mxu0 0
        %1411 = vmatprep.subr.bf16.mxu0 0
        %1412 = vmatpush1.bf16.msra.mxu0 %v1395
        %1413 = vmatprep.subr.bf16.mxu0 0
        %1414 = vmatpush2.bf16.msra.mxu0 0
        %1415 = vmatprep.subr.bf16.mxu0 0
        %1416 = vmatpush2.bf16.msra.mxu0 0
        %1417 = vmatprep.subr.bf16.mxu0 0
        %1418 = vmatpush2.bf16.msra.mxu0 0
        %1419 = vmatprep.subr.bf16.mxu0 0
        %1420 = vmatpush2.bf16.msra.mxu0 0
        %1421 = vmatprep.subr.bf16.mxu0 0
        %1422 = vmatpush2.bf16.msra.mxu0 0
        %1423 = vmatprep.subr.bf16.mxu0 0
        %1424 = vmatpush2.bf16.msra.mxu0 0
        %1425 = vmatprep.subr.bf16.mxu0 0
        %1426 = vmatpush2.bf16.msra.mxu0 0
        %1427 = vmatprep.subr.bf16.mxu0 0
        %1428 = vmatpush2.bf16.msra.mxu0 0
        %1429 = vmatprep.mubr.bf16.mxu0 0
        %1430 = vmatmul.mubr.bf16.gmra.mxu0 %v1391
        %v1431 = vpop.f32.mrf.mxu0
        %v1432 = vadd.f32 0.0, %v1431
        %v1433 = vpop.f32.mrf.mxu0
        %v1434 = vpop.f32.mrf.mxu0
        %v1435 = vpop.f32.mrf.mxu0
        %1436 = vdwg.mxu0
        %1437 = vst.msk [vmem:[#allocation2] sm:$0xff] %vm1330, %v1432
        %1439 = vrot.lane.b32.xlu0 %v1327, 120
        %v1440 = vpop.permute.xlu0 %1439
        %1442 = vrot.lane.b32.xlu0 %v1328, 120
        %v1443 = vpop.permute.xlu0 %1442
        %v1445 = vsel %vm1330, %v1440, 0
        %v1448 = vsel %vm1330, %v1443, 0
        %1450 = vmatprep.subr.bf16.mxu0 0
        %1451 = vmatpush1.bf16.xpose.msra.mxu0 0
        %1452 = vmatprep.subr.bf16.mxu0 0
        %1453 = vmatpush1.bf16.xpose.msra.mxu0 0
        %1454 = vmatprep.subr.bf16.mxu0 0
        %1455 = vmatpush1.bf16.xpose.msra.mxu0 0
        %1456 = vmatprep.subr.bf16.mxu0 0
        %1457 = vmatpush1.bf16.xpose.msra.mxu0 0
        %1458 = vmatprep.subr.bf16.mxu0 0
        %1459 = vmatpush1.bf16.xpose.msra.mxu0 0
        %1460 = vmatprep.subr.bf16.mxu0 0
        %1461 = vmatpush1.bf16.xpose.msra.mxu0 0
        %1462 = vmatprep.subr.bf16.mxu0 0
        %1463 = vmatpush1.bf16.xpose.msra.mxu0 0
        %1464 = vmatprep.subr.bf16.mxu0 0
        %1465 = vmatpush1.bf16.xpose.msra.mxu0 %v1448
        %1466 = vmatprep.subr.bf16.mxu0 0
        %1467 = vmatpush2.bf16.xpose.msra.mxu0 0
        %1468 = vmatprep.subr.bf16.mxu0 0
        %1469 = vmatpush2.bf16.xpose.msra.mxu0 0
        %1470 = vmatprep.subr.bf16.mxu0 0
        %1471 = vmatpush2.bf16.xpose.msra.mxu0 0
        %1472 = vmatprep.subr.bf16.mxu0 0
        %1473 = vmatpush2.bf16.xpose.msra.mxu0 0
        %1474 = vmatprep.subr.bf16.mxu0 0
        %1475 = vmatpush2.bf16.xpose.msra.mxu0 0
        %1476 = vmatprep.subr.bf16.mxu0 0
        %1477 = vmatpush2.bf16.xpose.msra.mxu0 0
        %1478 = vmatprep.subr.bf16.mxu0 0
        %1479 = vmatpush2.bf16.xpose.msra.mxu0 0
        %1480 = vmatprep.subr.bf16.mxu0 0
        %1481 = vmatpush2.bf16.xpose.msra.mxu0 0
        %1482 = vmatprep.mubr.bf16.mxu0 0
        %1483 = vmatmul.mubr.bf16.gmra.mxu0 %v1445
        %v1484 = vpop.f32.mrf.mxu0
        %v1485 = vadd.f32 %v1326, %v1484
        %v1486 = vpop.f32.mrf.mxu0
        %v1487 = vpop.f32.mrf.mxu0
        %v1488 = vpop.f32.mrf.mxu0
        %1489 = vdwg.mxu0
        %v1490 = vsel %vm1330, %v1485, -inf
        %1491 = vmax.xlane.f32.xlu0 %v1490
        %v1492 = vpop.xlane.xlu0 %1491
        %v1493 = vsub.f32 %v1485, %v1492
        %v1494 = vmul.f32 %v1493, 1.442695
        %v1495 = vpow.pop %v1494
        %v1496 = vsel %vm1330, %v1495, 0.0
        %1497 = vadd.xlane.f32.xlu0 %v1496
        %v1498 = vpop.xlane.xlu0 %1497
        %v1499 = vrcp.pop %v1498
        %v1500 = vmul.f32 %v1495, %v1499
        %s1501 = scalar_lea.vmem %s1092, 8 [#allocation27]
        %1502 = vst.msk [vmem:[%s1501] sm:$0xff] %vm1330, %v1500
        %v1503 = vpack.c.bf16 %v1500, %v1500
        %1505 = vrot.lane.b32.xlu0 %v1329, 120
        %v1506 = vpop.permute.xlu0 %1505
        %v1508 = vsel %vm1330, %v1503, 0
        %v1511 = vsel %vm1393, %v1506, 0
        %1513 = vmatprep.subr.bf16.mxu0 0
        %1514 = vmatpush1.bf16.msra.mxu0 0
        %1515 = vmatprep.subr.bf16.mxu0 0
        %1516 = vmatpush1.bf16.msra.mxu0 0
        %1517 = vmatprep.subr.bf16.mxu0 0
        %1518 = vmatpush1.bf16.msra.mxu0 0
        %1519 = vmatprep.subr.bf16.mxu0 0
        %1520 = vmatpush1.bf16.msra.mxu0 0
        %1521 = vmatprep.subr.bf16.mxu0 0
        %1522 = vmatpush1.bf16.msra.mxu0 0
        %1523 = vmatprep.subr.bf16.mxu0 0
        %1524 = vmatpush1.bf16.msra.mxu0 0
        %1525 = vmatprep.subr.bf16.mxu0 0
        %1526 = vmatpush1.bf16.msra.mxu0 0
        %1527 = vmatprep.subr.bf16.mxu0 0
        %1528 = vmatpush1.bf16.msra.mxu0 %v1511
        %1529 = vmatprep.subr.bf16.mxu0 0
        %1530 = vmatpush2.bf16.msra.mxu0 0
        %1531 = vmatprep.subr.bf16.mxu0 0
        %1532 = vmatpush2.bf16.msra.mxu0 0
        %1533 = vmatprep.subr.bf16.mxu0 0
        %1534 = vmatpush2.bf16.msra.mxu0 0
        %1535 = vmatprep.subr.bf16.mxu0 0
        %1536 = vmatpush2.bf16.msra.mxu0 0
        %1537 = vmatprep.subr.bf16.mxu0 0
        %1538 = vmatpush2.bf16.msra.mxu0 0
        %1539 = vmatprep.subr.bf16.mxu0 0
        %1540 = vmatpush2.bf16.msra.mxu0 0
        %1541 = vmatprep.subr.bf16.mxu0 0
        %1542 = vmatpush2.bf16.msra.mxu0 0
        %1543 = vmatprep.subr.bf16.mxu0 0
        %1544 = vmatpush2.bf16.msra.mxu0 0
        %1545 = vmatprep.mubr.bf16.mxu0 0
        %1546 = vmatmul.mubr.bf16.gmra.mxu0 %v1508
        %v1547 = vpop.f32.mrf.mxu0
        %v1548 = vadd.f32 0.0, %v1547
        %v1549 = vpop.f32.mrf.mxu0
        %v1550 = vpop.f32.mrf.mxu0
        %v1551 = vpop.f32.mrf.mxu0
        %1552 = vdwg.mxu0
        %1554 = vrot.lane.b32.xlu0 %v1548, 8
        %v1555 = vpop.permute.xlu0 %1554
        %vm1557 = vcmask 130112
        %1558 = vst.msk [vmem:[#allocation2] sm:$0xff] %vm1557, %v1555
        %1559 = vrot.lane.b32.xlu0 %v1327, 112
        %v1560 = vpop.permute.xlu0 %1559
        %1561 = vrot.lane.b32.xlu0 %v1328, 112
        %v1562 = vpop.permute.xlu0 %1561
        %v1564 = vsel %vm1330, %v1560, 0
        %v1567 = vsel %vm1330, %v1562, 0
        %1569 = vmatprep.subr.bf16.mxu0 0
        %1570 = vmatpush1.bf16.xpose.msra.mxu0 0
        %1571 = vmatprep.subr.bf16.mxu0 0
        %1572 = vmatpush1.bf16.xpose.msra.mxu0 0
        %1573 = vmatprep.subr.bf16.mxu0 0
        %1574 = vmatpush1.bf16.xpose.msra.mxu0 0
        %1575 = vmatprep.subr.bf16.mxu0 0
        %1576 = vmatpush1.bf16.xpose.msra.mxu0 0
        %1577 = vmatprep.subr.bf16.mxu0 0
        %1578 = vmatpush1.bf16.xpose.msra.mxu0 0
        %1579 = vmatprep.subr.bf16.mxu0 0
        %1580 = vmatpush1.bf16.xpose.msra.mxu0 0
        %1581 = vmatprep.subr.bf16.mxu0 0
        %1582 = vmatpush1.bf16.xpose.msra.mxu0 0
        %1583 = vmatprep.subr.bf16.mxu0 0
        %1584 = vmatpush1.bf16.xpose.msra.mxu0 %v1567
        %1585 = vmatprep.subr.bf16.mxu0 0
        %1586 = vmatpush2.bf16.xpose.msra.mxu0 0
        %1587 = vmatprep.subr.bf16.mxu0 0
        %1588 = vmatpush2.bf16.xpose.msra.mxu0 0
        %1589 = vmatprep.subr.bf16.mxu0 0
        %1590 = vmatpush2.bf16.xpose.msra.mxu0 0
        %1591 = vmatprep.subr.bf16.mxu0 0
        %1592 = vmatpush2.bf16.xpose.msra.mxu0 0
        %1593 = vmatprep.subr.bf16.mxu0 0
        %1594 = vmatpush2.bf16.xpose.msra.mxu0 0
        %1595 = vmatprep.subr.bf16.mxu0 0
        %1596 = vmatpush2.bf16.xpose.msra.mxu0 0
        %1597 = vmatprep.subr.bf16.mxu0 0
        %1598 = vmatpush2.bf16.xpose.msra.mxu0 0
        %1599 = vmatprep.subr.bf16.mxu0 0
        %1600 = vmatpush2.bf16.xpose.msra.mxu0 0
        %1601 = vmatprep.mubr.bf16.mxu0 0
        %1602 = vmatmul.mubr.bf16.gmra.mxu0 %v1564
        %v1603 = vpop.f32.mrf.mxu0
        %v1604 = vadd.f32 %v1326, %v1603
        %v1605 = vpop.f32.mrf.mxu0
        %v1606 = vpop.f32.mrf.mxu0
        %v1607 = vpop.f32.mrf.mxu0
        %1608 = vdwg.mxu0
        %v1609 = vsel %vm1330, %v1604, -inf
        %1610 = vmax.xlane.f32.xlu0 %v1609
        %v1611 = vpop.xlane.xlu0 %1610
        %v1612 = vsub.f32 %v1604, %v1611
        %v1613 = vmul.f32 %v1612, 1.442695
        %v1614 = vpow.pop %v1613
        %v1615 = vsel %vm1330, %v1614, 0.0
        %1616 = vadd.xlane.f32.xlu0 %v1615
        %v1617 = vpop.xlane.xlu0 %1616
        %v1618 = vrcp.pop %v1617
        %v1619 = vmul.f32 %v1614, %v1618
        %s1620 = scalar_lea.vmem %s1092, 16 [#allocation27]
        %1621 = vst.msk [vmem:[%s1620] sm:$0xff] %vm1330, %v1619
        %v1622 = vpack.c.bf16 %v1619, %v1619
        %1623 = vrot.lane.b32.xlu0 %v1329, 112
        %v1624 = vpop.permute.xlu0 %1623
        %v1626 = vsel %vm1330, %v1622, 0
        %v1629 = vsel %vm1393, %v1624, 0
        %1631 = vmatprep.subr.bf16.mxu0 0
        %1632 = vmatpush1.bf16.msra.mxu0 0
        %1633 = vmatprep.subr.bf16.mxu0 0
        %1634 = vmatpush1.bf16.msra.mxu0 0
        %1635 = vmatprep.subr.bf16.mxu0 0
        %1636 = vmatpush1.bf16.msra.mxu0 0
        %1637 = vmatprep.subr.bf16.mxu0 0
        %1638 = vmatpush1.bf16.msra.mxu0 0
        %1639 = vmatprep.subr.bf16.mxu0 0
        %1640 = vmatpush1.bf16.msra.mxu0 0
        %1641 = vmatprep.subr.bf16.mxu0 0
        %1642 = vmatpush1.bf16.msra.mxu0 0
        %1643 = vmatprep.subr.bf16.mxu0 0
        %1644 = vmatpush1.bf16.msra.mxu0 0
        %1645 = vmatprep.subr.bf16.mxu0 0
        %1646 = vmatpush1.bf16.msra.mxu0 %v1629
        %1647 = vmatprep.subr.bf16.mxu0 0
        %1648 = vmatpush2.bf16.msra.mxu0 0
        %1649 = vmatprep.subr.bf16.mxu0 0
        %1650 = vmatpush2.bf16.msra.mxu0 0
        %1651 = vmatprep.subr.bf16.mxu0 0
        %1652 = vmatpush2.bf16.msra.mxu0 0
        %1653 = vmatprep.subr.bf16.mxu0 0
        %1654 = vmatpush2.bf16.msra.mxu0 0
        %1655 = vmatprep.subr.bf16.mxu0 0
        %1656 = vmatpush2.bf16.msra.mxu0 0
        %1657 = vmatprep.subr.bf16.mxu0 0
        %1658 = vmatpush2.bf16.msra.mxu0 0
        %1659 = vmatprep.subr.bf16.mxu0 0
        %1660 = vmatpush2.bf16.msra.mxu0 0
        %1661 = vmatprep.subr.bf16.mxu0 0
        %1662 = vmatpush2.bf16.msra.mxu0 0
        %1663 = vmatprep.mubr.bf16.mxu0 0
        %1664 = vmatmul.mubr.bf16.gmra.mxu0 %v1626
        %v1665 = vpop.f32.mrf.mxu0
        %v1666 = vadd.f32 0.0, %v1665
        %v1667 = vpop.f32.mrf.mxu0
        %v1668 = vpop.f32.mrf.mxu0
        %v1669 = vpop.f32.mrf.mxu0
        %1670 = vdwg.mxu0
        %1672 = vrot.lane.b32.xlu0 %v1666, 16
        %v1673 = vpop.permute.xlu0 %1672
        %vm1675 = vcmask 195712
        %1676 = vst.msk [vmem:[#allocation2] sm:$0xff] %vm1675, %v1673
        %1677 = vrot.lane.b32.xlu0 %v1327, 104
        %v1678 = vpop.permute.xlu0 %1677
        %1679 = vrot.lane.b32.xlu0 %v1328, 104
        %v1680 = vpop.permute.xlu0 %1679
        %v1682 = vsel %vm1330, %v1678, 0
        %v1685 = vsel %vm1330, %v1680, 0
        %1687 = vmatprep.subr.bf16.mxu0 0
        %1688 = vmatpush1.bf16.xpose.msra.mxu0 0
        %1689 = vmatprep.subr.bf16.mxu0 0
        %1690 = vmatpush1.bf16.xpose.msra.mxu0 0
        %1691 = vmatprep.subr.bf16.mxu0 0
        %1692 = vmatpush1.bf16.xpose.msra.mxu0 0
        %1693 = vmatprep.subr.bf16.mxu0 0
        %1694 = vmatpush1.bf16.xpose.msra.mxu0 0
        %1695 = vmatprep.subr.bf16.mxu0 0
        %1696 = vmatpush1.bf16.xpose.msra.mxu0 0
        %1697 = vmatprep.subr.bf16.mxu0 0
        %1698 = vmatpush1.bf16.xpose.msra.mxu0 0
        %1699 = vmatprep.subr.bf16.mxu0 0
        %1700 = vmatpush1.bf16.xpose.msra.mxu0 0
        %1701 = vmatprep.subr.bf16.mxu0 0
        %1702 = vmatpush1.bf16.xpose.msra.mxu0 %v1685
        %1703 = vmatprep.subr.bf16.mxu0 0
        %1704 = vmatpush2.bf16.xpose.msra.mxu0 0
        %1705 = vmatprep.subr.bf16.mxu0 0
        %1706 = vmatpush2.bf16.xpose.msra.mxu0 0
        %1707 = vmatprep.subr.bf16.mxu0 0
        %1708 = vmatpush2.bf16.xpose.msra.mxu0 0
        %1709 = vmatprep.subr.bf16.mxu0 0
        %1710 = vmatpush2.bf16.xpose.msra.mxu0 0
        %1711 = vmatprep.subr.bf16.mxu0 0
        %1712 = vmatpush2.bf16.xpose.msra.mxu0 0
        %1713 = vmatprep.subr.bf16.mxu0 0
        %1714 = vmatpush2.bf16.xpose.msra.mxu0 0
        %1715 = vmatprep.subr.bf16.mxu0 0
        %1716 = vmatpush2.bf16.xpose.msra.mxu0 0
        %1717 = vmatprep.subr.bf16.mxu0 0
        %1718 = vmatpush2.bf16.xpose.msra.mxu0 0
        %1719 = vmatprep.mubr.bf16.mxu0 0
        %1720 = vmatmul.mubr.bf16.gmra.mxu0 %v1682
        %v1721 = vpop.f32.mrf.mxu0
        %v1722 = vadd.f32 %v1326, %v1721
        %v1723 = vpop.f32.mrf.mxu0
        %v1724 = vpop.f32.mrf.mxu0
        %v1725 = vpop.f32.mrf.mxu0
        %1726 = vdwg.mxu0
        %v1727 = vsel %vm1330, %v1722, -inf
        %1728 = vmax.xlane.f32.xlu0 %v1727
        %v1729 = vpop.xlane.xlu0 %1728
        %v1730 = vsub.f32 %v1722, %v1729
        %v1731 = vmul.f32 %v1730, 1.442695
        %v1732 = vpow.pop %v1731
        %v1733 = vsel %vm1330, %v1732, 0.0
        %1734 = vadd.xlane.f32.xlu0 %v1733
        %v1735 = vpop.xlane.xlu0 %1734
        %v1736 = vrcp.pop %v1735
        %v1737 = vmul.f32 %v1732, %v1736
        %s1738 = scalar_lea.vmem %s1092, 24 [#allocation27]
        %1739 = vst.msk [vmem:[%s1738] sm:$0xff] %vm1330, %v1737
        %v1740 = vpack.c.bf16 %v1737, %v1737
        %1741 = vrot.lane.b32.xlu0 %v1329, 104
        %v1742 = vpop.permute.xlu0 %1741
        %v1744 = vsel %vm1330, %v1740, 0
        %v1747 = vsel %vm1393, %v1742, 0
        %1749 = vmatprep.subr.bf16.mxu0 0
        %1750 = vmatpush1.bf16.msra.mxu0 0
        %1751 = vmatprep.subr.bf16.mxu0 0
        %1752 = vmatpush1.bf16.msra.mxu0 0
        %1753 = vmatprep.subr.bf16.mxu0 0
        %1754 = vmatpush1.bf16.msra.mxu0 0
        %1755 = vmatprep.subr.bf16.mxu0 0
        %1756 = vmatpush1.bf16.msra.mxu0 0
        %1757 = vmatprep.subr.bf16.mxu0 0
        %1758 = vmatpush1.bf16.msra.mxu0 0
        %1759 = vmatprep.subr.bf16.mxu0 0
        %1760 = vmatpush1.bf16.msra.mxu0 0
        %1761 = vmatprep.subr.bf16.mxu0 0
        %1762 = vmatpush1.bf16.msra.mxu0 0
        %1763 = vmatprep.subr.bf16.mxu0 0
        %1764 = vmatpush1.bf16.msra.mxu0 %v1747
        %1765 = vmatprep.subr.bf16.mxu0 0
        %1766 = vmatpush2.bf16.msra.mxu0 0
        %1767 = vmatprep.subr.bf16.mxu0 0
        %1768 = vmatpush2.bf16.msra.mxu0 0
        %1769 = vmatprep.subr.bf16.mxu0 0
        %1770 = vmatpush2.bf16.msra.mxu0 0
        %1771 = vmatprep.subr.bf16.mxu0 0
        %1772 = vmatpush2.bf16.msra.mxu0 0
        %1773 = vmatprep.subr.bf16.mxu0 0
        %1774 = vmatpush2.bf16.msra.mxu0 0
        %1775 = vmatprep.subr.bf16.mxu0 0
        %1776 = vmatpush2.bf16.msra.mxu0 0
        %1777 = vmatprep.subr.bf16.mxu0 0
        %1778 = vmatpush2.bf16.msra.mxu0 0
        %1779 = vmatprep.subr.bf16.mxu0 0
        %1780 = vmatpush2.bf16.msra.mxu0 0
        %1781 = vmatprep.mubr.bf16.mxu0 0
        %1782 = vmatmul.mubr.bf16.gmra.mxu0 %v1744
        %v1783 = vpop.f32.mrf.mxu0
        %v1784 = vadd.f32 0.0, %v1783
        %v1785 = vpop.f32.mrf.mxu0
        %v1786 = vpop.f32.mrf.mxu0
        %v1787 = vpop.f32.mrf.mxu0
        %1788 = vdwg.mxu0
        %1790 = vrot.lane.b32.xlu0 %v1784, 24
        %v1791 = vpop.permute.xlu0 %1790
        %vm1793 = vcmask 261312
        %1794 = vst.msk [vmem:[#allocation2] sm:$0xff] %vm1793, %v1791
        %v1795 = vld [vmem:[#allocation2] sm:$0xff]
        %v1796 = vpack.c.bf16 %v1795, %v1795
        %v1798 = vlaneseq
        %v1799 = vshrl.u32 %v1798, 7
        %v1800 = vsub.s32 0, %v1799
        %v1801 = vrot.slane %v1144, %v1800
        %v1807 = vunpack.c.l.b16 %v1140
        %v1808 = vunpack.c.l.b16 %v1141
        %v1809 = vunpack.c.l.b16 %v1142
        %v1810 = vunpack.c.l.b16 %v1143
        %v1811 = vpack.c.b16 %v1808, %v1807
        %v1812 = vpack.c.b16 %v1810, %v1809
        %v1816 = vsel %vm1164, %v1796, 0
        %1818 = vmatprep.subr.bf16.mxu0 0
        %1819 = vmatpush1.bf16.msra.mxu0 0
        %1820 = vmatprep.subr.bf16.mxu0 0
        %1821 = vmatpush1.bf16.msra.mxu0 0
        %1822 = vmatprep.subr.bf16.mxu0 0
        %1823 = vmatpush1.bf16.msra.mxu0 0
        %1824 = vmatprep.subr.bf16.mxu0 0
        %1825 = vmatpush1.bf16.msra.mxu0 0
        %1826 = vmatprep.subr.bf16.mxu0 0
        %1827 = vmatpush1.bf16.msra.mxu0 0
        %1828 = vmatprep.subr.bf16.mxu0 0
        %1829 = vmatpush1.bf16.msra.mxu0 0
        %1830 = vmatprep.subr.bf16.mxu0 0
        %1831 = vmatpush1.bf16.msra.mxu0 %v1812
        %1832 = vmatprep.subr.bf16.mxu0 0
        %1833 = vmatpush1.bf16.msra.mxu0 %v1811
        %1834 = vmatprep.subr.bf16.mxu0 0
        %1835 = vmatpush2.bf16.msra.mxu0 0
        %1836 = vmatprep.subr.bf16.mxu0 0
        %1837 = vmatpush2.bf16.msra.mxu0 0
        %1838 = vmatprep.subr.bf16.mxu0 0
        %1839 = vmatpush2.bf16.msra.mxu0 0
        %1840 = vmatprep.subr.bf16.mxu0 0
        %1841 = vmatpush2.bf16.msra.mxu0 0
        %1842 = vmatprep.subr.bf16.mxu0 0
        %1843 = vmatpush2.bf16.msra.mxu0 0
        %1844 = vmatprep.subr.bf16.mxu0 0
        %1845 = vmatpush2.bf16.msra.mxu0 0
        %1846 = vmatprep.subr.bf16.mxu0 0
        %1847 = vmatpush2.bf16.msra.mxu0 0
        %1848 = vmatprep.subr.bf16.mxu0 0
        %1849 = vmatpush2.bf16.msra.mxu0 0
        %1850 = vmatprep.mubr.bf16.mxu0 0
        %1851 = vmatmul.mubr.bf16.gmra.mxu0 %v1816
        %v1852 = vpop.f32.mrf.mxu0
        %v1853 = vadd.f32 %v1801, %v1852
        %v1854 = vpop.f32.mrf.mxu0
        %v1855 = vpop.f32.mrf.mxu0
        %v1856 = vpop.f32.mrf.mxu0
        %1857 = vdwg.mxu0
        %v1858 = vadd.f32 %v1120, %v1853
        %v1859 = vsel %vm1164, %v1858, 0.0
        %1860 = vadd.xlane.f32.xlu0 %v1859
        %v1861 = vpop.xlane.xlu0 %1860
        %v1862 = vrcp.pop 32.0
        %v1863 = vmul.f32 %v1861, %v1862
        %v1864 = vsub.f32 %v1858, %v1863
        %v1865 = vmul.f32 %v1864, %v1864
        %v1866 = vsel %vm1164, %v1865, 0.0
        %1867 = vadd.xlane.f32.xlu0 %v1866
        %v1868 = vpop.xlane.xlu0 %1867
        %v1869 = vmul.f32 %v1868, %v1862
        %v1870 = vadd.f32 %v1869, 1e-05
        %v1871 = vrsqrt.pop %v1870
        %v1872 = vmul.f32 %v1864, %v1871
        %v1874 = vlaneseq
        %v1875 = vshrl.u32 %v1874, 7
        %v1876 = vsub.s32 0, %v1875
        %v1877 = vrot.slane %v1122, %v1876
        %v1879 = vmul.f32 %v1872, %v1877
        %v1881 = vlaneseq
        %v1882 = vshrl.u32 %v1881, 7
        %v1883 = vsub.s32 0, %v1882
        %v1884 = vrot.slane %v1123, %v1883
        %v1886 = vadd.f32 %v1879, %v1884
        %v1887 = vld [vmem:[%s956] sm:$0xff]
        %v1888 = vld [vmem:[#allocation17] sm:$0xf]
        %v1889 = vld [vmem:[#allocation17 + $0x4] sm:$0xf]
        %v1890 = vld [vmem:[#allocation17 + $0x8] sm:$0xf]
        %v1891 = vld [vmem:[#allocation17 + $0xc] sm:$0xf]
        %v1892 = vld [vmem:[#allocation18] sm:$0x1]
        %v1893 = vld [vmem:[#allocation20] sm:$0xf]
        %v1894 = vld [vmem:[#allocation20 + $0x4] sm:$0xf]
        %v1895 = vld [vmem:[#allocation20 + $0x8] sm:$0xf]
        %v1896 = vld [vmem:[#allocation20 + $0xc] sm:$0xf]
        %v1897 = vld [vmem:[#allocation21] sm:$0x1]
        %v1898 = vld [vmem:[#allocation23] sm:$0xf]
        %v1899 = vld [vmem:[#allocation23 + $0x4] sm:$0xf]
        %v1900 = vld [vmem:[#allocation23 + $0x8] sm:$0xf]
        %v1901 = vld [vmem:[#allocation23 + $0xc] sm:$0xf]
        %v1902 = vld [vmem:[#allocation24] sm:$0x1]
        %v1903 = vld [vmem:[%s18] sm:$0xf]
        %v1904 = vld [vmem:[%s18 + $0x4] sm:$0xf]
        %v1905 = vld [vmem:[%s18 + $0x8] sm:$0xf]
        %v1906 = vld [vmem:[%s18 + $0xc] sm:$0xf]
        %v1907 = vld [vmem:[%s19] sm:$0x1]
        %v1908 = vpack.c.bf16 %v1886, %v1886
        %v1909 = vpack.c.bf16 %v1121, %v1121
        %v1911 = vlaneseq
        %v1912 = vshrl.u32 %v1911, 7
        %v1913 = vsub.s32 0, %v1912
        %v1914 = vrot.slane %v1892, %v1913
        %v1920 = vunpack.c.l.b16 %v1888
        %v1921 = vunpack.c.l.b16 %v1889
        %v1922 = vunpack.c.l.b16 %v1890
        %v1923 = vunpack.c.l.b16 %v1891
        %v1924 = vpack.c.b16 %v1921, %v1920
        %v1925 = vpack.c.b16 %v1923, %v1922
        %v1929 = vsel %vm1164, %v1908, 0
        %1931 = vmatprep.subr.bf16.mxu0 0
        %1932 = vmatpush1.bf16.msra.mxu0 0
        %1933 = vmatprep.subr.bf16.mxu0 0
        %1934 = vmatpush1.bf16.msra.mxu0 0
        %1935 = vmatprep.subr.bf16.mxu0 0
        %1936 = vmatpush1.bf16.msra.mxu0 0
        %1937 = vmatprep.subr.bf16.mxu0 0
        %1938 = vmatpush1.bf16.msra.mxu0 0
        %1939 = vmatprep.subr.bf16.mxu0 0
        %1940 = vmatpush1.bf16.msra.mxu0 0
        %1941 = vmatprep.subr.bf16.mxu0 0
        %1942 = vmatpush1.bf16.msra.mxu0 0
        %1943 = vmatprep.subr.bf16.mxu0 0
        %1944 = vmatpush1.bf16.msra.mxu0 %v1925
        %1945 = vmatprep.subr.bf16.mxu0 0
        %1946 = vmatpush1.bf16.msra.mxu0 %v1924
        %1947 = vmatprep.subr.bf16.mxu0 0
        %1948 = vmatpush2.bf16.msra.mxu0 0
        %1949 = vmatprep.subr.bf16.mxu0 0
        %1950 = vmatpush2.bf16.msra.mxu0 0
        %1951 = vmatprep.subr.bf16.mxu0 0
        %1952 = vmatpush2.bf16.msra.mxu0 0
        %1953 = vmatprep.subr.bf16.mxu0 0
        %1954 = vmatpush2.bf16.msra.mxu0 0
        %1955 = vmatprep.subr.bf16.mxu0 0
        %1956 = vmatpush2.bf16.msra.mxu0 0
        %1957 = vmatprep.subr.bf16.mxu0 0
        %1958 = vmatpush2.bf16.msra.mxu0 0
        %1959 = vmatprep.subr.bf16.mxu0 0
        %1960 = vmatpush2.bf16.msra.mxu0 0
        %1961 = vmatprep.subr.bf16.mxu0 0
        %1962 = vmatpush2.bf16.msra.mxu0 0
        %1963 = vmatprep.mubr.bf16.mxu0 0
        %1964 = vmatmul.mubr.bf16.gmra.mxu0 %v1929
        %v1965 = vpop.f32.mrf.mxu0
        %v1966 = vadd.f32 %v1914, %v1965
        %v1967 = vpop.f32.mrf.mxu0
        %v1968 = vpop.f32.mrf.mxu0
        %v1969 = vpop.f32.mrf.mxu0
        %1970 = vdwg.mxu0
        %v1972 = vlaneseq
        %v1973 = vshrl.u32 %v1972, 7
        %v1974 = vsub.s32 0, %v1973
        %v1975 = vrot.slane %v1897, %v1974
        %v1981 = vunpack.c.l.b16 %v1893
        %v1982 = vunpack.c.l.b16 %v1894
        %v1983 = vunpack.c.l.b16 %v1895
        %v1984 = vunpack.c.l.b16 %v1896
        %v1985 = vpack.c.b16 %v1982, %v1981
        %v1986 = vpack.c.b16 %v1984, %v1983
        %v1990 = vsel %vm1164, %v1909, 0
        %1992 = vmatprep.subr.bf16.mxu0 0
        %1993 = vmatpush1.bf16.msra.mxu0 0
        %1994 = vmatprep.subr.bf16.mxu0 0
        %1995 = vmatpush1.bf16.msra.mxu0 0
        %1996 = vmatprep.subr.bf16.mxu0 0
        %1997 = vmatpush1.bf16.msra.mxu0 0
        %1998 = vmatprep.subr.bf16.mxu0 0
        %1999 = vmatpush1.bf16.msra.mxu0 0
        %2000 = vmatprep.subr.bf16.mxu0 0
        %2001 = vmatpush1.bf16.msra.mxu0 0
        %2002 = vmatprep.subr.bf16.mxu0 0
        %2003 = vmatpush1.bf16.msra.mxu0 0
        %2004 = vmatprep.subr.bf16.mxu0 0
        %2005 = vmatpush1.bf16.msra.mxu0 %v1986
        %2006 = vmatprep.subr.bf16.mxu0 0
        %2007 = vmatpush1.bf16.msra.mxu0 %v1985
        %2008 = vmatprep.subr.bf16.mxu0 0
        %2009 = vmatpush2.bf16.msra.mxu0 0
        %2010 = vmatprep.subr.bf16.mxu0 0
        %2011 = vmatpush2.bf16.msra.mxu0 0
        %2012 = vmatprep.subr.bf16.mxu0 0
        %2013 = vmatpush2.bf16.msra.mxu0 0
        %2014 = vmatprep.subr.bf16.mxu0 0
        %2015 = vmatpush2.bf16.msra.mxu0 0
        %2016 = vmatprep.subr.bf16.mxu0 0
        %2017 = vmatpush2.bf16.msra.mxu0 0
        %2018 = vmatprep.subr.bf16.mxu0 0
        %2019 = vmatpush2.bf16.msra.mxu0 0
        %2020 = vmatprep.subr.bf16.mxu0 0
        %2021 = vmatpush2.bf16.msra.mxu0 0
        %2022 = vmatprep.subr.bf16.mxu0 0
        %2023 = vmatpush2.bf16.msra.mxu0 0
        %2024 = vmatprep.mubr.bf16.mxu0 0
        %2025 = vmatmul.mubr.bf16.gmra.mxu0 %v1990
        %v2026 = vpop.f32.mrf.mxu0
        %v2027 = vadd.f32 %v1975, %v2026
        %v2028 = vpop.f32.mrf.mxu0
        %v2029 = vpop.f32.mrf.mxu0
        %v2030 = vpop.f32.mrf.mxu0
        %2031 = vdwg.mxu0
        %v2033 = vlaneseq
        %v2034 = vshrl.u32 %v2033, 7
        %v2035 = vsub.s32 0, %v2034
        %v2036 = vrot.slane %v1902, %v2035
        %v2042 = vunpack.c.l.b16 %v1898
        %v2043 = vunpack.c.l.b16 %v1899
        %v2044 = vunpack.c.l.b16 %v1900
        %v2045 = vunpack.c.l.b16 %v1901
        %v2046 = vpack.c.b16 %v2043, %v2042
        %v2047 = vpack.c.b16 %v2045, %v2044
        %2050 = vmatprep.subr.bf16.mxu0 0
        %2051 = vmatpush1.bf16.msra.mxu0 0
        %2052 = vmatprep.subr.bf16.mxu0 0
        %2053 = vmatpush1.bf16.msra.mxu0 0
        %2054 = vmatprep.subr.bf16.mxu0 0
        %2055 = vmatpush1.bf16.msra.mxu0 0
        %2056 = vmatprep.subr.bf16.mxu0 0
        %2057 = vmatpush1.bf16.msra.mxu0 0
        %2058 = vmatprep.subr.bf16.mxu0 0
        %2059 = vmatpush1.bf16.msra.mxu0 0
        %2060 = vmatprep.subr.bf16.mxu0 0
        %2061 = vmatpush1.bf16.msra.mxu0 0
        %2062 = vmatprep.subr.bf16.mxu0 0
        %2063 = vmatpush1.bf16.msra.mxu0 %v2047
        %2064 = vmatprep.subr.bf16.mxu0 0
        %2065 = vmatpush1.bf16.msra.mxu0 %v2046
        %2066 = vmatprep.subr.bf16.mxu0 0
        %2067 = vmatpush2.bf16.msra.mxu0 0
        %2068 = vmatprep.subr.bf16.mxu0 0
        %2069 = vmatpush2.bf16.msra.mxu0 0
        %2070 = vmatprep.subr.bf16.mxu0 0
        %2071 = vmatpush2.bf16.msra.mxu0 0
        %2072 = vmatprep.subr.bf16.mxu0 0
        %2073 = vmatpush2.bf16.msra.mxu0 0
        %2074 = vmatprep.subr.bf16.mxu0 0
        %2075 = vmatpush2.bf16.msra.mxu0 0
        %2076 = vmatprep.subr.bf16.mxu0 0
        %2077 = vmatpush2.bf16.msra.mxu0 0
        %2078 = vmatprep.subr.bf16.mxu0 0
        %2079 = vmatpush2.bf16.msra.mxu0 0
        %2080 = vmatprep.subr.bf16.mxu0 0
        %2081 = vmatpush2.bf16.msra.mxu0 0
        %2082 = vmatprep.mubr.bf16.mxu0 0
        %2083 = vmatmul.mubr.bf16.gmra.mxu0 %v1990
        %v2084 = vpop.f32.mrf.mxu0
        %v2085 = vadd.f32 %v2036, %v2084
        %v2086 = vpop.f32.mrf.mxu0
        %v2087 = vpop.f32.mrf.mxu0
        %v2088 = vpop.f32.mrf.mxu0
        %2089 = vdwg.mxu0
        %v2090 = vmul.f32 %v1966, 0.35355338
        %vm2091 = vcmp.ne.f32.partialorder %v1887, 0.0
        %v2092 = vsel %vm2091, 0.0, -1e+30
        %v2093 = vpack.c.bf16 %v2090, %v2090
        %v2094 = vpack.c.bf16 %v2027, %v2027
        %v2095 = vpack.c.bf16 %v2085, %v2085
        %v2097 = vsel %vm1330, %v2093, 0
        %v2100 = vsel %vm1330, %v2094, 0
        %2102 = vmatprep.subr.bf16.mxu0 0
        %2103 = vmatpush1.bf16.xpose.msra.mxu0 0
        %2104 = vmatprep.subr.bf16.mxu0 0
        %2105 = vmatpush1.bf16.xpose.msra.mxu0 0
        %2106 = vmatprep.subr.bf16.mxu0 0
        %2107 = vmatpush1.bf16.xpose.msra.mxu0 0
        %2108 = vmatprep.subr.bf16.mxu0 0
        %2109 = vmatpush1.bf16.xpose.msra.mxu0 0
        %2110 = vmatprep.subr.bf16.mxu0 0
        %2111 = vmatpush1.bf16.xpose.msra.mxu0 0
        %2112 = vmatprep.subr.bf16.mxu0 0
        %2113 = vmatpush1.bf16.xpose.msra.mxu0 0
        %2114 = vmatprep.subr.bf16.mxu0 0
        %2115 = vmatpush1.bf16.xpose.msra.mxu0 0
        %2116 = vmatprep.subr.bf16.mxu0 0
        %2117 = vmatpush1.bf16.xpose.msra.mxu0 %v2100
        %2118 = vmatprep.subr.bf16.mxu0 0
        %2119 = vmatpush2.bf16.xpose.msra.mxu0 0
        %2120 = vmatprep.subr.bf16.mxu0 0
        %2121 = vmatpush2.bf16.xpose.msra.mxu0 0
        %2122 = vmatprep.subr.bf16.mxu0 0
        %2123 = vmatpush2.bf16.xpose.msra.mxu0 0
        %2124 = vmatprep.subr.bf16.mxu0 0
        %2125 = vmatpush2.bf16.xpose.msra.mxu0 0
        %2126 = vmatprep.subr.bf16.mxu0 0
        %2127 = vmatpush2.bf16.xpose.msra.mxu0 0
        %2128 = vmatprep.subr.bf16.mxu0 0
        %2129 = vmatpush2.bf16.xpose.msra.mxu0 0
        %2130 = vmatprep.subr.bf16.mxu0 0
        %2131 = vmatpush2.bf16.xpose.msra.mxu0 0
        %2132 = vmatprep.subr.bf16.mxu0 0
        %2133 = vmatpush2.bf16.xpose.msra.mxu0 0
        %2134 = vmatprep.mubr.bf16.mxu0 0
        %2135 = vmatmul.mubr.bf16.gmra.mxu0 %v2097
        %v2136 = vpop.f32.mrf.mxu0
        %v2137 = vadd.f32 %v2092, %v2136
        %v2138 = vpop.f32.mrf.mxu0
        %v2139 = vpop.f32.mrf.mxu0
        %v2140 = vpop.f32.mrf.mxu0
        %2141 = vdwg.mxu0
        %v2142 = vsel %vm1330, %v2137, -inf
        %2143 = vmax.xlane.f32.xlu0 %v2142
        %v2144 = vpop.xlane.xlu0 %2143
        %v2145 = vsub.f32 %v2137, %v2144
        %v2146 = vmul.f32 %v2145, 1.442695
        %v2147 = vpow.pop %v2146
        %v2148 = vsel %vm1330, %v2147, 0.0
        %2149 = vadd.xlane.f32.xlu0 %v2148
        %v2150 = vpop.xlane.xlu0 %2149
        %v2151 = vrcp.pop %v2150
        %v2152 = vmul.f32 %v2147, %v2151
        %2153 = vst.msk [vmem:[%s1099] sm:$0xff] %vm1330, %v2152
        %v2154 = vpack.c.bf16 %v2152, %v2152
        %v2156 = vsel %vm1330, %v2154, 0
        %v2159 = vsel %vm1393, %v2095, 0
        %2161 = vmatprep.subr.bf16.mxu0 0
        %2162 = vmatpush1.bf16.msra.mxu0 0
        %2163 = vmatprep.subr.bf16.mxu0 0
        %2164 = vmatpush1.bf16.msra.mxu0 0
        %2165 = vmatprep.subr.bf16.mxu0 0
        %2166 = vmatpush1.bf16.msra.mxu0 0
        %2167 = vmatprep.subr.bf16.mxu0 0
        %2168 = vmatpush1.bf16.msra.mxu0 0
        %2169 = vmatprep.subr.bf16.mxu0 0
        %2170 = vmatpush1.bf16.msra.mxu0 0
        %2171 = vmatprep.subr.bf16.mxu0 0
        %2172 = vmatpush1.bf16.msra.mxu0 0
        %2173 = vmatprep.subr.bf16.mxu0 0
        %2174 = vmatpush1.bf16.msra.mxu0 0
        %2175 = vmatprep.subr.bf16.mxu0 0
        %2176 = vmatpush1.bf16.msra.mxu0 %v2159
        %2177 = vmatprep.subr.bf16.mxu0 0
        %2178 = vmatpush2.bf16.msra.mxu0 0
        %2179 = vmatprep.subr.bf16.mxu0 0
        %2180 = vmatpush2.bf16.msra.mxu0 0
        %2181 = vmatprep.subr.bf16.mxu0 0
        %2182 = vmatpush2.bf16.msra.mxu0 0
        %2183 = vmatprep.subr.bf16.mxu0 0
        %2184 = vmatpush2.bf16.msra.mxu0 0
        %2185 = vmatprep.subr.bf16.mxu0 0
        %2186 = vmatpush2.bf16.msra.mxu0 0
        %2187 = vmatprep.subr.bf16.mxu0 0
        %2188 = vmatpush2.bf16.msra.mxu0 0
        %2189 = vmatprep.subr.bf16.mxu0 0
        %2190 = vmatpush2.bf16.msra.mxu0 0
        %2191 = vmatprep.subr.bf16.mxu0 0
        %2192 = vmatpush2.bf16.msra.mxu0 0
        %2193 = vmatprep.mubr.bf16.mxu0 0
        %2194 = vmatmul.mubr.bf16.gmra.mxu0 %v2156
        %v2195 = vpop.f32.mrf.mxu0
        %v2196 = vadd.f32 0.0, %v2195
        %v2197 = vpop.f32.mrf.mxu0
        %v2198 = vpop.f32.mrf.mxu0
        %v2199 = vpop.f32.mrf.mxu0
        %2200 = vdwg.mxu0
        %2201 = vst.msk [vmem:[#allocation2] sm:$0xff] %vm1330, %v2196
        %2203 = vrot.lane.b32.xlu0 %v2093, 120
        %v2204 = vpop.permute.xlu0 %2203
        %2206 = vrot.lane.b32.xlu0 %v2094, 120
        %v2207 = vpop.permute.xlu0 %2206
        %v2209 = vsel %vm1330, %v2204, 0
        %v2212 = vsel %vm1330, %v2207, 0
        %2214 = vmatprep.subr.bf16.mxu0 0
        %2215 = vmatpush1.bf16.xpose.msra.mxu0 0
        %2216 = vmatprep.subr.bf16.mxu0 0
        %2217 = vmatpush1.bf16.xpose.msra.mxu0 0
        %2218 = vmatprep.subr.bf16.mxu0 0
        %2219 = vmatpush1.bf16.xpose.msra.mxu0 0
        %2220 = vmatprep.subr.bf16.mxu0 0
        %2221 = vmatpush1.bf16.xpose.msra.mxu0 0
        %2222 = vmatprep.subr.bf16.mxu0 0
        %2223 = vmatpush1.bf16.xpose.msra.mxu0 0
        %2224 = vmatprep.subr.bf16.mxu0 0
        %2225 = vmatpush1.bf16.xpose.msra.mxu0 0
        %2226 = vmatprep.subr.bf16.mxu0 0
        %2227 = vmatpush1.bf16.xpose.msra.mxu0 0
        %2228 = vmatprep.subr.bf16.mxu0 0
        %2229 = vmatpush1.bf16.xpose.msra.mxu0 %v2212
        %2230 = vmatprep.subr.bf16.mxu0 0
        %2231 = vmatpush2.bf16.xpose.msra.mxu0 0
        %2232 = vmatprep.subr.bf16.mxu0 0
        %2233 = vmatpush2.bf16.xpose.msra.mxu0 0
        %2234 = vmatprep.subr.bf16.mxu0 0
        %2235 = vmatpush2.bf16.xpose.msra.mxu0 0
        %2236 = vmatprep.subr.bf16.mxu0 0
        %2237 = vmatpush2.bf16.xpose.msra.mxu0 0
        %2238 = vmatprep.subr.bf16.mxu0 0
        %2239 = vmatpush2.bf16.xpose.msra.mxu0 0
        %2240 = vmatprep.subr.bf16.mxu0 0
        %2241 = vmatpush2.bf16.xpose.msra.mxu0 0
        %2242 = vmatprep.subr.bf16.mxu0 0
        %2243 = vmatpush2.bf16.xpose.msra.mxu0 0
        %2244 = vmatprep.subr.bf16.mxu0 0
        %2245 = vmatpush2.bf16.xpose.msra.mxu0 0
        %2246 = vmatprep.mubr.bf16.mxu0 0
        %2247 = vmatmul.mubr.bf16.gmra.mxu0 %v2209
        %v2248 = vpop.f32.mrf.mxu0
        %v2249 = vadd.f32 %v2092, %v2248
        %v2250 = vpop.f32.mrf.mxu0
        %v2251 = vpop.f32.mrf.mxu0
        %v2252 = vpop.f32.mrf.mxu0
        %2253 = vdwg.mxu0
        %v2254 = vsel %vm1330, %v2249, -inf
        %2255 = vmax.xlane.f32.xlu0 %v2254
        %v2256 = vpop.xlane.xlu0 %2255
        %v2257 = vsub.f32 %v2249, %v2256
        %v2258 = vmul.f32 %v2257, 1.442695
        %v2259 = vpow.pop %v2258
        %v2260 = vsel %vm1330, %v2259, 0.0
        %2261 = vadd.xlane.f32.xlu0 %v2260
        %v2262 = vpop.xlane.xlu0 %2261
        %v2263 = vrcp.pop %v2262
        %v2264 = vmul.f32 %v2259, %v2263
        %s2265 = scalar_lea.vmem %s1099, 8 [#allocation28]
        %2266 = vst.msk [vmem:[%s2265] sm:$0xff] %vm1330, %v2264
        %v2267 = vpack.c.bf16 %v2264, %v2264
        %2269 = vrot.lane.b32.xlu0 %v2095, 120
        %v2270 = vpop.permute.xlu0 %2269
        %v2272 = vsel %vm1330, %v2267, 0
        %v2275 = vsel %vm1393, %v2270, 0
        %2277 = vmatprep.subr.bf16.mxu0 0
        %2278 = vmatpush1.bf16.msra.mxu0 0
        %2279 = vmatprep.subr.bf16.mxu0 0
        %2280 = vmatpush1.bf16.msra.mxu0 0
        %2281 = vmatprep.subr.bf16.mxu0 0
        %2282 = vmatpush1.bf16.msra.mxu0 0
        %2283 = vmatprep.subr.bf16.mxu0 0
        %2284 = vmatpush1.bf16.msra.mxu0 0
        %2285 = vmatprep.subr.bf16.mxu0 0
        %2286 = vmatpush1.bf16.msra.mxu0 0
        %2287 = vmatprep.subr.bf16.mxu0 0
        %2288 = vmatpush1.bf16.msra.mxu0 0
        %2289 = vmatprep.subr.bf16.mxu0 0
        %2290 = vmatpush1.bf16.msra.mxu0 0
        %2291 = vmatprep.subr.bf16.mxu0 0
        %2292 = vmatpush1.bf16.msra.mxu0 %v2275
        %2293 = vmatprep.subr.bf16.mxu0 0
        %2294 = vmatpush2.bf16.msra.mxu0 0
        %2295 = vmatprep.subr.bf16.mxu0 0
        %2296 = vmatpush2.bf16.msra.mxu0 0
        %2297 = vmatprep.subr.bf16.mxu0 0
        %2298 = vmatpush2.bf16.msra.mxu0 0
        %2299 = vmatprep.subr.bf16.mxu0 0
        %2300 = vmatpush2.bf16.msra.mxu0 0
        %2301 = vmatprep.subr.bf16.mxu0 0
        %2302 = vmatpush2.bf16.msra.mxu0 0
        %2303 = vmatprep.subr.bf16.mxu0 0
        %2304 = vmatpush2.bf16.msra.mxu0 0
        %2305 = vmatprep.subr.bf16.mxu0 0
        %2306 = vmatpush2.bf16.msra.mxu0 0
        %2307 = vmatprep.subr.bf16.mxu0 0
        %2308 = vmatpush2.bf16.msra.mxu0 0
        %2309 = vmatprep.mubr.bf16.mxu0 0
        %2310 = vmatmul.mubr.bf16.gmra.mxu0 %v2272
        %v2311 = vpop.f32.mrf.mxu0
        %v2312 = vadd.f32 0.0, %v2311
        %v2313 = vpop.f32.mrf.mxu0
        %v2314 = vpop.f32.mrf.mxu0
        %v2315 = vpop.f32.mrf.mxu0
        %2316 = vdwg.mxu0
        %2318 = vrot.lane.b32.xlu0 %v2312, 8
        %v2319 = vpop.permute.xlu0 %2318
        %2321 = vst.msk [vmem:[#allocation2] sm:$0xff] %vm1557, %v2319
        %2322 = vrot.lane.b32.xlu0 %v2093, 112
        %v2323 = vpop.permute.xlu0 %2322
        %2324 = vrot.lane.b32.xlu0 %v2094, 112
        %v2325 = vpop.permute.xlu0 %2324
        %v2327 = vsel %vm1330, %v2323, 0
        %v2330 = vsel %vm1330, %v2325, 0
        %2332 = vmatprep.subr.bf16.mxu0 0
        %2333 = vmatpush1.bf16.xpose.msra.mxu0 0
        %2334 = vmatprep.subr.bf16.mxu0 0
        %2335 = vmatpush1.bf16.xpose.msra.mxu0 0
        %2336 = vmatprep.subr.bf16.mxu0 0
        %2337 = vmatpush1.bf16.xpose.msra.mxu0 0
        %2338 = vmatprep.subr.bf16.mxu0 0
        %2339 = vmatpush1.bf16.xpose.msra.mxu0 0
        %2340 = vmatprep.subr.bf16.mxu0 0
        %2341 = vmatpush1.bf16.xpose.msra.mxu0 0
        %2342 = vmatprep.subr.bf16.mxu0 0
        %2343 = vmatpush1.bf16.xpose.msra.mxu0 0
        %2344 = vmatprep.subr.bf16.mxu0 0
        %2345 = vmatpush1.bf16.xpose.msra.mxu0 0
        %2346 = vmatprep.subr.bf16.mxu0 0
        %2347 = vmatpush1.bf16.xpose.msra.mxu0 %v2330
        %2348 = vmatprep.subr.bf16.mxu0 0
        %2349 = vmatpush2.bf16.xpose.msra.mxu0 0
        %2350 = vmatprep.subr.bf16.mxu0 0
        %2351 = vmatpush2.bf16.xpose.msra.mxu0 0
        %2352 = vmatprep.subr.bf16.mxu0 0
        %2353 = vmatpush2.bf16.xpose.msra.mxu0 0
        %2354 = vmatprep.subr.bf16.mxu0 0
        %2355 = vmatpush2.bf16.xpose.msra.mxu0 0
        %2356 = vmatprep.subr.bf16.mxu0 0
        %2357 = vmatpush2.bf16.xpose.msra.mxu0 0
        %2358 = vmatprep.subr.bf16.mxu0 0
        %2359 = vmatpush2.bf16.xpose.msra.mxu0 0
        %2360 = vmatprep.subr.bf16.mxu0 0
        %2361 = vmatpush2.bf16.xpose.msra.mxu0 0
        %2362 = vmatprep.subr.bf16.mxu0 0
        %2363 = vmatpush2.bf16.xpose.msra.mxu0 0
        %2364 = vmatprep.mubr.bf16.mxu0 0
        %2365 = vmatmul.mubr.bf16.gmra.mxu0 %v2327
        %v2366 = vpop.f32.mrf.mxu0
        %v2367 = vadd.f32 %v2092, %v2366
        %v2368 = vpop.f32.mrf.mxu0
        %v2369 = vpop.f32.mrf.mxu0
        %v2370 = vpop.f32.mrf.mxu0
        %2371 = vdwg.mxu0
        %v2372 = vsel %vm1330, %v2367, -inf
        %2373 = vmax.xlane.f32.xlu0 %v2372
        %v2374 = vpop.xlane.xlu0 %2373
        %v2375 = vsub.f32 %v2367, %v2374
        %v2376 = vmul.f32 %v2375, 1.442695
        %v2377 = vpow.pop %v2376
        %v2378 = vsel %vm1330, %v2377, 0.0
        %2379 = vadd.xlane.f32.xlu0 %v2378
        %v2380 = vpop.xlane.xlu0 %2379
        %v2381 = vrcp.pop %v2380
        %v2382 = vmul.f32 %v2377, %v2381
        %s2383 = scalar_lea.vmem %s1099, 16 [#allocation28]
        %2384 = vst.msk [vmem:[%s2383] sm:$0xff] %vm1330, %v2382
        %v2385 = vpack.c.bf16 %v2382, %v2382
        %2386 = vrot.lane.b32.xlu0 %v2095, 112
        %v2387 = vpop.permute.xlu0 %2386
        %v2389 = vsel %vm1330, %v2385, 0
        %v2392 = vsel %vm1393, %v2387, 0
        %2394 = vmatprep.subr.bf16.mxu0 0
        %2395 = vmatpush1.bf16.msra.mxu0 0
        %2396 = vmatprep.subr.bf16.mxu0 0
        %2397 = vmatpush1.bf16.msra.mxu0 0
        %2398 = vmatprep.subr.bf16.mxu0 0
        %2399 = vmatpush1.bf16.msra.mxu0 0
        %2400 = vmatprep.subr.bf16.mxu0 0
        %2401 = vmatpush1.bf16.msra.mxu0 0
        %2402 = vmatprep.subr.bf16.mxu0 0
        %2403 = vmatpush1.bf16.msra.mxu0 0
        %2404 = vmatprep.subr.bf16.mxu0 0
        %2405 = vmatpush1.bf16.msra.mxu0 0
        %2406 = vmatprep.subr.bf16.mxu0 0
        %2407 = vmatpush1.bf16.msra.mxu0 0
        %2408 = vmatprep.subr.bf16.mxu0 0
        %2409 = vmatpush1.bf16.msra.mxu0 %v2392
        %2410 = vmatprep.subr.bf16.mxu0 0
        %2411 = vmatpush2.bf16.msra.mxu0 0
        %2412 = vmatprep.subr.bf16.mxu0 0
        %2413 = vmatpush2.bf16.msra.mxu0 0
        %2414 = vmatprep.subr.bf16.mxu0 0
        %2415 = vmatpush2.bf16.msra.mxu0 0
        %2416 = vmatprep.subr.bf16.mxu0 0
        %2417 = vmatpush2.bf16.msra.mxu0 0
        %2418 = vmatprep.subr.bf16.mxu0 0
        %2419 = vmatpush2.bf16.msra.mxu0 0
        %2420 = vmatprep.subr.bf16.mxu0 0
        %2421 = vmatpush2.bf16.msra.mxu0 0
        %2422 = vmatprep.subr.bf16.mxu0 0
        %2423 = vmatpush2.bf16.msra.mxu0 0
        %2424 = vmatprep.subr.bf16.mxu0 0
        %2425 = vmatpush2.bf16.msra.mxu0 0
        %2426 = vmatprep.mubr.bf16.mxu0 0
        %2427 = vmatmul.mubr.bf16.gmra.mxu0 %v2389
        %v2428 = vpop.f32.mrf.mxu0
        %v2429 = vadd.f32 0.0, %v2428
        %v2430 = vpop.f32.mrf.mxu0
        %v2431 = vpop.f32.mrf.mxu0
        %v2432 = vpop.f32.mrf.mxu0
        %2433 = vdwg.mxu0
        %2435 = vrot.lane.b32.xlu0 %v2429, 16
        %v2436 = vpop.permute.xlu0 %2435
        %2438 = vst.msk [vmem:[#allocation2] sm:$0xff] %vm1675, %v2436
        %2439 = vrot.lane.b32.xlu0 %v2093, 104
        %v2440 = vpop.permute.xlu0 %2439
        %2441 = vrot.lane.b32.xlu0 %v2094, 104
        %v2442 = vpop.permute.xlu0 %2441
        %v2444 = vsel %vm1330, %v2440, 0
        %v2447 = vsel %vm1330, %v2442, 0
        %2449 = vmatprep.subr.bf16.mxu0 0
        %2450 = vmatpush1.bf16.xpose.msra.mxu0 0
        %2451 = vmatprep.subr.bf16.mxu0 0
        %2452 = vmatpush1.bf16.xpose.msra.mxu0 0
        %2453 = vmatprep.subr.bf16.mxu0 0
        %2454 = vmatpush1.bf16.xpose.msra.mxu0 0
        %2455 = vmatprep.subr.bf16.mxu0 0
        %2456 = vmatpush1.bf16.xpose.msra.mxu0 0
        %2457 = vmatprep.subr.bf16.mxu0 0
        %2458 = vmatpush1.bf16.xpose.msra.mxu0 0
        %2459 = vmatprep.subr.bf16.mxu0 0
        %2460 = vmatpush1.bf16.xpose.msra.mxu0 0
        %2461 = vmatprep.subr.bf16.mxu0 0
        %2462 = vmatpush1.bf16.xpose.msra.mxu0 0
        %2463 = vmatprep.subr.bf16.mxu0 0
        %2464 = vmatpush1.bf16.xpose.msra.mxu0 %v2447
        %2465 = vmatprep.subr.bf16.mxu0 0
        %2466 = vmatpush2.bf16.xpose.msra.mxu0 0
        %2467 = vmatprep.subr.bf16.mxu0 0
        %2468 = vmatpush2.bf16.xpose.msra.mxu0 0
        %2469 = vmatprep.subr.bf16.mxu0 0
        %2470 = vmatpush2.bf16.xpose.msra.mxu0 0
        %2471 = vmatprep.subr.bf16.mxu0 0
        %2472 = vmatpush2.bf16.xpose.msra.mxu0 0
        %2473 = vmatprep.subr.bf16.mxu0 0
        %2474 = vmatpush2.bf16.xpose.msra.mxu0 0
        %2475 = vmatprep.subr.bf16.mxu0 0
        %2476 = vmatpush2.bf16.xpose.msra.mxu0 0
        %2477 = vmatprep.subr.bf16.mxu0 0
        %2478 = vmatpush2.bf16.xpose.msra.mxu0 0
        %2479 = vmatprep.subr.bf16.mxu0 0
        %2480 = vmatpush2.bf16.xpose.msra.mxu0 0
        %2481 = vmatprep.mubr.bf16.mxu0 0
        %2482 = vmatmul.mubr.bf16.gmra.mxu0 %v2444
        %v2483 = vpop.f32.mrf.mxu0
        %v2484 = vadd.f32 %v2092, %v2483
        %v2485 = vpop.f32.mrf.mxu0
        %v2486 = vpop.f32.mrf.mxu0
        %v2487 = vpop.f32.mrf.mxu0
        %2488 = vdwg.mxu0
        %v2489 = vsel %vm1330, %v2484, -inf
        %2490 = vmax.xlane.f32.xlu0 %v2489
        %v2491 = vpop.xlane.xlu0 %2490
        %v2492 = vsub.f32 %v2484, %v2491
        %v2493 = vmul.f32 %v2492, 1.442695
        %v2494 = vpow.pop %v2493
        %v2495 = vsel %vm1330, %v2494, 0.0
        %2496 = vadd.xlane.f32.xlu0 %v2495
        %v2497 = vpop.xlane.xlu0 %2496
        %v2498 = vrcp.pop %v2497
        %v2499 = vmul.f32 %v2494, %v2498
        %s2500 = scalar_lea.vmem %s1099, 24 [#allocation28]
        %2501 = vst.msk [vmem:[%s2500] sm:$0xff] %vm1330, %v2499
        %v2502 = vpack.c.bf16 %v2499, %v2499
        %2503 = vrot.lane.b32.xlu0 %v2095, 104
        %v2504 = vpop.permute.xlu0 %2503
        %v2506 = vsel %vm1330, %v2502, 0
        %v2509 = vsel %vm1393, %v2504, 0
        %2511 = vmatprep.subr.bf16.mxu0 0
        %2512 = vmatpush1.bf16.msra.mxu0 0
        %2513 = vmatprep.subr.bf16.mxu0 0
        %2514 = vmatpush1.bf16.msra.mxu0 0
        %2515 = vmatprep.subr.bf16.mxu0 0
        %2516 = vmatpush1.bf16.msra.mxu0 0
        %2517 = vmatprep.subr.bf16.mxu0 0
        %2518 = vmatpush1.bf16.msra.mxu0 0
        %2519 = vmatprep.subr.bf16.mxu0 0
        %2520 = vmatpush1.bf16.msra.mxu0 0
        %2521 = vmatprep.subr.bf16.mxu0 0
        %2522 = vmatpush1.bf16.msra.mxu0 0
        %2523 = vmatprep.subr.bf16.mxu0 0
        %2524 = vmatpush1.bf16.msra.mxu0 0
        %2525 = vmatprep.subr.bf16.mxu0 0
        %2526 = vmatpush1.bf16.msra.mxu0 %v2509
        %2527 = vmatprep.subr.bf16.mxu0 0
        %2528 = vmatpush2.bf16.msra.mxu0 0
        %2529 = vmatprep.subr.bf16.mxu0 0
        %2530 = vmatpush2.bf16.msra.mxu0 0
        %2531 = vmatprep.subr.bf16.mxu0 0
        %2532 = vmatpush2.bf16.msra.mxu0 0
        %2533 = vmatprep.subr.bf16.mxu0 0
        %2534 = vmatpush2.bf16.msra.mxu0 0
        %2535 = vmatprep.subr.bf16.mxu0 0
        %2536 = vmatpush2.bf16.msra.mxu0 0
        %2537 = vmatprep.subr.bf16.mxu0 0
        %2538 = vmatpush2.bf16.msra.mxu0 0
        %2539 = vmatprep.subr.bf16.mxu0 0
        %2540 = vmatpush2.bf16.msra.mxu0 0
        %2541 = vmatprep.subr.bf16.mxu0 0
        %2542 = vmatpush2.bf16.msra.mxu0 0
        %2543 = vmatprep.mubr.bf16.mxu0 0
        %2544 = vmatmul.mubr.bf16.gmra.mxu0 %v2506
        %v2545 = vpop.f32.mrf.mxu0
        %v2546 = vadd.f32 0.0, %v2545
        %v2547 = vpop.f32.mrf.mxu0
        %v2548 = vpop.f32.mrf.mxu0
        %v2549 = vpop.f32.mrf.mxu0
        %2550 = vdwg.mxu0
        %2552 = vrot.lane.b32.xlu0 %v2546, 24
        %v2553 = vpop.permute.xlu0 %2552
        %2555 = vst.msk [vmem:[#allocation2] sm:$0xff] %vm1793, %v2553
        %v2556 = vld [vmem:[#allocation2] sm:$0xff]
        %v2557 = vpack.c.bf16 %v2556, %v2556
        %v2559 = vlaneseq
        %v2560 = vshrl.u32 %v2559, 7
        %v2561 = vsub.s32 0, %v2560
        %v2562 = vrot.slane %v1907, %v2561
        %v2568 = vunpack.c.l.b16 %v1903
        %v2569 = vunpack.c.l.b16 %v1904
        %v2570 = vunpack.c.l.b16 %v1905
        %v2571 = vunpack.c.l.b16 %v1906
        %v2572 = vpack.c.b16 %v2569, %v2568
        %v2573 = vpack.c.b16 %v2571, %v2570
        %v2577 = vsel %vm1164, %v2557, 0
        %2579 = vmatprep.subr.bf16.mxu0 0
        %2580 = vmatpush1.bf16.msra.mxu0 0
        %2581 = vmatprep.subr.bf16.mxu0 0
        %2582 = vmatpush1.bf16.msra.mxu0 0
        %2583 = vmatprep.subr.bf16.mxu0 0
        %2584 = vmatpush1.bf16.msra.mxu0 0
        %2585 = vmatprep.subr.bf16.mxu0 0
        %2586 = vmatpush1.bf16.msra.mxu0 0
        %2587 = vmatprep.subr.bf16.mxu0 0
        %2588 = vmatpush1.bf16.msra.mxu0 0
        %2589 = vmatprep.subr.bf16.mxu0 0
        %2590 = vmatpush1.bf16.msra.mxu0 0
        %2591 = vmatprep.subr.bf16.mxu0 0
        %2592 = vmatpush1.bf16.msra.mxu0 %v2573
        %2593 = vmatprep.subr.bf16.mxu0 0
        %2594 = vmatpush1.bf16.msra.mxu0 %v2572
        %2595 = vmatprep.subr.bf16.mxu0 0
        %2596 = vmatpush2.bf16.msra.mxu0 0
        %2597 = vmatprep.subr.bf16.mxu0 0
        %2598 = vmatpush2.bf16.msra.mxu0 0
        %2599 = vmatprep.subr.bf16.mxu0 0
        %2600 = vmatpush2.bf16.msra.mxu0 0
        %2601 = vmatprep.subr.bf16.mxu0 0
        %2602 = vmatpush2.bf16.msra.mxu0 0
        %2603 = vmatprep.subr.bf16.mxu0 0
        %2604 = vmatpush2.bf16.msra.mxu0 0
        %2605 = vmatprep.subr.bf16.mxu0 0
        %2606 = vmatpush2.bf16.msra.mxu0 0
        %2607 = vmatprep.subr.bf16.mxu0 0
        %2608 = vmatpush2.bf16.msra.mxu0 0
        %2609 = vmatprep.subr.bf16.mxu0 0
        %2610 = vmatpush2.bf16.msra.mxu0 0
        %2611 = vmatprep.mubr.bf16.mxu0 0
        %2612 = vmatmul.mubr.bf16.gmra.mxu0 %v2577
        %v2613 = vpop.f32.mrf.mxu0
        %v2614 = vadd.f32 %v2562, %v2613
        %v2615 = vpop.f32.mrf.mxu0
        %v2616 = vpop.f32.mrf.mxu0
        %v2617 = vpop.f32.mrf.mxu0
        %2618 = vdwg.mxu0
        %v2619 = vadd.f32 %v1886, %v2614
        %v2620 = vsel %vm1164, %v2619, 0.0
        %2621 = vadd.xlane.f32.xlu0 %v2620
        %v2622 = vpop.xlane.xlu0 %2621
        %v2623 = vmul.f32 %v2622, %v1862
        %v2624 = vsub.f32 %v2619, %v2623
        %v2625 = vmul.f32 %v2624, %v2624
        %v2626 = vsel %vm1164, %v2625, 0.0
        %2627 = vadd.xlane.f32.xlu0 %v2626
        %v2628 = vpop.xlane.xlu0 %2627
        %v2629 = vmul.f32 %v2628, %v1862
        %v2630 = vadd.f32 %v2629, 1e-05
        %v2631 = vrsqrt.pop %v2630
        %v2632 = vmul.f32 %v2624, %v2631
        %v2633 = vmul.f32 %v2632, %v1877
        %v2634 = vadd.f32 %v2633, %v1884
        %v2635 = vpack.c.bf16 %v2634, %v2634
        %v2636 = vld [vmem:[#allocation26] sm:$0xf]
        %v2637 = vld [vmem:[#allocation26 + $0x4] sm:$0xf]
        %v2638 = vld [vmem:[#allocation26 + $0x8] sm:$0xf]
        %v2639 = vld [vmem:[#allocation26 + $0xc] sm:$0xf]
        %v2640 = vld [vmem:[%s21] sm:$0x1]
        %v2642 = vlaneseq
        %v2643 = vshrl.u32 %v2642, 7
        %v2644 = vsub.s32 0, %v2643
        %v2645 = vrot.slane %v2640, %v2644
        %v2651 = vunpack.c.l.b16 %v2636
        %v2652 = vunpack.c.l.b16 %v2637
        %v2653 = vunpack.c.l.b16 %v2638
        %v2654 = vunpack.c.l.b16 %v2639
        %v2655 = vpack.c.b16 %v2652, %v2651
        %v2656 = vpack.c.b16 %v2654, %v2653
        %v2660 = vsel %vm1164, %v2635, 0
        %2662 = vmatprep.subr.bf16.mxu0 0
        %2663 = vmatpush1.bf16.msra.mxu0 0
        %2664 = vmatprep.subr.bf16.mxu0 0
        %2665 = vmatpush1.bf16.msra.mxu0 0
        %2666 = vmatprep.subr.bf16.mxu0 0
        %2667 = vmatpush1.bf16.msra.mxu0 0
        %2668 = vmatprep.subr.bf16.mxu0 0
        %2669 = vmatpush1.bf16.msra.mxu0 0
        %2670 = vmatprep.subr.bf16.mxu0 0
        %2671 = vmatpush1.bf16.msra.mxu0 0
        %2672 = vmatprep.subr.bf16.mxu0 0
        %2673 = vmatpush1.bf16.msra.mxu0 0
        %2674 = vmatprep.subr.bf16.mxu0 0
        %2675 = vmatpush1.bf16.msra.mxu0 %v2656
        %2676 = vmatprep.subr.bf16.mxu0 0
        %2677 = vmatpush1.bf16.msra.mxu0 %v2655
        %2678 = vmatprep.subr.bf16.mxu0 0
        %2679 = vmatpush2.bf16.msra.mxu0 0
        %2680 = vmatprep.subr.bf16.mxu0 0
        %2681 = vmatpush2.bf16.msra.mxu0 0
        %2682 = vmatprep.subr.bf16.mxu0 0
        %2683 = vmatpush2.bf16.msra.mxu0 0
        %2684 = vmatprep.subr.bf16.mxu0 0
        %2685 = vmatpush2.bf16.msra.mxu0 0
        %2686 = vmatprep.subr.bf16.mxu0 0
        %2687 = vmatpush2.bf16.msra.mxu0 0
        %2688 = vmatprep.subr.bf16.mxu0 0
        %2689 = vmatpush2.bf16.msra.mxu0 0
        %2690 = vmatprep.subr.bf16.mxu0 0
        %2691 = vmatpush2.bf16.msra.mxu0 0
        %2692 = vmatprep.subr.bf16.mxu0 0
        %2693 = vmatpush2.bf16.msra.mxu0 0
        %2694 = vmatprep.mubr.bf16.mxu0 0
        %2695 = vmatmul.mubr.bf16.gmra.mxu0 %v2660
        %v2696 = vpop.f32.mrf.mxu0
        %v2697 = vadd.f32 %v2645, %v2696
        %v2698 = vpop.f32.mrf.mxu0
        %v2699 = vpop.f32.mrf.mxu0
        %v2700 = vpop.f32.mrf.mxu0
        %2701 = vdwg.mxu0
        %v2702 = vmul.f32 %v2697, 0.5
        %v2703 = vmul.f32 %v2697, 0.70710677
        %v2704 = vand.u32 2147483647, %v2703
        %v2705 = vmul.f32 %v2704, 0.5
        %v2706 = vadd.f32 %v2705, 1.0
        %v2707 = vrcp.pop %v2706
        %v2708 = vmul.f32 1.0, %v2707
        %v2709 = vmul.f32 %v2708, 0.17087276
        %v2710 = vadd.f32 %v2709, -0.82215226
        %v2711 = vmul.f32 %v2708, %v2710
        %v2712 = vadd.f32 %v2711, 1.4885159
        %v2713 = vmul.f32 %v2708, %v2712
        %v2714 = vadd.f32 %v2713, -1.135204
        %v2715 = vmul.f32 %v2708, %v2714
        %v2716 = vadd.f32 %v2715, 0.27886808
        %v2717 = vmul.f32 %v2708, %v2716
        %v2718 = vadd.f32 %v2717, -0.18628806
        %v2719 = vmul.f32 %v2708, %v2718
        %v2720 = vadd.f32 %v2719, 0.09678418
        %v2721 = vmul.f32 %v2708, %v2720
        %v2722 = vadd.f32 %v2721, 0.37409195
        %v2723 = vmul.f32 %v2708, %v2722
        %v2724 = vadd.f32 %v2723, 1.0000237
        %v2725 = vmul.f32 %v2708, %v2724
        %v2726 = vadd.f32 %v2725, -1.2655122
        %v2727 = vsub.f32 0.0, %v2704
        %v2728 = vmul.f32 %v2727, %v2704
        %v2729 = vadd.f32 %v2728, %v2726
        %v2730 = vmul.f32 %v2729, 1.442695
        %v2731 = vpow.pop %v2730
        %v2732 = vmul.f32 %v2708, %v2731
        %vm2733 = vcmp.ge.f32.partialorder %v2703, 0.0
        %v2734 = vsub.f32 1.0, %v2732
        %v2735 = vsub.f32 %v2732, 1.0
        %v2736 = vsel %vm2733, %v2734, %v2735
        %v2737 = vadd.f32 %v2736, 1.0
        %v2738 = vmul.f32 %v2702, %v2737
        %v2739 = vpack.c.bf16 %v2738, %v2738
        %v2740 = vld [vmem:[%s22] sm:$0xf]
        %v2741 = vld [vmem:[%s22 + $0x4] sm:$0xf]
        %v2742 = vld [vmem:[%s22 + $0x8] sm:$0xf]
        %v2743 = vld [vmem:[%s22 + $0xc] sm:$0xf]
        %v2744 = vld [vmem:[%s22 + $0x10] sm:$0xf]
        %v2745 = vld [vmem:[%s22 + $0x14] sm:$0xf]
        %v2746 = vld [vmem:[%s22 + $0x18] sm:$0xf]
        %v2747 = vld [vmem:[%s22 + $0x1c] sm:$0xf]
        %v2748 = vld [vmem:[%s23] sm:$0x1]
        %v2750 = vlaneseq
        %v2751 = vshrl.u32 %v2750, 7
        %v2752 = vsub.s32 0, %v2751
        %v2753 = vrot.slane %v2748, %v2752
        %v2763 = vunpack.c.l.b16 %v2740
        %v2764 = vunpack.c.l.b16 %v2741
        %v2765 = vunpack.c.l.b16 %v2742
        %v2766 = vunpack.c.l.b16 %v2743
        %v2767 = vunpack.c.l.b16 %v2744
        %v2768 = vunpack.c.l.b16 %v2745
        %v2769 = vunpack.c.l.b16 %v2746
        %v2770 = vunpack.c.l.b16 %v2747
        %v2771 = vpack.c.b16 %v2764, %v2763
        %v2772 = vpack.c.b16 %v2766, %v2765
        %v2773 = vpack.c.b16 %v2768, %v2767
        %v2774 = vpack.c.b16 %v2770, %v2769
        %vm2779 = vcmask 523264
        %v2781 = vsel %vm2779, %v2739, 0
        %2783 = vmatprep.subr.bf16.mxu0 0
        %2784 = vmatpush1.bf16.msra.mxu0 0
        %2785 = vmatprep.subr.bf16.mxu0 0
        %2786 = vmatpush1.bf16.msra.mxu0 0
        %2787 = vmatprep.subr.bf16.mxu0 0
        %2788 = vmatpush1.bf16.msra.mxu0 0
        %2789 = vmatprep.subr.bf16.mxu0 0
        %2790 = vmatpush1.bf16.msra.mxu0 0
        %2791 = vmatprep.subr.bf16.mxu0 0
        %2792 = vmatpush1.bf16.msra.mxu0 %v2774
        %2793 = vmatprep.subr.bf16.mxu0 0
        %2794 = vmatpush1.bf16.msra.mxu0 %v2773
        %2795 = vmatprep.subr.bf16.mxu0 0
        %2796 = vmatpush1.bf16.msra.mxu0 %v2772
        %2797 = vmatprep.subr.bf16.mxu0 0
        %2798 = vmatpush1.bf16.msra.mxu0 %v2771
        %2799 = vmatprep.subr.bf16.mxu0 0
        %2800 = vmatpush2.bf16.msra.mxu0 0
        %2801 = vmatprep.subr.bf16.mxu0 0
        %2802 = vmatpush2.bf16.msra.mxu0 0
        %2803 = vmatprep.subr.bf16.mxu0 0
        %2804 = vmatpush2.bf16.msra.mxu0 0
        %2805 = vmatprep.subr.bf16.mxu0 0
        %2806 = vmatpush2.bf16.msra.mxu0 0
        %2807 = vmatprep.subr.bf16.mxu0 0
        %2808 = vmatpush2.bf16.msra.mxu0 0
        %2809 = vmatprep.subr.bf16.mxu0 0
        %2810 = vmatpush2.bf16.msra.mxu0 0
        %2811 = vmatprep.subr.bf16.mxu0 0
        %2812 = vmatpush2.bf16.msra.mxu0 0
        %2813 = vmatprep.subr.bf16.mxu0 0
        %2814 = vmatpush2.bf16.msra.mxu0 0
        %2815 = vmatprep.mubr.bf16.mxu0 0
        %2816 = vmatmul.mubr.bf16.gmra.mxu0 %v2781
        %v2817 = vpop.f32.mrf.mxu0
        %v2818 = vadd.f32 %v2753, %v2817
        %v2819 = vpop.f32.mrf.mxu0
        %v2820 = vpop.f32.mrf.mxu0
        %v2821 = vpop.f32.mrf.mxu0
        %2822 = vdwg.mxu0
        %v2823 = vadd.f32 %v2634, %v2818
        %v2824 = vsel %vm1164, %v2823, 0.0
        %2825 = vadd.xlane.f32.xlu0 %v2824
        %v2826 = vpop.xlane.xlu0 %2825
        %v2827 = vmul.f32 %v2826, %v1862
        %v2828 = vsub.f32 %v2823, %v2827
        %v2829 = vmul.f32 %v2828, %v2828
        %v2830 = vsel %vm1164, %v2829, 0.0
        %2831 = vadd.xlane.f32.xlu0 %v2830
        %v2832 = vpop.xlane.xlu0 %2831
        %v2833 = vmul.f32 %v2832, %v1862
        %v2834 = vadd.f32 %v2833, 1e-05
        %v2835 = vrsqrt.pop %v2834
        %v2836 = vmul.f32 %v2828, %v2835
        %v2837 = vmul.f32 %v2836, %v1877
        %v2838 = vadd.f32 %v2837, %v1884
        %2839 = vst.msk [vmem:[%s1106] sm:$0xff] %vm1164, %v2838
        %s2840 = sand.u32 %s630, 1
        %s2841 = scalar_lea.sflag [#allocation5], %s2840
        %s2842 = sand.u32 %s630, 1
        %s2843 = smul.addr %s2842, 32
        %s2844 = scalar_lea.vmem [#allocation27], %s2843
        %s2845 = sand.u32 %s56, 1
        %s2846 = scalar_lea.sflag [#allocation29], %s2845
        %s2847 = sand.u32 %s656, 1
        %s2848 = smul.addr %s2847, 32
        %s2849 = scalar_lea.vmem [#allocation28], %s2848
        %s2850 = sand.u32 %s56, 1
        %s2851 = scalar_lea.sflag [#allocation29], %s2850
        %s2852 = sand.u32 %s682, 1
        %s2853 = smul.addr %s2852, 8
        %s2854 = scalar_lea.vmem [#allocation30], %s2853
        // Predicated region
        $region185: #{tpu_custom_call.1} parent=123 // pred_check
          %p2855 = pneg %p640
        $region186: #{tpu_custom_call.1} parent=123 // pred_check_branch
          %2857 = sbr.rel (%p2855) target = $region188
        $region187: #{tpu_custom_call.1} parent=123 // pred_region
          %s2859 = ssub.s32 512, 512
          %2860 = vsyncadd %s2841, %s2859
          %s2861 = smul.addr %s56, 4
          %s2862 = smul.addr %s2861, 128
          %s2863 = scalar_lea.hbm %s26, %s2862
          %s2864 = sshll.u32 %s2844, 4
          %s2865 = int_to_ptr.vmem [resolvable:$true] %s2864
          %2870 = dma.vmem_to_hbm [thread:$0]  %s2865, 512, %s2863, %s2841, 128, 128, 8
        $region188: #{tpu_custom_call.1} parent=123 // pred_fallthru
          _
        // Predicated region
        $region189: #{tpu_custom_call.1} parent=123 // pred_check
          %p2871 = pneg %p666
        $region190: #{tpu_custom_call.1} parent=123 // pred_check_branch
          %2873 = sbr.rel (%p2871) target = $region192
        $region191: #{tpu_custom_call.1} parent=123 // pred_region
          %s2875 = ssub.s32 512, 512
          %2876 = vsyncadd %s2846, %s2875
          %s2877 = smul.addr %s56, 4
          %s2878 = smul.addr %s2877, 128
          %s2879 = scalar_lea.hbm %s27, %s2878
          %s2880 = sshll.u32 %s2849, 4
          %s2881 = int_to_ptr.vmem [resolvable:$true] %s2880
          %2886 = dma.vmem_to_hbm [thread:$0]  %s2881, 512, %s2879, %s2846, 128, 128, 8
        $region192: #{tpu_custom_call.1} parent=123 // pred_fallthru
          _
        // Predicated region
        $region193: #{tpu_custom_call.1} parent=123 // pred_check
          %p2887 = pneg %p692
        $region194: #{tpu_custom_call.1} parent=123 // pred_check_branch
          %2889 = sbr.rel (%p2887) target = $region196
        $region195: #{tpu_custom_call.1} parent=123 // pred_region
          %s2891 = ssub.s32 128, 128
          %2892 = vsyncadd %s2851, %s2891
          %s2893 = smul.addr %s56, 128
          %s2894 = scalar_lea.hbm %s28, %s2893
          %s2896 = sshll.u32 %s2854, 4
          %s2897 = int_to_ptr.vmem [resolvable:$true] %s2896
          %2899 = dma.vmem_to_hbm [thread:$0]  %s2897, 128, %s2894, %s2851
        $region196: #{tpu_custom_call.1} parent=123 // pred_fallthru
          _
      $region124: #{tpu_custom_call.1} parent=5 // pred_fallthru
        _
      %p2900 = scmp.le.s32.totalorder 2, %s51
      // Predicated region
      $region197: #{tpu_custom_call.1} parent=5 // pred_check
        %p2901 = pneg %p2900
      $region198: #{tpu_custom_call.1} parent=5 // pred_check_branch
        %2903 = sbr.rel (%p2901) target = $region200
      $region199: #{tpu_custom_call.1} parent=5 // pred_region
        %s2904 = ssub.s32 %s51, 2
        // Predicated region
        $region201: #{tpu_custom_call.1} parent=199 // pred_check
          %p2905 = pneg %p646
        $region202: #{tpu_custom_call.1} parent=199 // pred_check_branch
          %2907 = sbr.rel (%p2905) target = $region204
        $region203: #{tpu_custom_call.1} parent=199 // pred_region
          %s2908 = sand.u32 %s631, 1
          %s2909 = scalar_lea.sflag [#allocation5], %s2908
          %s2910 = sand.u32 %s631, 1
          %s2911 = smul.addr %s2910, 32
          %s2912 = scalar_lea.vmem [#allocation27], %s2911
          %2913 = dma.done %s2909, 512
        $region204: #{tpu_custom_call.1} parent=199 // pred_fallthru
          _
        // Predicated region
        $region205: #{tpu_custom_call.1} parent=199 // pred_check
          %p2914 = pneg %p672
        $region206: #{tpu_custom_call.1} parent=199 // pred_check_branch
          %2916 = sbr.rel (%p2914) target = $region208
        $region207: #{tpu_custom_call.1} parent=199 // pred_region
          %s2917 = sand.u32 %s57, 1
          %s2918 = scalar_lea.sflag [#allocation29], %s2917
          %s2919 = sand.u32 %s657, 1
          %s2920 = smul.addr %s2919, 32
          %s2921 = scalar_lea.vmem [#allocation28], %s2920
          %2922 = dma.done %s2918, 512
        $region208: #{tpu_custom_call.1} parent=199 // pred_fallthru
          _
        // Predicated region
        $region209: #{tpu_custom_call.1} parent=199 // pred_check
          %p2923 = pneg %p698
        $region210: #{tpu_custom_call.1} parent=199 // pred_check_branch
          %2925 = sbr.rel (%p2923) target = $region212
        $region211: #{tpu_custom_call.1} parent=199 // pred_region
          %s2926 = sand.u32 %s57, 1
          %s2927 = scalar_lea.sflag [#allocation29], %s2926
          %s2928 = sand.u32 %s683, 1
          %s2929 = smul.addr %s2928, 8
          %s2930 = scalar_lea.vmem [#allocation30], %s2929
          %2931 = dma.done %s2927, 128
        $region212: #{tpu_custom_call.1} parent=199 // pred_fallthru
          _
      $region200: #{tpu_custom_call.1} parent=5 // pred_fallthru
        _
    $region6: #{tpu_custom_call.1} parent=1 // loop_footer
      %s55 = sadd.s32 1, %s51
    $region7: #{tpu_custom_call.1} parent=1 // loop_footer_branch
      %50 = sbr.rel target = $region3
    $region8: #{tpu_custom_call.1} parent=1 // loop_exit
      _
    %2932 = vsyncpa [#allocation4], 1
    %s2933 = scalar_lea.sflag [#allocation4], 1
    %2934 = vsyncpa %s2933, 1
    %2935 = vsyncpa [#allocation7], 1
    %2936 = vsyncpa [#allocation10], 1
    %2937 = vsyncpa [#allocation13], 1
    %2938 = vsyncpa [#allocation16], 1
    %2939 = vsyncpa [#allocation19], 1
    %2940 = vsyncpa [#allocation22], 1
    %2941 = vsyncpa [#allocation25], 1
    %2942 = vsyncpa [#allocation5], 1
    %s2943 = scalar_lea.sflag [#allocation5], 1
    %2944 = vsyncpa %s2943, 1
    %2945 = vsyncpa [#allocation29], 1
    %s2946 = scalar_lea.sflag [#allocation29], 1
    %2947 = vsyncpa %s2946, 1

</llo_original>
